<compile_context>
chip_gen: v7x
topology: tpu7x:2x2x1
jax: 0.10.0
libtpu: 0.0.40
codegen_flags: <defaults>
</compile_context>

<pallas_src>
import jax
import jax.numpy as jnp
from jax.experimental import pallas as pl
from jax.experimental.pallas import tpu as pltpu

EPS = 1e-5


def _discriminator_kernel(x_ref, wemb_ref, wx_ref, wh_ref, wcls_ref, vcls_ref,
                          scal_ref, out_ref):
    """Feature-major layout (features on sublanes, batch/time on lanes).

    x_ref    : (3, S*B)   rows = [x, y, 1]; column index = t*B + b
    wemb_ref : (E+1, 3)   [[we^T | be^T], [0, 0, 1]]  (last row keeps the ones row)
    wx_ref   : (4H, E+1)  [wih^T | (b_ih + b_hh)^T]   (LSTM bias folded in)
    wh_ref   : (4H, H)    whh^T
    wcls_ref : (M, H)     w1^T
    vcls_ref : (M, 4)     columns: [gamma1, beta1, w2, b1]
    scal_ref : (3,) SMEM  [b2, gamma2, beta2]
    out_ref  : (1, B)     scores, batch on the lane axis
    """
    sb = x_ref.shape[1]
    h_dim = wh_ref.shape[1]
    batch = out_ref.shape[1]
    seq_len = sb // batch
    f32 = jnp.float32

    # ---- Hoisted input projection: all timesteps in two matmuls, off the
    #      recurrence critical path.  Row E of emb_aug is exactly 1, so the
    #      last column of wx (the LSTM bias) is added by the matmul itself. ----
    emb_aug = jnp.dot(wemb_ref[...], x_ref[...], preferred_element_type=f32)   # (E+1, S*B)
    xproj = jnp.dot(wx_ref[...], emb_aug, preferred_element_type=f32)          # (4H,  S*B)

    wh = wh_ref[...]

    # ---- LSTM recurrence, fully unrolled.  Gates are feature-major so the
    #      i/f/g/o splits fall on sublane boundaries (no lane shuffles on the
    #      serial chain); the xproj lane-block extraction does not depend on h
    #      and can be scheduled ahead of the recurrence. ----
    h = jnp.zeros((h_dim, batch), f32)
    c = jnp.zeros((h_dim, batch), f32)
    for t in range(seq_len):
        gates = (jnp.dot(wh, h, preferred_element_type=f32)
                 + xproj[:, t * batch:(t + 1) * batch])                        # (4H, B)
        i = jax.nn.sigmoid(gates[0 * h_dim:1 * h_dim, :])
        f = jax.nn.sigmoid(gates[1 * h_dim:2 * h_dim, :])
        g = jnp.tanh(gates[2 * h_dim:3 * h_dim, :])
        o = jax.nn.sigmoid(gates[3 * h_dim:4 * h_dim, :])
        c = f * c + i * g
        h = o * jnp.tanh(c)

    # ---- real_classifier: Linear -> BatchNorm1d(train) -> ReLU
    #                        -> Linear(->1) -> BatchNorm1d -> ReLU ----
    b1 = vcls_ref[:, 3:4]
    z1 = jnp.dot(wcls_ref[...], h, preferred_element_type=f32) + b1            # (M, B)
    m1 = jnp.mean(z1, axis=1, keepdims=True)
    v1 = jnp.mean((z1 - m1) ** 2, axis=1, keepdims=True)                       # biased var
    z1 = (z1 - m1) / jnp.sqrt(v1 + EPS) * vcls_ref[:, 0:1] + vcls_ref[:, 1:2]
    z1 = jnp.maximum(z1, 0.0)

    # Final Linear has a single output feature: VPU multiply + sublane
    # reduction instead of an N=1 MXU matmul.
    w2 = vcls_ref[:, 2:3]                                                      # (M, 1)
    z2 = jnp.sum(z1 * w2, axis=0, keepdims=True) + scal_ref[0]                 # (1, B)
    m2 = jnp.mean(z2, axis=1, keepdims=True)
    v2 = jnp.mean((z2 - m2) ** 2, axis=1, keepdims=True)
    z2 = (z2 - m2) / jnp.sqrt(v2 + EPS) * scal_ref[1] + scal_ref[2]
    out_ref[...] = jnp.maximum(z2, 0.0)                                        # (1, B)


def trajectory_discriminator(traj_rel, params):
    """traj_rel: (seq_len, batch, 2) f32.  Returns scores (batch, 1)."""
    seq_len, batch, _ = traj_rel.shape
    f32 = jnp.float32

    # Pack everything feature-major and fold the biases so the kernel sees
    # only 7 operands (instead of 14 tiny ones -> fewer prologue DMAs).
    x_aug = jnp.concatenate(
        [traj_rel.reshape(seq_len * batch, 2).T,
         jnp.ones((1, seq_len * batch), f32)], axis=0)                          # (3, S*B)
    wemb = jnp.concatenate(
        [jnp.concatenate([params["we"].T, params["be"].T], axis=1),
         jnp.array([[0.0, 0.0, 1.0]], f32)], axis=0)                            # (E+1, 3)
    wx = jnp.concatenate([params["wih"].T, params["blstm"].T], axis=1)          # (4H, E+1)
    wh = params["whh"].T                                                        # (4H, H)
    wcls = params["w1"].T                                                       # (M, H)
    vcls = jnp.concatenate(
        [params["g1"].T, params["bt1"].T, params["w2"], params["b1"].T],
        axis=1)                                                                 # (M, 4)
    scal = jnp.concatenate(
        [params["b2"].reshape(-1), params["g2"].reshape(-1),
         params["bt2"].reshape(-1)]).astype(f32)                                # (3,)

    vmem = pl.BlockSpec(memory_space=pltpu.MemorySpace.VMEM)
    smem = pl.BlockSpec(memory_space=pltpu.MemorySpace.SMEM)
    scores_t = pl.pallas_call(
        _discriminator_kernel,
        out_shape=jax.ShapeDtypeStruct((1, batch), f32),
        in_specs=[vmem, vmem, vmem, vmem, vmem, vmem, smem],
        out_specs=vmem,
    )(x_aug, wemb, wx, wh, wcls, vcls, scal)
    return scores_t.reshape(batch, 1)


def reference(traj_rel, params):
    """Pure-JAX reference of the same forward pass (for verification)."""
    seq_len, batch, _ = traj_rel.shape
    h_dim = params["whh"].shape[0]
    h = jnp.zeros((batch, h_dim), jnp.float32)
    c = jnp.zeros((batch, h_dim), jnp.float32)
    for t in range(seq_len):
        emb = traj_rel[t] @ params["we"] + params["be"]
        gates = emb @ params["wih"] + h @ params["whh"] + params["blstm"]
        i = jax.nn.sigmoid(gates[:, 0 * h_dim:1 * h_dim])
        f = jax.nn.sigmoid(gates[:, 1 * h_dim:2 * h_dim])
        g = jnp.tanh(gates[:, 2 * h_dim:3 * h_dim])
        o = jax.nn.sigmoid(gates[:, 3 * h_dim:4 * h_dim])
        c = f * c + i * g
        h = o * jnp.tanh(c)
    z1 = h @ params["w1"] + params["b1"]
    m1 = jnp.mean(z1, axis=0, keepdims=True)
    v1 = jnp.mean((z1 - m1) ** 2, axis=0, keepdims=True)
    z1 = jnp.maximum((z1 - m1) / jnp.sqrt(v1 + EPS) * params["g1"] + params["bt1"], 0.0)
    z2 = z1 @ params["w2"] + params["b2"]
    m2 = jnp.mean(z2, axis=0, keepdims=True)
    v2 = jnp.mean((z2 - m2) ** 2, axis=0, keepdims=True)
    return jnp.maximum((z2 - m2) / jnp.sqrt(v2 + EPS) * params["g2"] + params["bt2"], 0.0)


def make_params(key, embedding_dim, h_dim, mlp_dim):
    ks = jax.random.split(key, 12)
    s = 0.1
    return {
        # Encoder
        "we":    s * jax.random.normal(ks[0], (2, embedding_dim), jnp.float32),
        "be":    s * jax.random.normal(ks[1], (1, embedding_dim), jnp.float32),
        "wih":   s * jax.random.normal(ks[2], (embedding_dim, 4 * h_dim), jnp.float32),
        "whh":   s * jax.random.normal(ks[3], (h_dim, 4 * h_dim), jnp.float32),
        "blstm": s * jax.random.normal(ks[4], (1, 4 * h_dim), jnp.float32),  # b_ih + b_hh
        # real_classifier
        "w1":  s * jax.random.normal(ks[5], (h_dim, mlp_dim), jnp.float32),
        "b1":  s * jax.random.normal(ks[6], (1, mlp_dim), jnp.float32),
        "g1":  jnp.ones((1, mlp_dim), jnp.float32),
        "bt1": jnp.zeros((1, mlp_dim), jnp.float32),
        "w2":  s * jax.random.normal(ks[7], (mlp_dim, 1), jnp.float32),
        "b2":  s * jax.random.normal(ks[8], (1, 1), jnp.float32),
        "g2":  jnp.ones((1, 1), jnp.float32),
        "bt2": jnp.zeros((1, 1), jnp.float32),
    }


if __name__ == "__main__":
    obs_len, pred_len = 4, 4
    seq_len = obs_len + pred_len          # 8
    batch = 8
    embedding_dim = 16
    h_dim = 32
    mlp_dim = 64

    key = jax.random.PRNGKey(0)
    k_traj, k_rel, k_par = jax.random.split(key, 3)
    traj = jax.random.normal(k_traj, (seq_len, batch, 2), jnp.float32)      # unused for d_type='local'
    traj_rel = jax.random.normal(k_rel, (seq_len, batch, 2), jnp.float32)
    params = make_params(k_par, embedding_dim, h_dim, mlp_dim)

    scores = trajectory_discriminator(traj_rel, params)
    scores = jax.block_until_ready(scores)

    ref = reference(traj_rel, params)
    assert scores.shape == (batch, 1)
    # f32 + EUP transcendental / summation-order tolerance.
    assert jnp.allclose(scores, ref, rtol=1e-3, atol=1e-4), (scores, ref)
    print("KERNEL_OK")
</pallas_src>

<mosaic_0001>
module attributes {stable_mosaic.version = 11 : i64} {
  func.func @_discriminator_kernel(%arg0: memref<3x64xf32, #tpu.memory_space<vmem>>, %arg1: memref<17x3xf32, #tpu.memory_space<vmem>>, %arg2: memref<128x17xf32, #tpu.memory_space<vmem>>, %arg3: memref<128x32xf32, #tpu.memory_space<vmem>>, %arg4: memref<64x32xf32, #tpu.memory_space<vmem>>, %arg5: memref<64x4xf32, #tpu.memory_space<vmem>>, %arg6: memref<3xf32, #tpu.memory_space<smem>>, %arg7: memref<1x8xf32, #tpu.memory_space<vmem>>) attributes {dimension_semantics = [], scalar_prefetch = 0 : i64, scratch_operands = 0 : i64, tpu.core_type = #tpu.core_type<tc>} {
    %c0 = arith.constant 0 : index
    %c0_0 = arith.constant 0 : index
    %0 = vector.load %arg1[%c0, %c0_0] : memref<17x3xf32, #tpu.memory_space<vmem>>, vector<17x3xf32>
    %c0_1 = arith.constant 0 : index
    %c0_2 = arith.constant 0 : index
    %1 = vector.load %arg0[%c0_1, %c0_2] : memref<3x64xf32, #tpu.memory_space<vmem>>, vector<3x64xf32>
    %cst = arith.constant dense<0.000000e+00> : vector<17x64xf32>
    %2 = tpu.matmul %0, %1, %cst {dimension_numbers = #tpu.dot_dimension_numbers<[1], [0], [0], [1], [0, 0, 1, 1], [], []>} : vector<17x3xf32>, vector<3x64xf32>, vector<17x64xf32> -> vector<17x64xf32>
    %c0_3 = arith.constant 0 : index
    %c0_4 = arith.constant 0 : index
    %3 = vector.load %arg2[%c0_3, %c0_4] : memref<128x17xf32, #tpu.memory_space<vmem>>, vector<128x17xf32>
    %cst_5 = arith.constant dense<0.000000e+00> : vector<128x64xf32>
    %4 = tpu.matmul %3, %2, %cst_5 {dimension_numbers = #tpu.dot_dimension_numbers<[1], [0], [0], [1], [0, 0, 1, 1], [], []>} : vector<128x17xf32>, vector<17x64xf32>, vector<128x64xf32> -> vector<128x64xf32>
    %c0_6 = arith.constant 0 : index
    %c0_7 = arith.constant 0 : index
    %5 = vector.load %arg3[%c0_6, %c0_7] : memref<128x32xf32, #tpu.memory_space<vmem>>, vector<128x32xf32>
    %cst_8 = arith.constant 0.000000e+00 : f32
    %6 = vector.broadcast %cst_8 : f32 to vector<32x8xf32>
    %cst_9 = arith.constant 0.000000e+00 : f32
    %7 = vector.broadcast %cst_9 : f32 to vector<32x8xf32>
    %cst_10 = arith.constant dense<0.000000e+00> : vector<128x8xf32>
    %8 = tpu.matmul %5, %6, %cst_10 {dimension_numbers = #tpu.dot_dimension_numbers<[1], [0], [0], [1], [0, 0, 1, 1], [], []>} : vector<128x32xf32>, vector<32x8xf32>, vector<128x8xf32> -> vector<128x8xf32>
    %9 = vector.extract_strided_slice %4 {offsets = [0, 0], sizes = [128, 8], strides = [1, 1]} : vector<128x64xf32> to vector<128x8xf32>
    %10 = arith.addf %8, %9 : vector<128x8xf32>
    %11 = vector.extract_strided_slice %10 {offsets = [0, 0], sizes = [32, 8], strides = [1, 1]} : vector<128x8xf32> to vector<32x8xf32>
    %12 = arith.negf %11 : vector<32x8xf32>
    %13 = math.exp %12 : vector<32x8xf32>
    %cst_11 = arith.constant 1.000000e+00 : f32
    %14 = vector.broadcast %cst_11 : f32 to vector<32x8xf32>
    %15 = arith.addf %14, %13 : vector<32x8xf32>
    %16 = arith.divf %14, %15 : vector<32x8xf32>
    %17 = vector.extract_strided_slice %10 {offsets = [32, 0], sizes = [32, 8], strides = [1, 1]} : vector<128x8xf32> to vector<32x8xf32>
    %18 = arith.negf %17 : vector<32x8xf32>
    %19 = math.exp %18 : vector<32x8xf32>
    %cst_12 = arith.constant 1.000000e+00 : f32
    %20 = vector.broadcast %cst_12 : f32 to vector<32x8xf32>
    %21 = arith.addf %20, %19 : vector<32x8xf32>
    %22 = arith.divf %20, %21 : vector<32x8xf32>
    %23 = vector.extract_strided_slice %10 {offsets = [64, 0], sizes = [32, 8], strides = [1, 1]} : vector<128x8xf32> to vector<32x8xf32>
    %24 = math.tanh %23 : vector<32x8xf32>
    %25 = vector.extract_strided_slice %10 {offsets = [96, 0], sizes = [32, 8], strides = [1, 1]} : vector<128x8xf32> to vector<32x8xf32>
    %26 = arith.negf %25 : vector<32x8xf32>
    %27 = math.exp %26 : vector<32x8xf32>
    %cst_13 = arith.constant 1.000000e+00 : f32
    %28 = vector.broadcast %cst_13 : f32 to vector<32x8xf32>
    %29 = arith.addf %28, %27 : vector<32x8xf32>
    %30 = arith.divf %28, %29 : vector<32x8xf32>
    %31 = arith.mulf %22, %7 : vector<32x8xf32>
    %32 = arith.mulf %16, %24 : vector<32x8xf32>
    %33 = arith.addf %31, %32 : vector<32x8xf32>
    %34 = math.tanh %33 : vector<32x8xf32>
    %35 = arith.mulf %30, %34 : vector<32x8xf32>
    %cst_14 = arith.constant dense<0.000000e+00> : vector<128x8xf32>
    %36 = tpu.matmul %5, %35, %cst_14 {dimension_numbers = #tpu.dot_dimension_numbers<[1], [0], [0], [1], [0, 0, 1, 1], [], []>} : vector<128x32xf32>, vector<32x8xf32>, vector<128x8xf32> -> vector<128x8xf32>
    %37 = vector.extract_strided_slice %4 {offsets = [0, 8], sizes = [128, 8], strides = [1, 1]} : vector<128x64xf32> to vector<128x8xf32>
    %38 = arith.addf %36, %37 : vector<128x8xf32>
    %39 = vector.extract_strided_slice %38 {offsets = [0, 0], sizes = [32, 8], strides = [1, 1]} : vector<128x8xf32> to vector<32x8xf32>
    %40 = arith.negf %39 : vector<32x8xf32>
    %41 = math.exp %40 : vector<32x8xf32>
    %cst_15 = arith.constant 1.000000e+00 : f32
    %42 = vector.broadcast %cst_15 : f32 to vector<32x8xf32>
    %43 = arith.addf %42, %41 : vector<32x8xf32>
    %44 = arith.divf %42, %43 : vector<32x8xf32>
    %45 = vector.extract_strided_slice %38 {offsets = [32, 0], sizes = [32, 8], strides = [1, 1]} : vector<128x8xf32> to vector<32x8xf32>
    %46 = arith.negf %45 : vector<32x8xf32>
    %47 = math.exp %46 : vector<32x8xf32>
    %cst_16 = arith.constant 1.000000e+00 : f32
    %48 = vector.broadcast %cst_16 : f32 to vector<32x8xf32>
    %49 = arith.addf %48, %47 : vector<32x8xf32>
    %50 = arith.divf %48, %49 : vector<32x8xf32>
    %51 = vector.extract_strided_slice %38 {offsets = [64, 0], sizes = [32, 8], strides = [1, 1]} : vector<128x8xf32> to vector<32x8xf32>
    %52 = math.tanh %51 : vector<32x8xf32>
    %53 = vector.extract_strided_slice %38 {offsets = [96, 0], sizes = [32, 8], strides = [1, 1]} : vector<128x8xf32> to vector<32x8xf32>
    %54 = arith.negf %53 : vector<32x8xf32>
    %55 = math.exp %54 : vector<32x8xf32>
    %cst_17 = arith.constant 1.000000e+00 : f32
    %56 = vector.broadcast %cst_17 : f32 to vector<32x8xf32>
    %57 = arith.addf %56, %55 : vector<32x8xf32>
    %58 = arith.divf %56, %57 : vector<32x8xf32>
    %59 = arith.mulf %50, %33 : vector<32x8xf32>
    %60 = arith.mulf %44, %52 : vector<32x8xf32>
    %61 = arith.addf %59, %60 : vector<32x8xf32>
    %62 = math.tanh %61 : vector<32x8xf32>
    %63 = arith.mulf %58, %62 : vector<32x8xf32>
    %cst_18 = arith.constant dense<0.000000e+00> : vector<128x8xf32>
    %64 = tpu.matmul %5, %63, %cst_18 {dimension_numbers = #tpu.dot_dimension_numbers<[1], [0], [0], [1], [0, 0, 1, 1], [], []>} : vector<128x32xf32>, vector<32x8xf32>, vector<128x8xf32> -> vector<128x8xf32>
    %65 = vector.extract_strided_slice %4 {offsets = [0, 16], sizes = [128, 8], strides = [1, 1]} : vector<128x64xf32> to vector<128x8xf32>
    %66 = arith.addf %64, %65 : vector<128x8xf32>
    %67 = vector.extract_strided_slice %66 {offsets = [0, 0], sizes = [32, 8], strides = [1, 1]} : vector<128x8xf32> to vector<32x8xf32>
    %68 = arith.negf %67 : vector<32x8xf32>
    %69 = math.exp %68 : vector<32x8xf32>
    %cst_19 = arith.constant 1.000000e+00 : f32
    %70 = vector.broadcast %cst_19 : f32 to vector<32x8xf32>
    %71 = arith.addf %70, %69 : vector<32x8xf32>
    %72 = arith.divf %70, %71 : vector<32x8xf32>
    %73 = vector.extract_strided_slice %66 {offsets = [32, 0], sizes = [32, 8], strides = [1, 1]} : vector<128x8xf32> to vector<32x8xf32>
    %74 = arith.negf %73 : vector<32x8xf32>
    %75 = math.exp %74 : vector<32x8xf32>
    %cst_20 = arith.constant 1.000000e+00 : f32
    %76 = vector.broadcast %cst_20 : f32 to vector<32x8xf32>
    %77 = arith.addf %76, %75 : vector<32x8xf32>
    %78 = arith.divf %76, %77 : vector<32x8xf32>
    %79 = vector.extract_strided_slice %66 {offsets = [64, 0], sizes = [32, 8], strides = [1, 1]} : vector<128x8xf32> to vector<32x8xf32>
    %80 = math.tanh %79 : vector<32x8xf32>
    %81 = vector.extract_strided_slice %66 {offsets = [96, 0], sizes = [32, 8], strides = [1, 1]} : vector<128x8xf32> to vector<32x8xf32>
    %82 = arith.negf %81 : vector<32x8xf32>
    %83 = math.exp %82 : vector<32x8xf32>
    %cst_21 = arith.constant 1.000000e+00 : f32
    %84 = vector.broadcast %cst_21 : f32 to vector<32x8xf32>
    %85 = arith.addf %84, %83 : vector<32x8xf32>
    %86 = arith.divf %84, %85 : vector<32x8xf32>
    %87 = arith.mulf %78, %61 : vector<32x8xf32>
    %88 = arith.mulf %72, %80 : vector<32x8xf32>
    %89 = arith.addf %87, %88 : vector<32x8xf32>
    %90 = math.tanh %89 : vector<32x8xf32>
    %91 = arith.mulf %86, %90 : vector<32x8xf32>
    %cst_22 = arith.constant dense<0.000000e+00> : vector<128x8xf32>
    %92 = tpu.matmul %5, %91, %cst_22 {dimension_numbers = #tpu.dot_dimension_numbers<[1], [0], [0], [1], [0, 0, 1, 1], [], []>} : vector<128x32xf32>, vector<32x8xf32>, vector<128x8xf32> -> vector<128x8xf32>
    %93 = vector.extract_strided_slice %4 {offsets = [0, 24], sizes = [128, 8], strides = [1, 1]} : vector<128x64xf32> to vector<128x8xf32>
    %94 = arith.addf %92, %93 : vector<128x8xf32>
    %95 = vector.extract_strided_slice %94 {offsets = [0, 0], sizes = [32, 8], strides = [1, 1]} : vector<128x8xf32> to vector<32x8xf32>
    %96 = arith.negf %95 : vector<32x8xf32>
    %97 = math.exp %96 : vector<32x8xf32>
    %cst_23 = arith.constant 1.000000e+00 : f32
    %98 = vector.broadcast %cst_23 : f32 to vector<32x8xf32>
    %99 = arith.addf %98, %97 : vector<32x8xf32>
    %100 = arith.divf %98, %99 : vector<32x8xf32>
    %101 = vector.extract_strided_slice %94 {offsets = [32, 0], sizes = [32, 8], strides = [1, 1]} : vector<128x8xf32> to vector<32x8xf32>
    %102 = arith.negf %101 : vector<32x8xf32>
    %103 = math.exp %102 : vector<32x8xf32>
    %cst_24 = arith.constant 1.000000e+00 : f32
    %104 = vector.broadcast %cst_24 : f32 to vector<32x8xf32>
    %105 = arith.addf %104, %103 : vector<32x8xf32>
    %106 = arith.divf %104, %105 : vector<32x8xf32>
    %107 = vector.extract_strided_slice %94 {offsets = [64, 0], sizes = [32, 8], strides = [1, 1]} : vector<128x8xf32> to vector<32x8xf32>
    %108 = math.tanh %107 : vector<32x8xf32>
    %109 = vector.extract_strided_slice %94 {offsets = [96, 0], sizes = [32, 8], strides = [1, 1]} : vector<128x8xf32> to vector<32x8xf32>
    %110 = arith.negf %109 : vector<32x8xf32>
    %111 = math.exp %110 : vector<32x8xf32>
    %cst_25 = arith.constant 1.000000e+00 : f32
    %112 = vector.broadcast %cst_25 : f32 to vector<32x8xf32>
    %113 = arith.addf %112, %111 : vector<32x8xf32>
    %114 = arith.divf %112, %113 : vector<32x8xf32>
    %115 = arith.mulf %106, %89 : vector<32x8xf32>
    %116 = arith.mulf %100, %108 : vector<32x8xf32>
    %117 = arith.addf %115, %116 : vector<32x8xf32>
    %118 = math.tanh %117 : vector<32x8xf32>
    %119 = arith.mulf %114, %118 : vector<32x8xf32>
    %cst_26 = arith.constant dense<0.000000e+00> : vector<128x8xf32>
    %120 = tpu.matmul %5, %119, %cst_26 {dimension_numbers = #tpu.dot_dimension_numbers<[1], [0], [0], [1], [0, 0, 1, 1], [], []>} : vector<128x32xf32>, vector<32x8xf32>, vector<128x8xf32> -> vector<128x8xf32>
    %121 = vector.extract_strided_slice %4 {offsets = [0, 32], sizes = [128, 8], strides = [1, 1]} : vector<128x64xf32> to vector<128x8xf32>
    %122 = arith.addf %120, %121 : vector<128x8xf32>
    %123 = vector.extract_strided_slice %122 {offsets = [0, 0], sizes = [32, 8], strides = [1, 1]} : vector<128x8xf32> to vector<32x8xf32>
    %124 = arith.negf %123 : vector<32x8xf32>
    %125 = math.exp %124 : vector<32x8xf32>
    %cst_27 = arith.constant 1.000000e+00 : f32
    %126 = vector.broadcast %cst_27 : f32 to vector<32x8xf32>
    %127 = arith.addf %126, %125 : vector<32x8xf32>
    %128 = arith.divf %126, %127 : vector<32x8xf32>
    %129 = vector.extract_strided_slice %122 {offsets = [32, 0], sizes = [32, 8], strides = [1, 1]} : vector<128x8xf32> to vector<32x8xf32>
    %130 = arith.negf %129 : vector<32x8xf32>
    %131 = math.exp %130 : vector<32x8xf32>
    %cst_28 = arith.constant 1.000000e+00 : f32
    %132 = vector.broadcast %cst_28 : f32 to vector<32x8xf32>
    %133 = arith.addf %132, %131 : vector<32x8xf32>
    %134 = arith.divf %132, %133 : vector<32x8xf32>
    %135 = vector.extract_strided_slice %122 {offsets = [64, 0], sizes = [32, 8], strides = [1, 1]} : vector<128x8xf32> to vector<32x8xf32>
    %136 = math.tanh %135 : vector<32x8xf32>
    %137 = vector.extract_strided_slice %122 {offsets = [96, 0], sizes = [32, 8], strides = [1, 1]} : vector<128x8xf32> to vector<32x8xf32>
    %138 = arith.negf %137 : vector<32x8xf32>
    %139 = math.exp %138 : vector<32x8xf32>
    %cst_29 = arith.constant 1.000000e+00 : f32
    %140 = vector.broadcast %cst_29 : f32 to vector<32x8xf32>
    %141 = arith.addf %140, %139 : vector<32x8xf32>
    %142 = arith.divf %140, %141 : vector<32x8xf32>
    %143 = arith.mulf %134, %117 : vector<32x8xf32>
    %144 = arith.mulf %128, %136 : vector<32x8xf32>
    %145 = arith.addf %143, %144 : vector<32x8xf32>
    %146 = math.tanh %145 : vector<32x8xf32>
    %147 = arith.mulf %142, %146 : vector<32x8xf32>
    %cst_30 = arith.constant dense<0.000000e+00> : vector<128x8xf32>
    %148 = tpu.matmul %5, %147, %cst_30 {dimension_numbers = #tpu.dot_dimension_numbers<[1], [0], [0], [1], [0, 0, 1, 1], [], []>} : vector<128x32xf32>, vector<32x8xf32>, vector<128x8xf32> -> vector<128x8xf32>
    %149 = vector.extract_strided_slice %4 {offsets = [0, 40], sizes = [128, 8], strides = [1, 1]} : vector<128x64xf32> to vector<128x8xf32>
    %150 = arith.addf %148, %149 : vector<128x8xf32>
    %151 = vector.extract_strided_slice %150 {offsets = [0, 0], sizes = [32, 8], strides = [1, 1]} : vector<128x8xf32> to vector<32x8xf32>
    %152 = arith.negf %151 : vector<32x8xf32>
    %153 = math.exp %152 : vector<32x8xf32>
    %cst_31 = arith.constant 1.000000e+00 : f32
    %154 = vector.broadcast %cst_31 : f32 to vector<32x8xf32>
    %155 = arith.addf %154, %153 : vector<32x8xf32>
    %156 = arith.divf %154, %155 : vector<32x8xf32>
    %157 = vector.extract_strided_slice %150 {offsets = [32, 0], sizes = [32, 8], strides = [1, 1]} : vector<128x8xf32> to vector<32x8xf32>
    %158 = arith.negf %157 : vector<32x8xf32>
    %159 = math.exp %158 : vector<32x8xf32>
    %cst_32 = arith.constant 1.000000e+00 : f32
    %160 = vector.broadcast %cst_32 : f32 to vector<32x8xf32>
    %161 = arith.addf %160, %159 : vector<32x8xf32>
    %162 = arith.divf %160, %161 : vector<32x8xf32>
    %163 = vector.extract_strided_slice %150 {offsets = [64, 0], sizes = [32, 8], strides = [1, 1]} : vector<128x8xf32> to vector<32x8xf32>
    %164 = math.tanh %163 : vector<32x8xf32>
    %165 = vector.extract_strided_slice %150 {offsets = [96, 0], sizes = [32, 8], strides = [1, 1]} : vector<128x8xf32> to vector<32x8xf32>
    %166 = arith.negf %165 : vector<32x8xf32>
    %167 = math.exp %166 : vector<32x8xf32>
    %cst_33 = arith.constant 1.000000e+00 : f32
    %168 = vector.broadcast %cst_33 : f32 to vector<32x8xf32>
    %169 = arith.addf %168, %167 : vector<32x8xf32>
    %170 = arith.divf %168, %169 : vector<32x8xf32>
    %171 = arith.mulf %162, %145 : vector<32x8xf32>
    %172 = arith.mulf %156, %164 : vector<32x8xf32>
    %173 = arith.addf %171, %172 : vector<32x8xf32>
    %174 = math.tanh %173 : vector<32x8xf32>
    %175 = arith.mulf %170, %174 : vector<32x8xf32>
    %cst_34 = arith.constant dense<0.000000e+00> : vector<128x8xf32>
    %176 = tpu.matmul %5, %175, %cst_34 {dimension_numbers = #tpu.dot_dimension_numbers<[1], [0], [0], [1], [0, 0, 1, 1], [], []>} : vector<128x32xf32>, vector<32x8xf32>, vector<128x8xf32> -> vector<128x8xf32>
    %177 = vector.extract_strided_slice %4 {offsets = [0, 48], sizes = [128, 8], strides = [1, 1]} : vector<128x64xf32> to vector<128x8xf32>
    %178 = arith.addf %176, %177 : vector<128x8xf32>
    %179 = vector.extract_strided_slice %178 {offsets = [0, 0], sizes = [32, 8], strides = [1, 1]} : vector<128x8xf32> to vector<32x8xf32>
    %180 = arith.negf %179 : vector<32x8xf32>
    %181 = math.exp %180 : vector<32x8xf32>
    %cst_35 = arith.constant 1.000000e+00 : f32
    %182 = vector.broadcast %cst_35 : f32 to vector<32x8xf32>
    %183 = arith.addf %182, %181 : vector<32x8xf32>
    %184 = arith.divf %182, %183 : vector<32x8xf32>
    %185 = vector.extract_strided_slice %178 {offsets = [32, 0], sizes = [32, 8], strides = [1, 1]} : vector<128x8xf32> to vector<32x8xf32>
    %186 = arith.negf %185 : vector<32x8xf32>
    %187 = math.exp %186 : vector<32x8xf32>
    %cst_36 = arith.constant 1.000000e+00 : f32
    %188 = vector.broadcast %cst_36 : f32 to vector<32x8xf32>
    %189 = arith.addf %188, %187 : vector<32x8xf32>
    %190 = arith.divf %188, %189 : vector<32x8xf32>
    %191 = vector.extract_strided_slice %178 {offsets = [64, 0], sizes = [32, 8], strides = [1, 1]} : vector<128x8xf32> to vector<32x8xf32>
    %192 = math.tanh %191 : vector<32x8xf32>
    %193 = vector.extract_strided_slice %178 {offsets = [96, 0], sizes = [32, 8], strides = [1, 1]} : vector<128x8xf32> to vector<32x8xf32>
    %194 = arith.negf %193 : vector<32x8xf32>
    %195 = math.exp %194 : vector<32x8xf32>
    %cst_37 = arith.constant 1.000000e+00 : f32
    %196 = vector.broadcast %cst_37 : f32 to vector<32x8xf32>
    %197 = arith.addf %196, %195 : vector<32x8xf32>
    %198 = arith.divf %196, %197 : vector<32x8xf32>
    %199 = arith.mulf %190, %173 : vector<32x8xf32>
    %200 = arith.mulf %184, %192 : vector<32x8xf32>
    %201 = arith.addf %199, %200 : vector<32x8xf32>
    %202 = math.tanh %201 : vector<32x8xf32>
    %203 = arith.mulf %198, %202 : vector<32x8xf32>
    %cst_38 = arith.constant dense<0.000000e+00> : vector<128x8xf32>
    %204 = tpu.matmul %5, %203, %cst_38 {dimension_numbers = #tpu.dot_dimension_numbers<[1], [0], [0], [1], [0, 0, 1, 1], [], []>} : vector<128x32xf32>, vector<32x8xf32>, vector<128x8xf32> -> vector<128x8xf32>
    %205 = vector.extract_strided_slice %4 {offsets = [0, 56], sizes = [128, 8], strides = [1, 1]} : vector<128x64xf32> to vector<128x8xf32>
    %206 = arith.addf %204, %205 : vector<128x8xf32>
    %207 = vector.extract_strided_slice %206 {offsets = [0, 0], sizes = [32, 8], strides = [1, 1]} : vector<128x8xf32> to vector<32x8xf32>
    %208 = arith.negf %207 : vector<32x8xf32>
    %209 = math.exp %208 : vector<32x8xf32>
    %cst_39 = arith.constant 1.000000e+00 : f32
    %210 = vector.broadcast %cst_39 : f32 to vector<32x8xf32>
    %211 = arith.addf %210, %209 : vector<32x8xf32>
    %212 = arith.divf %210, %211 : vector<32x8xf32>
    %213 = vector.extract_strided_slice %206 {offsets = [32, 0], sizes = [32, 8], strides = [1, 1]} : vector<128x8xf32> to vector<32x8xf32>
    %214 = arith.negf %213 : vector<32x8xf32>
    %215 = math.exp %214 : vector<32x8xf32>
    %cst_40 = arith.constant 1.000000e+00 : f32
    %216 = vector.broadcast %cst_40 : f32 to vector<32x8xf32>
    %217 = arith.addf %216, %215 : vector<32x8xf32>
    %218 = arith.divf %216, %217 : vector<32x8xf32>
    %219 = vector.extract_strided_slice %206 {offsets = [64, 0], sizes = [32, 8], strides = [1, 1]} : vector<128x8xf32> to vector<32x8xf32>
    %220 = math.tanh %219 : vector<32x8xf32>
    %221 = vector.extract_strided_slice %206 {offsets = [96, 0], sizes = [32, 8], strides = [1, 1]} : vector<128x8xf32> to vector<32x8xf32>
    %222 = arith.negf %221 : vector<32x8xf32>
    %223 = math.exp %222 : vector<32x8xf32>
    %cst_41 = arith.constant 1.000000e+00 : f32
    %224 = vector.broadcast %cst_41 : f32 to vector<32x8xf32>
    %225 = arith.addf %224, %223 : vector<32x8xf32>
    %226 = arith.divf %224, %225 : vector<32x8xf32>
    %227 = arith.mulf %218, %201 : vector<32x8xf32>
    %228 = arith.mulf %212, %220 : vector<32x8xf32>
    %229 = arith.addf %227, %228 : vector<32x8xf32>
    %230 = math.tanh %229 : vector<32x8xf32>
    %231 = arith.mulf %226, %230 : vector<32x8xf32>
    %c0_42 = arith.constant 0 : index
    %c3 = arith.constant 3 : index
    %232 = vector.load %arg5[%c0_42, %c3] : memref<64x4xf32, #tpu.memory_space<vmem>>, vector<64x1xf32>
    %c0_43 = arith.constant 0 : index
    %c0_44 = arith.constant 0 : index
    %233 = vector.load %arg4[%c0_43, %c0_44] : memref<64x32xf32, #tpu.memory_space<vmem>>, vector<64x32xf32>
    %cst_45 = arith.constant dense<0.000000e+00> : vector<64x8xf32>
    %234 = tpu.matmul %233, %231, %cst_45 {dimension_numbers = #tpu.dot_dimension_numbers<[1], [0], [0], [1], [0, 0, 1, 1], [], []>} : vector<64x32xf32>, vector<32x8xf32>, vector<64x8xf32> -> vector<64x8xf32>
    %235 = vector.broadcast %232 : vector<64x1xf32> to vector<64x8xf32>
    %236 = arith.addf %234, %235 : vector<64x8xf32>
    %cst_46 = arith.constant dense<0.000000e+00> : vector<64xf32>
    %237 = vector.multi_reduction <add>, %236, %cst_46 [1] : vector<64x8xf32> to vector<64xf32>
    %238 = vector.shape_cast %237 : vector<64xf32> to vector<64x1xf32>
    %cst_47 = arith.constant 8.000000e+00 : f32
    %239 = vector.broadcast %cst_47 : f32 to vector<64x1xf32>
    %240 = arith.divf %238, %239 : vector<64x1xf32>
    %241 = vector.broadcast %240 : vector<64x1xf32> to vector<64x8xf32>
    %242 = arith.subf %236, %241 : vector<64x8xf32>
    %243 = arith.mulf %242, %242 : vector<64x8xf32>
    %cst_48 = arith.constant dense<0.000000e+00> : vector<64xf32>
    %244 = vector.multi_reduction <add>, %243, %cst_48 [1] : vector<64x8xf32> to vector<64xf32>
    %245 = vector.shape_cast %244 : vector<64xf32> to vector<64x1xf32>
    %cst_49 = arith.constant 8.000000e+00 : f32
    %246 = vector.broadcast %cst_49 : f32 to vector<64x1xf32>
    %247 = arith.divf %245, %246 : vector<64x1xf32>
    %248 = vector.broadcast %240 : vector<64x1xf32> to vector<64x8xf32>
    %249 = arith.subf %236, %248 : vector<64x8xf32>
    %cst_50 = arith.constant 9.99999974E-6 : f32
    %250 = vector.broadcast %cst_50 : f32 to vector<64x1xf32>
    %251 = arith.addf %247, %250 : vector<64x1xf32>
    %252 = math.sqrt %251 : vector<64x1xf32>
    %253 = vector.broadcast %252 : vector<64x1xf32> to vector<64x8xf32>
    %254 = arith.divf %249, %253 : vector<64x8xf32>
    %c0_51 = arith.constant 0 : index
    %c0_52 = arith.constant 0 : index
    %255 = vector.load %arg5[%c0_51, %c0_52] : memref<64x4xf32, #tpu.memory_space<vmem>>, vector<64x1xf32>
    %256 = vector.broadcast %255 : vector<64x1xf32> to vector<64x8xf32>
    %257 = arith.mulf %254, %256 : vector<64x8xf32>
    %c0_53 = arith.constant 0 : index
    %c1 = arith.constant 1 : index
    %258 = vector.load %arg5[%c0_53, %c1] : memref<64x4xf32, #tpu.memory_space<vmem>>, vector<64x1xf32>
    %259 = vector.broadcast %258 : vector<64x1xf32> to vector<64x8xf32>
    %260 = arith.addf %257, %259 : vector<64x8xf32>
    %cst_54 = arith.constant 0.000000e+00 : f32
    %261 = vector.broadcast %cst_54 : f32 to vector<64x8xf32>
    %262 = arith.maximumf %260, %261 : vector<64x8xf32>
    %c0_55 = arith.constant 0 : index
    %c2 = arith.constant 2 : index
    %263 = vector.load %arg5[%c0_55, %c2] : memref<64x4xf32, #tpu.memory_space<vmem>>, vector<64x1xf32>
    %264 = vector.broadcast %263 : vector<64x1xf32> to vector<64x8xf32>
    %265 = arith.mulf %262, %264 : vector<64x8xf32>
    %cst_56 = arith.constant dense<0.000000e+00> : vector<8xf32>
    %266 = vector.multi_reduction <add>, %265, %cst_56 [0] : vector<64x8xf32> to vector<8xf32>
    %267 = vector.shape_cast %266 : vector<8xf32> to vector<1x8xf32>
    %c0_57 = arith.constant 0 : index
    %268 = memref.load %arg6[%c0_57] : memref<3xf32, #tpu.memory_space<smem>>
    %269 = vector.broadcast %268 : f32 to vector<1x8xf32>
    %270 = arith.addf %267, %269 : vector<1x8xf32>
    %cst_58 = arith.constant dense<0.000000e+00> : vector<1xf32>
    %271 = vector.multi_reduction <add>, %270, %cst_58 [1] : vector<1x8xf32> to vector<1xf32>
    %272 = vector.shape_cast %271 : vector<1xf32> to vector<1x1xf32>
    %cst_59 = arith.constant 8.000000e+00 : f32
    %273 = vector.broadcast %cst_59 : f32 to vector<1x1xf32>
    %274 = arith.divf %272, %273 : vector<1x1xf32>
    %275 = vector.broadcast %274 : vector<1x1xf32> to vector<1x8xf32>
    %276 = arith.subf %270, %275 : vector<1x8xf32>
    %277 = arith.mulf %276, %276 : vector<1x8xf32>
    %cst_60 = arith.constant dense<0.000000e+00> : vector<1xf32>
    %278 = vector.multi_reduction <add>, %277, %cst_60 [1] : vector<1x8xf32> to vector<1xf32>
    %279 = vector.shape_cast %278 : vector<1xf32> to vector<1x1xf32>
    %cst_61 = arith.constant 8.000000e+00 : f32
    %280 = vector.broadcast %cst_61 : f32 to vector<1x1xf32>
    %281 = arith.divf %279, %280 : vector<1x1xf32>
    %282 = vector.broadcast %274 : vector<1x1xf32> to vector<1x8xf32>
    %283 = arith.subf %270, %282 : vector<1x8xf32>
    %cst_62 = arith.constant 9.99999974E-6 : f32
    %284 = vector.broadcast %cst_62 : f32 to vector<1x1xf32>
    %285 = arith.addf %281, %284 : vector<1x1xf32>
    %286 = math.sqrt %285 : vector<1x1xf32>
    %287 = vector.broadcast %286 : vector<1x1xf32> to vector<1x8xf32>
    %288 = arith.divf %283, %287 : vector<1x8xf32>
    %c1_63 = arith.constant 1 : index
    %289 = memref.load %arg6[%c1_63] : memref<3xf32, #tpu.memory_space<smem>>
    %290 = vector.broadcast %289 : f32 to vector<1x8xf32>
    %291 = arith.mulf %288, %290 : vector<1x8xf32>
    %c2_64 = arith.constant 2 : index
    %292 = memref.load %arg6[%c2_64] : memref<3xf32, #tpu.memory_space<smem>>
    %293 = vector.broadcast %292 : f32 to vector<1x8xf32>
    %294 = arith.addf %291, %293 : vector<1x8xf32>
    %cst_65 = arith.constant 0.000000e+00 : f32
    %295 = vector.broadcast %cst_65 : f32 to vector<1x8xf32>
    %296 = arith.maximumf %294, %295 : vector<1x8xf32>
    %c0_66 = arith.constant 0 : index
    %c0_67 = arith.constant 0 : index
    %297 = vector.load %arg7[%c0_66, %c0_67] : memref<1x8xf32, #tpu.memory_space<vmem>>, vector<1x8xf32>
    tpu.vector_store %arg7[%c0_66, %c0_67], %296 {strides = array<i32>} : memref<1x8xf32, #tpu.memory_space<vmem>>, vector<1x8xf32>,
    return
  }
}

</mosaic_0001>

<llo_original>
// kernel: tpu_custom_call.1
$region0: #{tpu_custom_call.1}
  #allocation0 [shape = 'u32[]', space=smem, size = 0x4, offset = 0x4, fixed_abs, tag = 'smem constant byte address 0x4 - core index']
  #allocation1 [shape = 'u32[144,128]{1,0:T(1,128)}', space=vmem, size = 0x12000, scoped, tag = 'internal scratch']
  %s0 = inlined_call_operand.vmem [shape: f32[3,64], index: 0, kind: input, shape index: {}]
  %s1 = inlined_call_operand.vmem [shape: f32[17,3], index: 1, kind: input, shape index: {}]
  %s2 = inlined_call_operand.vmem [shape: f32[128,17], index: 2, kind: input, shape index: {}]
  %s3 = inlined_call_operand.vmem [shape: f32[128,32], index: 3, kind: input, shape index: {}]
  %s4 = inlined_call_operand.vmem [shape: f32[64,32], index: 4, kind: input, shape index: {}]
  %s5 = inlined_call_operand.vmem [shape: f32[64,4], index: 5, kind: input, shape index: {}]
  %s6 = inlined_call_operand.vmem [shape: f32[3], index: 6, kind: input, shape index: {}]
  %s7 = inlined_call_operand.hbm [shape: f32[1,8], index: 7, kind: output, shape index: {}]
  %s8 = sld [smem:[#allocation0]]
  $region42: #{tpu_custom_call.1} parent=0
    _
  %s10 = ssub.s32 1, %s8
  %s11 = scalar_select 0, %s10, %s8
  $region1: #{tpu_custom_call.1} parent=0
    #allocation2 [shape = 'u8[512]{0}', space=smem, size = 0x200, scoped, tag = 'input window, operand 6, single buffered']
    #allocation3 [shape = 's32[1]{0}', space=sflag, size = 0x4, scoped, tag = 'scoped memory for tpu_custom_call.1']
    #allocation4 [shape = 's32[1]{0}', space=sflag, size = 0x4, scoped, tag = 'scoped memory for tpu_custom_call.1']
    #allocation5 [shape = 'u8[512]{0}', space=vmem, size = 0x400, scoped, tag = 'output window, operand 0, single buffered']
    %12 = vsyncpa [#allocation4], 0
    %13 = vsyncpa [#allocation3], 0
    // Predicated region
    $region2: #{tpu_custom_call.1} parent=1 // pred_check
      _
    $region3: #{tpu_custom_call.1} parent=1 // pred_check_branch
      %15 = sbr.rel (0) target = $region5
    $region4: #{tpu_custom_call.1} parent=1 // pred_region
      _
    $region5: #{tpu_custom_call.1} parent=1 // pred_fallthru
      _
    // Predicated region
    $region6: #{tpu_custom_call.1} parent=1 // pred_check
      _
    $region7: #{tpu_custom_call.1} parent=1 // pred_check_branch
      %17 = sbr.rel (0) target = $region9
    $region8: #{tpu_custom_call.1} parent=1 // pred_region
      _
    $region9: #{tpu_custom_call.1} parent=1 // pred_fallthru
      _
    // Predicated region
    $region10: #{tpu_custom_call.1} parent=1 // pred_check
      _
    $region11: #{tpu_custom_call.1} parent=1 // pred_check_branch
      %19 = sbr.rel (0) target = $region13
    $region12: #{tpu_custom_call.1} parent=1 // pred_region
      _
    $region13: #{tpu_custom_call.1} parent=1 // pred_fallthru
      _
    // Predicated region
    $region14: #{tpu_custom_call.1} parent=1 // pred_check
      _
    $region15: #{tpu_custom_call.1} parent=1 // pred_check_branch
      %21 = sbr.rel (0) target = $region17
    $region16: #{tpu_custom_call.1} parent=1 // pred_region
      _
    $region17: #{tpu_custom_call.1} parent=1 // pred_fallthru
      _
    // Predicated region
    $region18: #{tpu_custom_call.1} parent=1 // pred_check
      _
    $region19: #{tpu_custom_call.1} parent=1 // pred_check_branch
      %23 = sbr.rel (0) target = $region21
    $region20: #{tpu_custom_call.1} parent=1 // pred_region
      _
    $region21: #{tpu_custom_call.1} parent=1 // pred_fallthru
      _
    // Predicated region
    $region22: #{tpu_custom_call.1} parent=1 // pred_check
      _
    $region23: #{tpu_custom_call.1} parent=1 // pred_check_branch
      %25 = sbr.rel (0) target = $region25
    $region24: #{tpu_custom_call.1} parent=1 // pred_region
      _
    $region25: #{tpu_custom_call.1} parent=1 // pred_fallthru
      _
    // Predicated region
    $region26: #{tpu_custom_call.1} parent=1 // pred_check
      _
    $region27: #{tpu_custom_call.1} parent=1 // pred_check_branch
      %27 = sbr.rel (0) target = $region29
    $region28: #{tpu_custom_call.1} parent=1 // pred_region
      %s29 = ssub.s32 16, 16
      %30 = vsyncadd [#allocation4], %s29
      %s32 = sshll.u32 %s6, 4
      %s33 = int_to_ptr.vmem [resolvable:$true] %s32
      %35 = dma.vmem_to_smem %s33, 16, [#allocation2], [#allocation4]
    $region29: #{tpu_custom_call.1} parent=1 // pred_fallthru
      _
    // Predicated region
    $region30: #{tpu_custom_call.1} parent=1 // pred_check
      _
    $region31: #{tpu_custom_call.1} parent=1 // pred_check_branch
      %37 = sbr.rel (0) target = $region33
    $region32: #{tpu_custom_call.1} parent=1 // pred_region
      %38 = dma.done [#allocation4], 16
    $region33: #{tpu_custom_call.1} parent=1 // pred_fallthru
      _
    %39 = sfence
    %v40 = vld [vmem:[%s1] sm:$0xff]
    %v41 = vld [vmem:[%s1 + $0x8] sm:$0xff]
    %v42 = vld [vmem:[%s1 + $0x10] sm:$0x1]
    %v43 = vld [vmem:[%s0] sm:$0x7]
    %vm44 = vcmask 23552
    %v46 = vsel %vm44, %v40, 0
    %v49 = vsel %vm44, %v41, 0
    %v52 = vsel %vm44, %v42, 0
    %vm54 = vcmask 1042432
    %v56 = vsel %vm54, %v43, 0
    %58 = vmatprep.subr.mxu0 0.0
    %59 = vmatpush1.msra.mxu0 %v56
    %60 = vmatprep.subr.mxu0 0.0
    %61 = vmatpush1.msra.mxu0 0.0
    %62 = vmatprep.subr.mxu0 0.0
    %63 = vmatpush1.msra.mxu0 0.0
    %64 = vmatprep.subr.mxu0 0.0
    %65 = vmatpush1.msra.mxu0 0.0
    %66 = vmatprep.subr.mxu0 0.0
    %67 = vmatpush1.msra.mxu0 0.0
    %68 = vmatprep.subr.mxu0 0.0
    %69 = vmatpush1.msra.mxu0 0.0
    %70 = vmatprep.subr.mxu0 0.0
    %71 = vmatpush1.msra.mxu0 0.0
    %72 = vmatprep.subr.mxu0 0.0
    %73 = vmatpush1.msra.mxu0 0.0
    %74 = vmatprep.subr.mxu0 0.0
    %75 = vmatpush1.msra.mxu0 0.0
    %76 = vmatprep.subr.mxu0 0.0
    %77 = vmatpush1.msra.mxu0 0.0
    %78 = vmatprep.subr.mxu0 0.0
    %79 = vmatpush1.msra.mxu0 0.0
    %80 = vmatprep.subr.mxu0 0.0
    %81 = vmatpush1.msra.mxu0 0.0
    %82 = vmatprep.subr.mxu0 0.0
    %83 = vmatpush1.msra.mxu0 0.0
    %84 = vmatprep.subr.mxu0 0.0
    %85 = vmatpush1.msra.mxu0 0.0
    %86 = vmatprep.subr.mxu0 0.0
    %87 = vmatpush1.msra.mxu0 0.0
    %88 = vmatprep.subr.mxu0 0.0
    %89 = vmatpush1.msra.mxu0 0.0
    %90 = vmatprep.subr.mxu0 0.0
    %91 = vmatpush1.msra.mxu0 0.0
    %92 = vmatprep.subr.mxu0 0.0
    %93 = vmatpush1.msra.mxu0 0.0
    %94 = vmatprep.subr.mxu0 0.0
    %95 = vmatpush1.msra.mxu0 0.0
    %96 = vmatprep.subr.mxu0 0.0
    %97 = vmatpush1.msra.mxu0 0.0
    %98 = vmatprep.subr.mxu0 0.0
    %99 = vmatpush1.msra.mxu0 0.0
    %100 = vmatprep.subr.mxu0 0.0
    %101 = vmatpush1.msra.mxu0 0.0
    %102 = vmatprep.subr.mxu0 0.0
    %103 = vmatpush1.msra.mxu0 0.0
    %104 = vmatprep.subr.mxu0 0.0
    %105 = vmatpush1.msra.mxu0 0.0
    %106 = vmatprep.subr.mxu0 0.0
    %107 = vmatpush1.msra.mxu0 0.0
    %108 = vmatprep.subr.mxu0 0.0
    %109 = vmatpush1.msra.mxu0 0.0
    %110 = vmatprep.subr.mxu0 0.0
    %111 = vmatpush1.msra.mxu0 0.0
    %112 = vmatprep.subr.mxu0 0.0
    %113 = vmatpush1.msra.mxu0 0.0
    %114 = vmatprep.subr.mxu0 0.0
    %115 = vmatpush1.msra.mxu0 0.0
    %116 = vmatprep.subr.mxu0 0.0
    %117 = vmatpush1.msra.mxu0 0.0
    %118 = vmatprep.subr.mxu0 0.0
    %119 = vmatpush1.msra.mxu0 0.0
    %120 = vmatprep.subr.mxu0 0.0
    %121 = vmatpush1.msra.mxu0 0.0
    %122 = vmatprep.mubr.f32.mxu0 0.0
    %123 = vmatmul.mubr.f32.gmra.mrb[0].mxu0 %v46
    %v124 = vpop.f32.mrb[0].mxu0
    %v125 = vadd.f32 0.0, %v124
    %v126 = vpop.f32.mrb[0].mxu0
    %127 = vmatprep.mubr.f32.mxu0 0.0
    %128 = vmatmul.mubr.f32.gmra.mrb[0].mxu0 %v49
    %v129 = vpop.f32.mrb[0].mxu0
    %v130 = vadd.f32 0.0, %v129
    %v131 = vpop.f32.mrb[0].mxu0
    %132 = vmatprep.mubr.f32.mxu0 0.0
    %133 = vmatmul.mubr.f32.gmra.mrb[0].mxu0 %v52
    %v134 = vpop.f32.mrb[0].mxu0
    %v135 = vadd.f32 0.0, %v134
    %v136 = vpop.f32.mrb[0].mxu0
    %137 = vdwg.mxu0
    %v138 = vld [vmem:[%s2] sm:$0xff]
    %v139 = vld [vmem:[%s2 + $0x8] sm:$0xff]
    %v140 = vld [vmem:[%s2 + $0x10] sm:$0xff]
    %v141 = vld [vmem:[%s2 + $0x18] sm:$0xff]
    %v142 = vld [vmem:[%s2 + $0x20] sm:$0xff]
    %v143 = vld [vmem:[%s2 + $0x28] sm:$0xff]
    %v144 = vld [vmem:[%s2 + $0x30] sm:$0xff]
    %v145 = vld [vmem:[%s2 + $0x38] sm:$0xff]
    %v146 = vld [vmem:[%s2 + $0x40] sm:$0xff]
    %v147 = vld [vmem:[%s2 + $0x48] sm:$0xff]
    %v148 = vld [vmem:[%s2 + $0x50] sm:$0xff]
    %v149 = vld [vmem:[%s2 + $0x58] sm:$0xff]
    %v150 = vld [vmem:[%s2 + $0x60] sm:$0xff]
    %v151 = vld [vmem:[%s2 + $0x68] sm:$0xff]
    %v152 = vld [vmem:[%s2 + $0x70] sm:$0xff]
    %v153 = vld [vmem:[%s2 + $0x78] sm:$0xff]
    %vm154 = vcmask 138240
    %v156 = vsel %vm154, %v138, 0
    %v159 = vsel %vm154, %v139, 0
    %v162 = vsel %vm154, %v140, 0
    %v165 = vsel %vm154, %v141, 0
    %v168 = vsel %vm154, %v142, 0
    %v171 = vsel %vm154, %v143, 0
    %v174 = vsel %vm154, %v144, 0
    %v177 = vsel %vm154, %v145, 0
    %v180 = vsel %vm154, %v146, 0
    %v183 = vsel %vm154, %v147, 0
    %v186 = vsel %vm154, %v148, 0
    %v189 = vsel %vm154, %v149, 0
    %v192 = vsel %vm154, %v150, 0
    %v195 = vsel %vm154, %v151, 0
    %v198 = vsel %vm154, %v152, 0
    %v201 = vsel %vm154, %v153, 0
    %vm203 = vcmask 1040384
    %v205 = vsel %vm203, %v135, 0
    %207 = vmatprep.subr.mxu0 0.0
    %208 = vmatpush1.msra.mxu0 %v125
    %209 = vmatprep.subr.mxu0 0.0
    %210 = vmatpush1.msra.mxu0 %v130
    %211 = vmatprep.subr.mxu0 0.0
    %212 = vmatpush1.msra.mxu0 %v205
    %213 = vmatprep.subr.mxu0 0.0
    %214 = vmatpush1.msra.mxu0 0.0
    %215 = vmatprep.subr.mxu0 0.0
    %216 = vmatpush1.msra.mxu0 0.0
    %217 = vmatprep.subr.mxu0 0.0
    %218 = vmatpush1.msra.mxu0 0.0
    %219 = vmatprep.subr.mxu0 0.0
    %220 = vmatpush1.msra.mxu0 0.0
    %221 = vmatprep.subr.mxu0 0.0
    %222 = vmatpush1.msra.mxu0 0.0
    %223 = vmatprep.subr.mxu0 0.0
    %224 = vmatpush1.msra.mxu0 0.0
    %225 = vmatprep.subr.mxu0 0.0
    %226 = vmatpush1.msra.mxu0 0.0
    %227 = vmatprep.subr.mxu0 0.0
    %228 = vmatpush1.msra.mxu0 0.0
    %229 = vmatprep.subr.mxu0 0.0
    %230 = vmatpush1.msra.mxu0 0.0
    %231 = vmatprep.subr.mxu0 0.0
    %232 = vmatpush1.msra.mxu0 0.0
    %233 = vmatprep.subr.mxu0 0.0
    %234 = vmatpush1.msra.mxu0 0.0
    %235 = vmatprep.subr.mxu0 0.0
    %236 = vmatpush1.msra.mxu0 0.0
    %237 = vmatprep.subr.mxu0 0.0
    %238 = vmatpush1.msra.mxu0 0.0
    %239 = vmatprep.subr.mxu0 0.0
    %240 = vmatpush1.msra.mxu0 0.0
    %241 = vmatprep.subr.mxu0 0.0
    %242 = vmatpush1.msra.mxu0 0.0
    %243 = vmatprep.subr.mxu0 0.0
    %244 = vmatpush1.msra.mxu0 0.0
    %245 = vmatprep.subr.mxu0 0.0
    %246 = vmatpush1.msra.mxu0 0.0
    %247 = vmatprep.subr.mxu0 0.0
    %248 = vmatpush1.msra.mxu0 0.0
    %249 = vmatprep.subr.mxu0 0.0
    %250 = vmatpush1.msra.mxu0 0.0
    %251 = vmatprep.subr.mxu0 0.0
    %252 = vmatpush1.msra.mxu0 0.0
    %253 = vmatprep.subr.mxu0 0.0
    %254 = vmatpush1.msra.mxu0 0.0
    %255 = vmatprep.subr.mxu0 0.0
    %256 = vmatpush1.msra.mxu0 0.0
    %257 = vmatprep.subr.mxu0 0.0
    %258 = vmatpush1.msra.mxu0 0.0
    %259 = vmatprep.subr.mxu0 0.0
    %260 = vmatpush1.msra.mxu0 0.0
    %261 = vmatprep.subr.mxu0 0.0
    %262 = vmatpush1.msra.mxu0 0.0
    %263 = vmatprep.subr.mxu0 0.0
    %264 = vmatpush1.msra.mxu0 0.0
    %265 = vmatprep.subr.mxu0 0.0
    %266 = vmatpush1.msra.mxu0 0.0
    %267 = vmatprep.subr.mxu0 0.0
    %268 = vmatpush1.msra.mxu0 0.0
    %269 = vmatprep.subr.mxu0 0.0
    %270 = vmatpush1.msra.mxu0 0.0
    %271 = vmatprep.mubr.f32.mxu0 0.0
    %272 = vmatmul.mubr.f32.gmra.mrb[0].mxu0 %v156
    %v273 = vpop.f32.mrb[0].mxu0
    %v274 = vadd.f32 0.0, %v273
    %v275 = vpop.f32.mrb[0].mxu0
    %276 = vmatprep.mubr.f32.mxu0 0.0
    %277 = vmatmul.mubr.f32.gmra.mrb[0].mxu0 %v159
    %v278 = vpop.f32.mrb[0].mxu0
    %v279 = vadd.f32 0.0, %v278
    %v280 = vpop.f32.mrb[0].mxu0
    %281 = vmatprep.mubr.f32.mxu0 0.0
    %282 = vmatmul.mubr.f32.gmra.mrb[0].mxu0 %v162
    %v283 = vpop.f32.mrb[0].mxu0
    %v284 = vadd.f32 0.0, %v283
    %v285 = vpop.f32.mrb[0].mxu0
    %286 = vmatprep.mubr.f32.mxu0 0.0
    %287 = vmatmul.mubr.f32.gmra.mrb[0].mxu0 %v165
    %v288 = vpop.f32.mrb[0].mxu0
    %v289 = vadd.f32 0.0, %v288
    %v290 = vpop.f32.mrb[0].mxu0
    %291 = vmatprep.mubr.f32.mxu0 0.0
    %292 = vmatmul.mubr.f32.gmra.mrb[0].mxu0 %v168
    %v293 = vpop.f32.mrb[0].mxu0
    %v294 = vadd.f32 0.0, %v293
    %v295 = vpop.f32.mrb[0].mxu0
    %296 = vmatprep.mubr.f32.mxu0 0.0
    %297 = vmatmul.mubr.f32.gmra.mrb[0].mxu0 %v171
    %v298 = vpop.f32.mrb[0].mxu0
    %v299 = vadd.f32 0.0, %v298
    %v300 = vpop.f32.mrb[0].mxu0
    %301 = vmatprep.mubr.f32.mxu0 0.0
    %302 = vmatmul.mubr.f32.gmra.mrb[0].mxu0 %v174
    %v303 = vpop.f32.mrb[0].mxu0
    %v304 = vadd.f32 0.0, %v303
    %v305 = vpop.f32.mrb[0].mxu0
    %306 = vmatprep.mubr.f32.mxu0 0.0
    %307 = vmatmul.mubr.f32.gmra.mrb[0].mxu0 %v177
    %v308 = vpop.f32.mrb[0].mxu0
    %v309 = vadd.f32 0.0, %v308
    %v310 = vpop.f32.mrb[0].mxu0
    %311 = vmatprep.mubr.f32.mxu0 0.0
    %312 = vmatmul.mubr.f32.gmra.mrb[0].mxu0 %v180
    %v313 = vpop.f32.mrb[0].mxu0
    %v314 = vadd.f32 0.0, %v313
    %v315 = vpop.f32.mrb[0].mxu0
    %316 = vmatprep.mubr.f32.mxu0 0.0
    %317 = vmatmul.mubr.f32.gmra.mrb[0].mxu0 %v183
    %v318 = vpop.f32.mrb[0].mxu0
    %v319 = vadd.f32 0.0, %v318
    %v320 = vpop.f32.mrb[0].mxu0
    %321 = vmatprep.mubr.f32.mxu0 0.0
    %322 = vmatmul.mubr.f32.gmra.mrb[0].mxu0 %v186
    %v323 = vpop.f32.mrb[0].mxu0
    %v324 = vadd.f32 0.0, %v323
    %v325 = vpop.f32.mrb[0].mxu0
    %326 = vmatprep.mubr.f32.mxu0 0.0
    %327 = vmatmul.mubr.f32.gmra.mrb[0].mxu0 %v189
    %v328 = vpop.f32.mrb[0].mxu0
    %v329 = vadd.f32 0.0, %v328
    %v330 = vpop.f32.mrb[0].mxu0
    %331 = vmatprep.mubr.f32.mxu0 0.0
    %332 = vmatmul.mubr.f32.gmra.mrb[0].mxu0 %v192
    %v333 = vpop.f32.mrb[0].mxu0
    %v334 = vadd.f32 0.0, %v333
    %v335 = vpop.f32.mrb[0].mxu0
    %336 = vmatprep.mubr.f32.mxu0 0.0
    %337 = vmatmul.mubr.f32.gmra.mrb[0].mxu0 %v195
    %v338 = vpop.f32.mrb[0].mxu0
    %v339 = vadd.f32 0.0, %v338
    %v340 = vpop.f32.mrb[0].mxu0
    %341 = vmatprep.mubr.f32.mxu0 0.0
    %342 = vmatmul.mubr.f32.gmra.mrb[0].mxu0 %v198
    %v343 = vpop.f32.mrb[0].mxu0
    %v344 = vadd.f32 0.0, %v343
    %v345 = vpop.f32.mrb[0].mxu0
    %346 = vmatprep.mubr.f32.mxu0 0.0
    %347 = vmatmul.mubr.f32.gmra.mrb[0].mxu0 %v201
    %v348 = vpop.f32.mrb[0].mxu0
    %v349 = vadd.f32 0.0, %v348
    %v350 = vpop.f32.mrb[0].mxu0
    %351 = vdwg.mxu0
    %v352 = vld [vmem:[%s3] sm:$0xff]
    %v353 = vld [vmem:[%s3 + $0x8] sm:$0xff]
    %v354 = vld [vmem:[%s3 + $0x10] sm:$0xff]
    %v355 = vld [vmem:[%s3 + $0x18] sm:$0xff]
    %v356 = vld [vmem:[%s3 + $0x20] sm:$0xff]
    %v357 = vld [vmem:[%s3 + $0x28] sm:$0xff]
    %v358 = vld [vmem:[%s3 + $0x30] sm:$0xff]
    %v359 = vld [vmem:[%s3 + $0x38] sm:$0xff]
    %v360 = vld [vmem:[%s3 + $0x40] sm:$0xff]
    %v361 = vld [vmem:[%s3 + $0x48] sm:$0xff]
    %v362 = vld [vmem:[%s3 + $0x50] sm:$0xff]
    %v363 = vld [vmem:[%s3 + $0x58] sm:$0xff]
    %v364 = vld [vmem:[%s3 + $0x60] sm:$0xff]
    %v365 = vld [vmem:[%s3 + $0x68] sm:$0xff]
    %v366 = vld [vmem:[%s3 + $0x70] sm:$0xff]
    %v367 = vld [vmem:[%s3 + $0x78] sm:$0xff]
    %vm368 = vcmask 261120
    %v370 = vsel %vm368, %v352, 0
    %v373 = vsel %vm368, %v353, 0
    %v376 = vsel %vm368, %v354, 0
    %v379 = vsel %vm368, %v355, 0
    %v382 = vsel %vm368, %v356, 0
    %v385 = vsel %vm368, %v357, 0
    %v388 = vsel %vm368, %v358, 0
    %v391 = vsel %vm368, %v359, 0
    %v394 = vsel %vm368, %v360, 0
    %v397 = vsel %vm368, %v361, 0
    %v400 = vsel %vm368, %v362, 0
    %v403 = vsel %vm368, %v363, 0
    %v406 = vsel %vm368, %v364, 0
    %v409 = vsel %vm368, %v365, 0
    %v412 = vsel %vm368, %v366, 0
    %v415 = vsel %vm368, %v367, 0
    %417 = vmatprep.subr.mxu0 0.0
    %418 = vmatpush1.msra.mxu0 0.0
    %419 = vmatprep.subr.mxu0 0.0
    %420 = vmatpush1.msra.mxu0 0.0
    %421 = vmatprep.subr.mxu0 0.0
    %422 = vmatpush1.msra.mxu0 0.0
    %423 = vmatprep.subr.mxu0 0.0
    %424 = vmatpush1.msra.mxu0 0.0
    %425 = vmatprep.subr.mxu0 0.0
    %426 = vmatpush1.msra.mxu0 0.0
    %427 = vmatprep.subr.mxu0 0.0
    %428 = vmatpush1.msra.mxu0 0.0
    %429 = vmatprep.subr.mxu0 0.0
    %430 = vmatpush1.msra.mxu0 0.0
    %431 = vmatprep.subr.mxu0 0.0
    %432 = vmatpush1.msra.mxu0 0.0
    %433 = vmatprep.subr.mxu0 0.0
    %434 = vmatpush1.msra.mxu0 0.0
    %435 = vmatprep.subr.mxu0 0.0
    %436 = vmatpush1.msra.mxu0 0.0
    %437 = vmatprep.subr.mxu0 0.0
    %438 = vmatpush1.msra.mxu0 0.0
    %439 = vmatprep.subr.mxu0 0.0
    %440 = vmatpush1.msra.mxu0 0.0
    %441 = vmatprep.subr.mxu0 0.0
    %442 = vmatpush1.msra.mxu0 0.0
    %443 = vmatprep.subr.mxu0 0.0
    %444 = vmatpush1.msra.mxu0 0.0
    %445 = vmatprep.subr.mxu0 0.0
    %446 = vmatpush1.msra.mxu0 0.0
    %447 = vmatprep.subr.mxu0 0.0
    %448 = vmatpush1.msra.mxu0 0.0
    %449 = vmatprep.subr.mxu0 0.0
    %450 = vmatpush1.msra.mxu0 0.0
    %451 = vmatprep.subr.mxu0 0.0
    %452 = vmatpush1.msra.mxu0 0.0
    %453 = vmatprep.subr.mxu0 0.0
    %454 = vmatpush1.msra.mxu0 0.0
    %455 = vmatprep.subr.mxu0 0.0
    %456 = vmatpush1.msra.mxu0 0.0
    %457 = vmatprep.subr.mxu0 0.0
    %458 = vmatpush1.msra.mxu0 0.0
    %459 = vmatprep.subr.mxu0 0.0
    %460 = vmatpush1.msra.mxu0 0.0
    %461 = vmatprep.subr.mxu0 0.0
    %462 = vmatpush1.msra.mxu0 0.0
    %463 = vmatprep.subr.mxu0 0.0
    %464 = vmatpush1.msra.mxu0 0.0
    %465 = vmatprep.subr.mxu0 0.0
    %466 = vmatpush1.msra.mxu0 0.0
    %467 = vmatprep.subr.mxu0 0.0
    %468 = vmatpush1.msra.mxu0 0.0
    %469 = vmatprep.subr.mxu0 0.0
    %470 = vmatpush1.msra.mxu0 0.0
    %471 = vmatprep.subr.mxu0 0.0
    %472 = vmatpush1.msra.mxu0 0.0
    %473 = vmatprep.subr.mxu0 0.0
    %474 = vmatpush1.msra.mxu0 0.0
    %475 = vmatprep.subr.mxu0 0.0
    %476 = vmatpush1.msra.mxu0 0.0
    %477 = vmatprep.subr.mxu0 0.0
    %478 = vmatpush1.msra.mxu0 0.0
    %479 = vmatprep.subr.mxu0 0.0
    %480 = vmatpush1.msra.mxu0 0.0
    %481 = vmatprep.mubr.f32.mxu0 0.0
    %482 = vmatmul.mubr.f32.gmra.mrb[0].mxu0 %v370
    %v483 = vpop.f32.mrb[0].mxu0
    %v484 = vadd.f32 %v274, %v483
    %v485 = vpop.f32.mrb[0].mxu0
    %486 = vmatprep.mubr.f32.mxu0 0.0
    %487 = vmatmul.mubr.f32.gmra.mrb[0].mxu0 %v373
    %v488 = vpop.f32.mrb[0].mxu0
    %v489 = vadd.f32 %v279, %v488
    %v490 = vpop.f32.mrb[0].mxu0
    %491 = vmatprep.mubr.f32.mxu0 0.0
    %492 = vmatmul.mubr.f32.gmra.mrb[0].mxu0 %v376
    %v493 = vpop.f32.mrb[0].mxu0
    %v494 = vadd.f32 %v284, %v493
    %v495 = vpop.f32.mrb[0].mxu0
    %496 = vmatprep.mubr.f32.mxu0 0.0
    %497 = vmatmul.mubr.f32.gmra.mrb[0].mxu0 %v379
    %v498 = vpop.f32.mrb[0].mxu0
    %v499 = vadd.f32 %v289, %v498
    %v500 = vpop.f32.mrb[0].mxu0
    %501 = vmatprep.mubr.f32.mxu0 0.0
    %502 = vmatmul.mubr.f32.gmra.mrb[0].mxu0 %v382
    %v503 = vpop.f32.mrb[0].mxu0
    %v504 = vadd.f32 %v294, %v503
    %v505 = vpop.f32.mrb[0].mxu0
    %506 = vmatprep.mubr.f32.mxu0 0.0
    %507 = vmatmul.mubr.f32.gmra.mrb[0].mxu0 %v385
    %v508 = vpop.f32.mrb[0].mxu0
    %v509 = vadd.f32 %v299, %v508
    %v510 = vpop.f32.mrb[0].mxu0
    %511 = vmatprep.mubr.f32.mxu0 0.0
    %512 = vmatmul.mubr.f32.gmra.mrb[0].mxu0 %v388
    %v513 = vpop.f32.mrb[0].mxu0
    %v514 = vadd.f32 %v304, %v513
    %v515 = vpop.f32.mrb[0].mxu0
    %516 = vmatprep.mubr.f32.mxu0 0.0
    %517 = vmatmul.mubr.f32.gmra.mrb[0].mxu0 %v391
    %v518 = vpop.f32.mrb[0].mxu0
    %v519 = vadd.f32 %v309, %v518
    %v520 = vpop.f32.mrb[0].mxu0
    %521 = vmatprep.mubr.f32.mxu0 0.0
    %522 = vmatmul.mubr.f32.gmra.mrb[0].mxu0 %v394
    %v523 = vpop.f32.mrb[0].mxu0
    %v524 = vadd.f32 %v314, %v523
    %v525 = vpop.f32.mrb[0].mxu0
    %526 = vmatprep.mubr.f32.mxu0 0.0
    %527 = vmatmul.mubr.f32.gmra.mrb[0].mxu0 %v397
    %v528 = vpop.f32.mrb[0].mxu0
    %v529 = vadd.f32 %v319, %v528
    %v530 = vpop.f32.mrb[0].mxu0
    %531 = vmatprep.mubr.f32.mxu0 0.0
    %532 = vmatmul.mubr.f32.gmra.mrb[0].mxu0 %v400
    %v533 = vpop.f32.mrb[0].mxu0
    %v534 = vadd.f32 %v324, %v533
    %v535 = vpop.f32.mrb[0].mxu0
    %536 = vmatprep.mubr.f32.mxu0 0.0
    %537 = vmatmul.mubr.f32.gmra.mrb[0].mxu0 %v403
    %v538 = vpop.f32.mrb[0].mxu0
    %v539 = vadd.f32 %v329, %v538
    %v540 = vpop.f32.mrb[0].mxu0
    %541 = vmatprep.mubr.f32.mxu0 0.0
    %542 = vmatmul.mubr.f32.gmra.mrb[0].mxu0 %v406
    %v543 = vpop.f32.mrb[0].mxu0
    %v544 = vadd.f32 %v334, %v543
    %v545 = vpop.f32.mrb[0].mxu0
    %546 = vmatprep.mubr.f32.mxu0 0.0
    %547 = vmatmul.mubr.f32.gmra.mrb[0].mxu0 %v409
    %v548 = vpop.f32.mrb[0].mxu0
    %v549 = vadd.f32 %v339, %v548
    %v550 = vpop.f32.mrb[0].mxu0
    %551 = vmatprep.mubr.f32.mxu0 0.0
    %552 = vmatmul.mubr.f32.gmra.mrb[0].mxu0 %v412
    %v553 = vpop.f32.mrb[0].mxu0
    %v554 = vadd.f32 %v344, %v553
    %v555 = vpop.f32.mrb[0].mxu0
    %556 = vmatprep.mubr.f32.mxu0 0.0
    %557 = vmatmul.mubr.f32.gmra.mrb[0].mxu0 %v415
    %v558 = vpop.f32.mrb[0].mxu0
    %v559 = vadd.f32 %v349, %v558
    %v560 = vpop.f32.mrb[0].mxu0
    %561 = vdwg.mxu0
    %v562 = vxor.u32 %v484, 2147483648
    %v563 = vxor.u32 %v489, 2147483648
    %v564 = vxor.u32 %v494, 2147483648
    %v565 = vxor.u32 %v499, 2147483648
    %v566 = vmul.f32 %v562, 1.442695
    %v567 = vpow.pop %v566
    %v568 = vmul.f32 %v563, 1.442695
    %v569 = vpow.pop %v568
    %v570 = vmul.f32 %v564, 1.442695
    %v571 = vpow.pop %v570
    %v572 = vmul.f32 %v565, 1.442695
    %v573 = vpow.pop %v572
    %v574 = vadd.f32 %v567, 1.0
    %v575 = vadd.f32 %v569, 1.0
    %v576 = vadd.f32 %v571, 1.0
    %v577 = vadd.f32 %v573, 1.0
    %v578 = vrcp.pop %v574
    %v579 = vmul.f32 1.0, %v578
    %v580 = vrcp.pop %v575
    %v581 = vmul.f32 1.0, %v580
    %v582 = vrcp.pop %v576
    %v583 = vmul.f32 1.0, %v582
    %v584 = vrcp.pop %v577
    %v585 = vmul.f32 1.0, %v584
    %v586 = vxor.u32 %v504, 2147483648
    %v587 = vxor.u32 %v509, 2147483648
    %v588 = vxor.u32 %v514, 2147483648
    %v589 = vxor.u32 %v519, 2147483648
    %v590 = vmul.f32 %v586, 1.442695
    %v591 = vpow.pop %v590
    %v592 = vmul.f32 %v587, 1.442695
    %v593 = vpow.pop %v592
    %v594 = vmul.f32 %v588, 1.442695
    %v595 = vpow.pop %v594
    %v596 = vmul.f32 %v589, 1.442695
    %v597 = vpow.pop %v596
    %v598 = vadd.f32 %v591, 1.0
    %v599 = vadd.f32 %v593, 1.0
    %v600 = vadd.f32 %v595, 1.0
    %v601 = vadd.f32 %v597, 1.0
    %v602 = vrcp.pop %v598
    %v603 = vmul.f32 1.0, %v602
    %v604 = vrcp.pop %v599
    %v605 = vmul.f32 1.0, %v604
    %v606 = vrcp.pop %v600
    %v607 = vmul.f32 1.0, %v606
    %v608 = vrcp.pop %v601
    %v609 = vmul.f32 1.0, %v608
    %v610 = vtanh.pop %v524
    %v611 = vtanh.pop %v529
    %v612 = vtanh.pop %v534
    %v613 = vtanh.pop %v539
    %v614 = vxor.u32 %v544, 2147483648
    %v615 = vxor.u32 %v549, 2147483648
    %v616 = vxor.u32 %v554, 2147483648
    %v617 = vxor.u32 %v559, 2147483648
    %v618 = vmul.f32 %v614, 1.442695
    %v619 = vpow.pop %v618
    %v620 = vmul.f32 %v615, 1.442695
    %v621 = vpow.pop %v620
    %v622 = vmul.f32 %v616, 1.442695
    %v623 = vpow.pop %v622
    %v624 = vmul.f32 %v617, 1.442695
    %v625 = vpow.pop %v624
    %v626 = vadd.f32 %v619, 1.0
    %v627 = vadd.f32 %v621, 1.0
    %v628 = vadd.f32 %v623, 1.0
    %v629 = vadd.f32 %v625, 1.0
    %v630 = vrcp.pop %v626
    %v631 = vmul.f32 1.0, %v630
    %v632 = vrcp.pop %v627
    %v633 = vmul.f32 1.0, %v632
    %v634 = vrcp.pop %v628
    %v635 = vmul.f32 1.0, %v634
    %v636 = vrcp.pop %v629
    %v637 = vmul.f32 1.0, %v636
    %v638 = vmul.f32 %v603, 0.0
    %v639 = vmul.f32 %v605, 0.0
    %v640 = vmul.f32 %v607, 0.0
    %v641 = vmul.f32 %v609, 0.0
    %v642 = vmul.f32 %v579, %v610
    %v643 = vmul.f32 %v581, %v611
    %v644 = vmul.f32 %v583, %v612
    %v645 = vmul.f32 %v585, %v613
    %v646 = vadd.f32 %v638, %v642
    %v647 = vadd.f32 %v639, %v643
    %v648 = vadd.f32 %v640, %v644
    %v649 = vadd.f32 %v641, %v645
    %v650 = vtanh.pop %v646
    %v651 = vtanh.pop %v647
    %v652 = vtanh.pop %v648
    %v653 = vtanh.pop %v649
    %v654 = vmul.f32 %v631, %v650
    %v655 = vmul.f32 %v633, %v651
    %v656 = vmul.f32 %v635, %v652
    %v657 = vmul.f32 %v637, %v653
    %674 = vrot.lane.b32.xlu0 %v274, 120
    %v675 = vpop.permute.xlu0 %674
    %676 = vrot.lane.b32.xlu0 %v279, 120
    %v677 = vpop.permute.xlu0 %676
    %678 = vrot.lane.b32.xlu0 %v284, 120
    %v679 = vpop.permute.xlu0 %678
    %680 = vrot.lane.b32.xlu0 %v289, 120
    %v681 = vpop.permute.xlu0 %680
    %682 = vrot.lane.b32.xlu0 %v294, 120
    %v683 = vpop.permute.xlu0 %682
    %684 = vrot.lane.b32.xlu0 %v299, 120
    %v685 = vpop.permute.xlu0 %684
    %686 = vrot.lane.b32.xlu0 %v304, 120
    %v687 = vpop.permute.xlu0 %686
    %688 = vrot.lane.b32.xlu0 %v309, 120
    %v689 = vpop.permute.xlu0 %688
    %690 = vrot.lane.b32.xlu0 %v314, 120
    %v691 = vpop.permute.xlu0 %690
    %692 = vrot.lane.b32.xlu0 %v319, 120
    %v693 = vpop.permute.xlu0 %692
    %694 = vrot.lane.b32.xlu0 %v324, 120
    %v695 = vpop.permute.xlu0 %694
    %696 = vrot.lane.b32.xlu0 %v329, 120
    %v697 = vpop.permute.xlu0 %696
    %698 = vrot.lane.b32.xlu0 %v334, 120
    %v699 = vpop.permute.xlu0 %698
    %700 = vrot.lane.b32.xlu0 %v339, 120
    %v701 = vpop.permute.xlu0 %700
    %702 = vrot.lane.b32.xlu0 %v344, 120
    %v703 = vpop.permute.xlu0 %702
    %704 = vrot.lane.b32.xlu0 %v349, 120
    %v705 = vpop.permute.xlu0 %704
    %722 = vmatprep.subr.mxu0 0.0
    %723 = vmatpush1.msra.mxu0 %v654
    %724 = vmatprep.subr.mxu0 0.0
    %725 = vmatpush1.msra.mxu0 %v655
    %726 = vmatprep.subr.mxu0 0.0
    %727 = vmatpush1.msra.mxu0 %v656
    %728 = vmatprep.subr.mxu0 0.0
    %729 = vmatpush1.msra.mxu0 %v657
    %730 = vmatprep.subr.mxu0 0.0
    %731 = vmatpush1.msra.mxu0 0.0
    %732 = vmatprep.subr.mxu0 0.0
    %733 = vmatpush1.msra.mxu0 0.0
    %734 = vmatprep.subr.mxu0 0.0
    %735 = vmatpush1.msra.mxu0 0.0
    %736 = vmatprep.subr.mxu0 0.0
    %737 = vmatpush1.msra.mxu0 0.0
    %738 = vmatprep.subr.mxu0 0.0
    %739 = vmatpush1.msra.mxu0 0.0
    %740 = vmatprep.subr.mxu0 0.0
    %741 = vmatpush1.msra.mxu0 0.0
    %742 = vmatprep.subr.mxu0 0.0
    %743 = vmatpush1.msra.mxu0 0.0
    %744 = vmatprep.subr.mxu0 0.0
    %745 = vmatpush1.msra.mxu0 0.0
    %746 = vmatprep.subr.mxu0 0.0
    %747 = vmatpush1.msra.mxu0 0.0
    %748 = vmatprep.subr.mxu0 0.0
    %749 = vmatpush1.msra.mxu0 0.0
    %750 = vmatprep.subr.mxu0 0.0
    %751 = vmatpush1.msra.mxu0 0.0
    %752 = vmatprep.subr.mxu0 0.0
    %753 = vmatpush1.msra.mxu0 0.0
    %754 = vmatprep.subr.mxu0 0.0
    %755 = vmatpush1.msra.mxu0 0.0
    %756 = vmatprep.subr.mxu0 0.0
    %757 = vmatpush1.msra.mxu0 0.0
    %758 = vmatprep.subr.mxu0 0.0
    %759 = vmatpush1.msra.mxu0 0.0
    %760 = vmatprep.subr.mxu0 0.0
    %761 = vmatpush1.msra.mxu0 0.0
    %762 = vmatprep.subr.mxu0 0.0
    %763 = vmatpush1.msra.mxu0 0.0
    %764 = vmatprep.subr.mxu0 0.0
    %765 = vmatpush1.msra.mxu0 0.0
    %766 = vmatprep.subr.mxu0 0.0
    %767 = vmatpush1.msra.mxu0 0.0
    %768 = vmatprep.subr.mxu0 0.0
    %769 = vmatpush1.msra.mxu0 0.0
    %770 = vmatprep.subr.mxu0 0.0
    %771 = vmatpush1.msra.mxu0 0.0
    %772 = vmatprep.subr.mxu0 0.0
    %773 = vmatpush1.msra.mxu0 0.0
    %774 = vmatprep.subr.mxu0 0.0
    %775 = vmatpush1.msra.mxu0 0.0
    %776 = vmatprep.subr.mxu0 0.0
    %777 = vmatpush1.msra.mxu0 0.0
    %778 = vmatprep.subr.mxu0 0.0
    %779 = vmatpush1.msra.mxu0 0.0
    %780 = vmatprep.subr.mxu0 0.0
    %781 = vmatpush1.msra.mxu0 0.0
    %782 = vmatprep.subr.mxu0 0.0
    %783 = vmatpush1.msra.mxu0 0.0
    %784 = vmatprep.subr.mxu0 0.0
    %785 = vmatpush1.msra.mxu0 0.0
    %786 = vmatprep.mubr.f32.mxu0 0.0
    %787 = vmatmul.mubr.f32.gmra.mrb[0].mxu0 %v370
    %v788 = vpop.f32.mrb[0].mxu0
    %v789 = vadd.f32 %v675, %v788
    %v790 = vpop.f32.mrb[0].mxu0
    %791 = vmatprep.mubr.f32.mxu0 0.0
    %792 = vmatmul.mubr.f32.gmra.mrb[0].mxu0 %v373
    %v793 = vpop.f32.mrb[0].mxu0
    %v794 = vadd.f32 %v677, %v793
    %v795 = vpop.f32.mrb[0].mxu0
    %796 = vmatprep.mubr.f32.mxu0 0.0
    %797 = vmatmul.mubr.f32.gmra.mrb[0].mxu0 %v376
    %v798 = vpop.f32.mrb[0].mxu0
    %v799 = vadd.f32 %v679, %v798
    %v800 = vpop.f32.mrb[0].mxu0
    %801 = vmatprep.mubr.f32.mxu0 0.0
    %802 = vmatmul.mubr.f32.gmra.mrb[0].mxu0 %v379
    %v803 = vpop.f32.mrb[0].mxu0
    %v804 = vadd.f32 %v681, %v803
    %v805 = vpop.f32.mrb[0].mxu0
    %806 = vmatprep.mubr.f32.mxu0 0.0
    %807 = vmatmul.mubr.f32.gmra.mrb[0].mxu0 %v382
    %v808 = vpop.f32.mrb[0].mxu0
    %v809 = vadd.f32 %v683, %v808
    %v810 = vpop.f32.mrb[0].mxu0
    %811 = vmatprep.mubr.f32.mxu0 0.0
    %812 = vmatmul.mubr.f32.gmra.mrb[0].mxu0 %v385
    %v813 = vpop.f32.mrb[0].mxu0
    %v814 = vadd.f32 %v685, %v813
    %v815 = vpop.f32.mrb[0].mxu0
    %816 = vmatprep.mubr.f32.mxu0 0.0
    %817 = vmatmul.mubr.f32.gmra.mrb[0].mxu0 %v388
    %v818 = vpop.f32.mrb[0].mxu0
    %v819 = vadd.f32 %v687, %v818
    %v820 = vpop.f32.mrb[0].mxu0
    %821 = vmatprep.mubr.f32.mxu0 0.0
    %822 = vmatmul.mubr.f32.gmra.mrb[0].mxu0 %v391
    %v823 = vpop.f32.mrb[0].mxu0
    %v824 = vadd.f32 %v689, %v823
    %v825 = vpop.f32.mrb[0].mxu0
    %826 = vmatprep.mubr.f32.mxu0 0.0
    %827 = vmatmul.mubr.f32.gmra.mrb[0].mxu0 %v394
    %v828 = vpop.f32.mrb[0].mxu0
    %v829 = vadd.f32 %v691, %v828
    %v830 = vpop.f32.mrb[0].mxu0
    %831 = vmatprep.mubr.f32.mxu0 0.0
    %832 = vmatmul.mubr.f32.gmra.mrb[0].mxu0 %v397
    %v833 = vpop.f32.mrb[0].mxu0
    %v834 = vadd.f32 %v693, %v833
    %v835 = vpop.f32.mrb[0].mxu0
    %836 = vmatprep.mubr.f32.mxu0 0.0
    %837 = vmatmul.mubr.f32.gmra.mrb[0].mxu0 %v400
    %v838 = vpop.f32.mrb[0].mxu0
    %v839 = vadd.f32 %v695, %v838
    %v840 = vpop.f32.mrb[0].mxu0
    %841 = vmatprep.mubr.f32.mxu0 0.0
    %842 = vmatmul.mubr.f32.gmra.mrb[0].mxu0 %v403
    %v843 = vpop.f32.mrb[0].mxu0
    %v844 = vadd.f32 %v697, %v843
    %v845 = vpop.f32.mrb[0].mxu0
    %846 = vmatprep.mubr.f32.mxu0 0.0
    %847 = vmatmul.mubr.f32.gmra.mrb[0].mxu0 %v406
    %v848 = vpop.f32.mrb[0].mxu0
    %v849 = vadd.f32 %v699, %v848
    %v850 = vpop.f32.mrb[0].mxu0
    %851 = vmatprep.mubr.f32.mxu0 0.0
    %852 = vmatmul.mubr.f32.gmra.mrb[0].mxu0 %v409
    %v853 = vpop.f32.mrb[0].mxu0
    %v854 = vadd.f32 %v701, %v853
    %v855 = vpop.f32.mrb[0].mxu0
    %856 = vmatprep.mubr.f32.mxu0 0.0
    %857 = vmatmul.mubr.f32.gmra.mrb[0].mxu0 %v412
    %v858 = vpop.f32.mrb[0].mxu0
    %v859 = vadd.f32 %v703, %v858
    %v860 = vpop.f32.mrb[0].mxu0
    %861 = vmatprep.mubr.f32.mxu0 0.0
    %862 = vmatmul.mubr.f32.gmra.mrb[0].mxu0 %v415
    %v863 = vpop.f32.mrb[0].mxu0
    %v864 = vadd.f32 %v705, %v863
    %v865 = vpop.f32.mrb[0].mxu0
    %866 = vdwg.mxu0
    %v867 = vxor.u32 %v789, 2147483648
    %v868 = vxor.u32 %v794, 2147483648
    %v869 = vxor.u32 %v799, 2147483648
    %v870 = vxor.u32 %v804, 2147483648
    %v871 = vmul.f32 %v867, 1.442695
    %v872 = vpow.pop %v871
    %v873 = vmul.f32 %v868, 1.442695
    %v874 = vpow.pop %v873
    %v875 = vmul.f32 %v869, 1.442695
    %v876 = vpow.pop %v875
    %v877 = vmul.f32 %v870, 1.442695
    %v878 = vpow.pop %v877
    %v879 = vadd.f32 %v872, 1.0
    %v880 = vadd.f32 %v874, 1.0
    %v881 = vadd.f32 %v876, 1.0
    %v882 = vadd.f32 %v878, 1.0
    %v883 = vrcp.pop %v879
    %v884 = vmul.f32 1.0, %v883
    %v885 = vrcp.pop %v880
    %v886 = vmul.f32 1.0, %v885
    %v887 = vrcp.pop %v881
    %v888 = vmul.f32 1.0, %v887
    %v889 = vrcp.pop %v882
    %v890 = vmul.f32 1.0, %v889
    %v891 = vxor.u32 %v809, 2147483648
    %v892 = vxor.u32 %v814, 2147483648
    %v893 = vxor.u32 %v819, 2147483648
    %v894 = vxor.u32 %v824, 2147483648
    %v895 = vmul.f32 %v891, 1.442695
    %v896 = vpow.pop %v895
    %v897 = vmul.f32 %v892, 1.442695
    %v898 = vpow.pop %v897
    %v899 = vmul.f32 %v893, 1.442695
    %v900 = vpow.pop %v899
    %v901 = vmul.f32 %v894, 1.442695
    %v902 = vpow.pop %v901
    %v903 = vadd.f32 %v896, 1.0
    %v904 = vadd.f32 %v898, 1.0
    %v905 = vadd.f32 %v900, 1.0
    %v906 = vadd.f32 %v902, 1.0
    %v907 = vrcp.pop %v903
    %v908 = vmul.f32 1.0, %v907
    %v909 = vrcp.pop %v904
    %v910 = vmul.f32 1.0, %v909
    %v911 = vrcp.pop %v905
    %v912 = vmul.f32 1.0, %v911
    %v913 = vrcp.pop %v906
    %v914 = vmul.f32 1.0, %v913
    %v915 = vtanh.pop %v829
    %v916 = vtanh.pop %v834
    %v917 = vtanh.pop %v839
    %v918 = vtanh.pop %v844
    %v919 = vxor.u32 %v849, 2147483648
    %v920 = vxor.u32 %v854, 2147483648
    %v921 = vxor.u32 %v859, 2147483648
    %v922 = vxor.u32 %v864, 2147483648
    %v923 = vmul.f32 %v919, 1.442695
    %v924 = vpow.pop %v923
    %v925 = vmul.f32 %v920, 1.442695
    %v926 = vpow.pop %v925
    %v927 = vmul.f32 %v921, 1.442695
    %v928 = vpow.pop %v927
    %v929 = vmul.f32 %v922, 1.442695
    %v930 = vpow.pop %v929
    %v931 = vadd.f32 %v924, 1.0
    %v932 = vadd.f32 %v926, 1.0
    %v933 = vadd.f32 %v928, 1.0
    %v934 = vadd.f32 %v930, 1.0
    %v935 = vrcp.pop %v931
    %v936 = vmul.f32 1.0, %v935
    %v937 = vrcp.pop %v932
    %v938 = vmul.f32 1.0, %v937
    %v939 = vrcp.pop %v933
    %v940 = vmul.f32 1.0, %v939
    %v941 = vrcp.pop %v934
    %v942 = vmul.f32 1.0, %v941
    %v943 = vmul.f32 %v908, %v646
    %v944 = vmul.f32 %v910, %v647
    %v945 = vmul.f32 %v912, %v648
    %v946 = vmul.f32 %v914, %v649
    %v947 = vmul.f32 %v884, %v915
    %v948 = vmul.f32 %v886, %v916
    %v949 = vmul.f32 %v888, %v917
    %v950 = vmul.f32 %v890, %v918
    %v951 = vadd.f32 %v943, %v947
    %v952 = vadd.f32 %v944, %v948
    %v953 = vadd.f32 %v945, %v949
    %v954 = vadd.f32 %v946, %v950
    %v955 = vtanh.pop %v951
    %v956 = vtanh.pop %v952
    %v957 = vtanh.pop %v953
    %v958 = vtanh.pop %v954
    %v959 = vmul.f32 %v936, %v955
    %v960 = vmul.f32 %v938, %v956
    %v961 = vmul.f32 %v940, %v957
    %v962 = vmul.f32 %v942, %v958
    %963 = vrot.lane.b32.xlu0 %v274, 112
    %v964 = vpop.permute.xlu0 %963
    %965 = vrot.lane.b32.xlu0 %v279, 112
    %v966 = vpop.permute.xlu0 %965
    %967 = vrot.lane.b32.xlu0 %v284, 112
    %v968 = vpop.permute.xlu0 %967
    %969 = vrot.lane.b32.xlu0 %v289, 112
    %v970 = vpop.permute.xlu0 %969
    %971 = vrot.lane.b32.xlu0 %v294, 112
    %v972 = vpop.permute.xlu0 %971
    %973 = vrot.lane.b32.xlu0 %v299, 112
    %v974 = vpop.permute.xlu0 %973
    %975 = vrot.lane.b32.xlu0 %v304, 112
    %v976 = vpop.permute.xlu0 %975
    %977 = vrot.lane.b32.xlu0 %v309, 112
    %v978 = vpop.permute.xlu0 %977
    %979 = vrot.lane.b32.xlu0 %v314, 112
    %v980 = vpop.permute.xlu0 %979
    %981 = vrot.lane.b32.xlu0 %v319, 112
    %v982 = vpop.permute.xlu0 %981
    %983 = vrot.lane.b32.xlu0 %v324, 112
    %v984 = vpop.permute.xlu0 %983
    %985 = vrot.lane.b32.xlu0 %v329, 112
    %v986 = vpop.permute.xlu0 %985
    %987 = vrot.lane.b32.xlu0 %v334, 112
    %v988 = vpop.permute.xlu0 %987
    %989 = vrot.lane.b32.xlu0 %v339, 112
    %v990 = vpop.permute.xlu0 %989
    %991 = vrot.lane.b32.xlu0 %v344, 112
    %v992 = vpop.permute.xlu0 %991
    %993 = vrot.lane.b32.xlu0 %v349, 112
    %v994 = vpop.permute.xlu0 %993
    %1011 = vmatprep.subr.mxu0 0.0
    %1012 = vmatpush1.msra.mxu0 %v959
    %1013 = vmatprep.subr.mxu0 0.0
    %1014 = vmatpush1.msra.mxu0 %v960
    %1015 = vmatprep.subr.mxu0 0.0
    %1016 = vmatpush1.msra.mxu0 %v961
    %1017 = vmatprep.subr.mxu0 0.0
    %1018 = vmatpush1.msra.mxu0 %v962
    %1019 = vmatprep.subr.mxu0 0.0
    %1020 = vmatpush1.msra.mxu0 0.0
    %1021 = vmatprep.subr.mxu0 0.0
    %1022 = vmatpush1.msra.mxu0 0.0
    %1023 = vmatprep.subr.mxu0 0.0
    %1024 = vmatpush1.msra.mxu0 0.0
    %1025 = vmatprep.subr.mxu0 0.0
    %1026 = vmatpush1.msra.mxu0 0.0
    %1027 = vmatprep.subr.mxu0 0.0
    %1028 = vmatpush1.msra.mxu0 0.0
    %1029 = vmatprep.subr.mxu0 0.0
    %1030 = vmatpush1.msra.mxu0 0.0
    %1031 = vmatprep.subr.mxu0 0.0
    %1032 = vmatpush1.msra.mxu0 0.0
    %1033 = vmatprep.subr.mxu0 0.0
    %1034 = vmatpush1.msra.mxu0 0.0
    %1035 = vmatprep.subr.mxu0 0.0
    %1036 = vmatpush1.msra.mxu0 0.0
    %1037 = vmatprep.subr.mxu0 0.0
    %1038 = vmatpush1.msra.mxu0 0.0
    %1039 = vmatprep.subr.mxu0 0.0
    %1040 = vmatpush1.msra.mxu0 0.0
    %1041 = vmatprep.subr.mxu0 0.0
    %1042 = vmatpush1.msra.mxu0 0.0
    %1043 = vmatprep.subr.mxu0 0.0
    %1044 = vmatpush1.msra.mxu0 0.0
    %1045 = vmatprep.subr.mxu0 0.0
    %1046 = vmatpush1.msra.mxu0 0.0
    %1047 = vmatprep.subr.mxu0 0.0
    %1048 = vmatpush1.msra.mxu0 0.0
    %1049 = vmatprep.subr.mxu0 0.0
    %1050 = vmatpush1.msra.mxu0 0.0
    %1051 = vmatprep.subr.mxu0 0.0
    %1052 = vmatpush1.msra.mxu0 0.0
    %1053 = vmatprep.subr.mxu0 0.0
    %1054 = vmatpush1.msra.mxu0 0.0
    %1055 = vmatprep.subr.mxu0 0.0
    %1056 = vmatpush1.msra.mxu0 0.0
    %1057 = vmatprep.subr.mxu0 0.0
    %1058 = vmatpush1.msra.mxu0 0.0
    %1059 = vmatprep.subr.mxu0 0.0
    %1060 = vmatpush1.msra.mxu0 0.0
    %1061 = vmatprep.subr.mxu0 0.0
    %1062 = vmatpush1.msra.mxu0 0.0
    %1063 = vmatprep.subr.mxu0 0.0
    %1064 = vmatpush1.msra.mxu0 0.0
    %1065 = vmatprep.subr.mxu0 0.0
    %1066 = vmatpush1.msra.mxu0 0.0
    %1067 = vmatprep.subr.mxu0 0.0
    %1068 = vmatpush1.msra.mxu0 0.0
    %1069 = vmatprep.subr.mxu0 0.0
    %1070 = vmatpush1.msra.mxu0 0.0
    %1071 = vmatprep.subr.mxu0 0.0
    %1072 = vmatpush1.msra.mxu0 0.0
    %1073 = vmatprep.subr.mxu0 0.0
    %1074 = vmatpush1.msra.mxu0 0.0
    %1075 = vmatprep.mubr.f32.mxu0 0.0
    %1076 = vmatmul.mubr.f32.gmra.mrb[0].mxu0 %v370
    %v1077 = vpop.f32.mrb[0].mxu0
    %v1078 = vadd.f32 %v964, %v1077
    %v1079 = vpop.f32.mrb[0].mxu0
    %1080 = vmatprep.mubr.f32.mxu0 0.0
    %1081 = vmatmul.mubr.f32.gmra.mrb[0].mxu0 %v373
    %v1082 = vpop.f32.mrb[0].mxu0
    %v1083 = vadd.f32 %v966, %v1082
    %v1084 = vpop.f32.mrb[0].mxu0
    %1085 = vmatprep.mubr.f32.mxu0 0.0
    %1086 = vmatmul.mubr.f32.gmra.mrb[0].mxu0 %v376
    %v1087 = vpop.f32.mrb[0].mxu0
    %v1088 = vadd.f32 %v968, %v1087
    %v1089 = vpop.f32.mrb[0].mxu0
    %1090 = vmatprep.mubr.f32.mxu0 0.0
    %1091 = vmatmul.mubr.f32.gmra.mrb[0].mxu0 %v379
    %v1092 = vpop.f32.mrb[0].mxu0
    %v1093 = vadd.f32 %v970, %v1092
    %v1094 = vpop.f32.mrb[0].mxu0
    %1095 = vmatprep.mubr.f32.mxu0 0.0
    %1096 = vmatmul.mubr.f32.gmra.mrb[0].mxu0 %v382
    %v1097 = vpop.f32.mrb[0].mxu0
    %v1098 = vadd.f32 %v972, %v1097
    %v1099 = vpop.f32.mrb[0].mxu0
    %1100 = vmatprep.mubr.f32.mxu0 0.0
    %1101 = vmatmul.mubr.f32.gmra.mrb[0].mxu0 %v385
    %v1102 = vpop.f32.mrb[0].mxu0
    %v1103 = vadd.f32 %v974, %v1102
    %v1104 = vpop.f32.mrb[0].mxu0
    %1105 = vmatprep.mubr.f32.mxu0 0.0
    %1106 = vmatmul.mubr.f32.gmra.mrb[0].mxu0 %v388
    %v1107 = vpop.f32.mrb[0].mxu0
    %v1108 = vadd.f32 %v976, %v1107
    %v1109 = vpop.f32.mrb[0].mxu0
    %1110 = vmatprep.mubr.f32.mxu0 0.0
    %1111 = vmatmul.mubr.f32.gmra.mrb[0].mxu0 %v391
    %v1112 = vpop.f32.mrb[0].mxu0
    %v1113 = vadd.f32 %v978, %v1112
    %v1114 = vpop.f32.mrb[0].mxu0
    %1115 = vmatprep.mubr.f32.mxu0 0.0
    %1116 = vmatmul.mubr.f32.gmra.mrb[0].mxu0 %v394
    %v1117 = vpop.f32.mrb[0].mxu0
    %v1118 = vadd.f32 %v980, %v1117
    %v1119 = vpop.f32.mrb[0].mxu0
    %1120 = vmatprep.mubr.f32.mxu0 0.0
    %1121 = vmatmul.mubr.f32.gmra.mrb[0].mxu0 %v397
    %v1122 = vpop.f32.mrb[0].mxu0
    %v1123 = vadd.f32 %v982, %v1122
    %v1124 = vpop.f32.mrb[0].mxu0
    %1125 = vmatprep.mubr.f32.mxu0 0.0
    %1126 = vmatmul.mubr.f32.gmra.mrb[0].mxu0 %v400
    %v1127 = vpop.f32.mrb[0].mxu0
    %v1128 = vadd.f32 %v984, %v1127
    %v1129 = vpop.f32.mrb[0].mxu0
    %1130 = vmatprep.mubr.f32.mxu0 0.0
    %1131 = vmatmul.mubr.f32.gmra.mrb[0].mxu0 %v403
    %v1132 = vpop.f32.mrb[0].mxu0
    %v1133 = vadd.f32 %v986, %v1132
    %v1134 = vpop.f32.mrb[0].mxu0
    %1135 = vmatprep.mubr.f32.mxu0 0.0
    %1136 = vmatmul.mubr.f32.gmra.mrb[0].mxu0 %v406
    %v1137 = vpop.f32.mrb[0].mxu0
    %v1138 = vadd.f32 %v988, %v1137
    %v1139 = vpop.f32.mrb[0].mxu0
    %1140 = vmatprep.mubr.f32.mxu0 0.0
    %1141 = vmatmul.mubr.f32.gmra.mrb[0].mxu0 %v409
    %v1142 = vpop.f32.mrb[0].mxu0
    %v1143 = vadd.f32 %v990, %v1142
    %v1144 = vpop.f32.mrb[0].mxu0
    %1145 = vmatprep.mubr.f32.mxu0 0.0
    %1146 = vmatmul.mubr.f32.gmra.mrb[0].mxu0 %v412
    %v1147 = vpop.f32.mrb[0].mxu0
    %v1148 = vadd.f32 %v992, %v1147
    %v1149 = vpop.f32.mrb[0].mxu0
    %1150 = vmatprep.mubr.f32.mxu0 0.0
    %1151 = vmatmul.mubr.f32.gmra.mrb[0].mxu0 %v415
    %v1152 = vpop.f32.mrb[0].mxu0
    %v1153 = vadd.f32 %v994, %v1152
    %v1154 = vpop.f32.mrb[0].mxu0
    %1155 = vdwg.mxu0
    %v1156 = vxor.u32 %v1078, 2147483648
    %v1157 = vxor.u32 %v1083, 2147483648
    %v1158 = vxor.u32 %v1088, 2147483648
    %v1159 = vxor.u32 %v1093, 2147483648
    %v1160 = vmul.f32 %v1156, 1.442695
    %v1161 = vpow.pop %v1160
    %v1162 = vmul.f32 %v1157, 1.442695
    %v1163 = vpow.pop %v1162
    %v1164 = vmul.f32 %v1158, 1.442695
    %v1165 = vpow.pop %v1164
    %v1166 = vmul.f32 %v1159, 1.442695
    %v1167 = vpow.pop %v1166
    %v1168 = vadd.f32 %v1161, 1.0
    %v1169 = vadd.f32 %v1163, 1.0
    %v1170 = vadd.f32 %v1165, 1.0
    %v1171 = vadd.f32 %v1167, 1.0
    %v1172 = vrcp.pop %v1168
    %v1173 = vmul.f32 1.0, %v1172
    %v1174 = vrcp.pop %v1169
    %v1175 = vmul.f32 1.0, %v1174
    %v1176 = vrcp.pop %v1170
    %v1177 = vmul.f32 1.0, %v1176
    %v1178 = vrcp.pop %v1171
    %v1179 = vmul.f32 1.0, %v1178
    %v1180 = vxor.u32 %v1098, 2147483648
    %v1181 = vxor.u32 %v1103, 2147483648
    %v1182 = vxor.u32 %v1108, 2147483648
    %v1183 = vxor.u32 %v1113, 2147483648
    %v1184 = vmul.f32 %v1180, 1.442695
    %v1185 = vpow.pop %v1184
    %v1186 = vmul.f32 %v1181, 1.442695
    %v1187 = vpow.pop %v1186
    %v1188 = vmul.f32 %v1182, 1.442695
    %v1189 = vpow.pop %v1188
    %v1190 = vmul.f32 %v1183, 1.442695
    %v1191 = vpow.pop %v1190
    %v1192 = vadd.f32 %v1185, 1.0
    %v1193 = vadd.f32 %v1187, 1.0
    %v1194 = vadd.f32 %v1189, 1.0
    %v1195 = vadd.f32 %v1191, 1.0
    %v1196 = vrcp.pop %v1192
    %v1197 = vmul.f32 1.0, %v1196
    %v1198 = vrcp.pop %v1193
    %v1199 = vmul.f32 1.0, %v1198
    %v1200 = vrcp.pop %v1194
    %v1201 = vmul.f32 1.0, %v1200
    %v1202 = vrcp.pop %v1195
    %v1203 = vmul.f32 1.0, %v1202
    %v1204 = vtanh.pop %v1118
    %v1205 = vtanh.pop %v1123
    %v1206 = vtanh.pop %v1128
    %v1207 = vtanh.pop %v1133
    %v1208 = vxor.u32 %v1138, 2147483648
    %v1209 = vxor.u32 %v1143, 2147483648
    %v1210 = vxor.u32 %v1148, 2147483648
    %v1211 = vxor.u32 %v1153, 2147483648
    %v1212 = vmul.f32 %v1208, 1.442695
    %v1213 = vpow.pop %v1212
    %v1214 = vmul.f32 %v1209, 1.442695
    %v1215 = vpow.pop %v1214
    %v1216 = vmul.f32 %v1210, 1.442695
    %v1217 = vpow.pop %v1216
    %v1218 = vmul.f32 %v1211, 1.442695
    %v1219 = vpow.pop %v1218
    %v1220 = vadd.f32 %v1213, 1.0
    %v1221 = vadd.f32 %v1215, 1.0
    %v1222 = vadd.f32 %v1217, 1.0
    %v1223 = vadd.f32 %v1219, 1.0
    %v1224 = vrcp.pop %v1220
    %v1225 = vmul.f32 1.0, %v1224
    %v1226 = vrcp.pop %v1221
    %v1227 = vmul.f32 1.0, %v1226
    %v1228 = vrcp.pop %v1222
    %v1229 = vmul.f32 1.0, %v1228
    %v1230 = vrcp.pop %v1223
    %v1231 = vmul.f32 1.0, %v1230
    %v1232 = vmul.f32 %v1197, %v951
    %v1233 = vmul.f32 %v1199, %v952
    %v1234 = vmul.f32 %v1201, %v953
    %v1235 = vmul.f32 %v1203, %v954
    %v1236 = vmul.f32 %v1173, %v1204
    %v1237 = vmul.f32 %v1175, %v1205
    %v1238 = vmul.f32 %v1177, %v1206
    %v1239 = vmul.f32 %v1179, %v1207
    %v1240 = vadd.f32 %v1232, %v1236
    %v1241 = vadd.f32 %v1233, %v1237
    %v1242 = vadd.f32 %v1234, %v1238
    %v1243 = vadd.f32 %v1235, %v1239
    %v1244 = vtanh.pop %v1240
    %v1245 = vtanh.pop %v1241
    %v1246 = vtanh.pop %v1242
    %v1247 = vtanh.pop %v1243
    %v1248 = vmul.f32 %v1225, %v1244
    %v1249 = vmul.f32 %v1227, %v1245
    %v1250 = vmul.f32 %v1229, %v1246
    %v1251 = vmul.f32 %v1231, %v1247
    %1252 = vrot.lane.b32.xlu0 %v274, 104
    %v1253 = vpop.permute.xlu0 %1252
    %1254 = vrot.lane.b32.xlu0 %v279, 104
    %v1255 = vpop.permute.xlu0 %1254
    %1256 = vrot.lane.b32.xlu0 %v284, 104
    %v1257 = vpop.permute.xlu0 %1256
    %1258 = vrot.lane.b32.xlu0 %v289, 104
    %v1259 = vpop.permute.xlu0 %1258
    %1260 = vrot.lane.b32.xlu0 %v294, 104
    %v1261 = vpop.permute.xlu0 %1260
    %1262 = vrot.lane.b32.xlu0 %v299, 104
    %v1263 = vpop.permute.xlu0 %1262
    %1264 = vrot.lane.b32.xlu0 %v304, 104
    %v1265 = vpop.permute.xlu0 %1264
    %1266 = vrot.lane.b32.xlu0 %v309, 104
    %v1267 = vpop.permute.xlu0 %1266
    %1268 = vrot.lane.b32.xlu0 %v314, 104
    %v1269 = vpop.permute.xlu0 %1268
    %1270 = vrot.lane.b32.xlu0 %v319, 104
    %v1271 = vpop.permute.xlu0 %1270
    %1272 = vrot.lane.b32.xlu0 %v324, 104
    %v1273 = vpop.permute.xlu0 %1272
    %1274 = vrot.lane.b32.xlu0 %v329, 104
    %v1275 = vpop.permute.xlu0 %1274
    %1276 = vrot.lane.b32.xlu0 %v334, 104
    %v1277 = vpop.permute.xlu0 %1276
    %1278 = vrot.lane.b32.xlu0 %v339, 104
    %v1279 = vpop.permute.xlu0 %1278
    %1280 = vrot.lane.b32.xlu0 %v344, 104
    %v1281 = vpop.permute.xlu0 %1280
    %1282 = vrot.lane.b32.xlu0 %v349, 104
    %v1283 = vpop.permute.xlu0 %1282
    %1300 = vmatprep.subr.mxu0 0.0
    %1301 = vmatpush1.msra.mxu0 %v1248
    %1302 = vmatprep.subr.mxu0 0.0
    %1303 = vmatpush1.msra.mxu0 %v1249
    %1304 = vmatprep.subr.mxu0 0.0
    %1305 = vmatpush1.msra.mxu0 %v1250
    %1306 = vmatprep.subr.mxu0 0.0
    %1307 = vmatpush1.msra.mxu0 %v1251
    %1308 = vmatprep.subr.mxu0 0.0
    %1309 = vmatpush1.msra.mxu0 0.0
    %1310 = vmatprep.subr.mxu0 0.0
    %1311 = vmatpush1.msra.mxu0 0.0
    %1312 = vmatprep.subr.mxu0 0.0
    %1313 = vmatpush1.msra.mxu0 0.0
    %1314 = vmatprep.subr.mxu0 0.0
    %1315 = vmatpush1.msra.mxu0 0.0
    %1316 = vmatprep.subr.mxu0 0.0
    %1317 = vmatpush1.msra.mxu0 0.0
    %1318 = vmatprep.subr.mxu0 0.0
    %1319 = vmatpush1.msra.mxu0 0.0
    %1320 = vmatprep.subr.mxu0 0.0
    %1321 = vmatpush1.msra.mxu0 0.0
    %1322 = vmatprep.subr.mxu0 0.0
    %1323 = vmatpush1.msra.mxu0 0.0
    %1324 = vmatprep.subr.mxu0 0.0
    %1325 = vmatpush1.msra.mxu0 0.0
    %1326 = vmatprep.subr.mxu0 0.0
    %1327 = vmatpush1.msra.mxu0 0.0
    %1328 = vmatprep.subr.mxu0 0.0
    %1329 = vmatpush1.msra.mxu0 0.0
    %1330 = vmatprep.subr.mxu0 0.0
    %1331 = vmatpush1.msra.mxu0 0.0
    %1332 = vmatprep.subr.mxu0 0.0
    %1333 = vmatpush1.msra.mxu0 0.0
    %1334 = vmatprep.subr.mxu0 0.0
    %1335 = vmatpush1.msra.mxu0 0.0
    %1336 = vmatprep.subr.mxu0 0.0
    %1337 = vmatpush1.msra.mxu0 0.0
    %1338 = vmatprep.subr.mxu0 0.0
    %1339 = vmatpush1.msra.mxu0 0.0
    %1340 = vmatprep.subr.mxu0 0.0
    %1341 = vmatpush1.msra.mxu0 0.0
    %1342 = vmatprep.subr.mxu0 0.0
    %1343 = vmatpush1.msra.mxu0 0.0
    %1344 = vmatprep.subr.mxu0 0.0
    %1345 = vmatpush1.msra.mxu0 0.0
    %1346 = vmatprep.subr.mxu0 0.0
    %1347 = vmatpush1.msra.mxu0 0.0
    %1348 = vmatprep.subr.mxu0 0.0
    %1349 = vmatpush1.msra.mxu0 0.0
    %1350 = vmatprep.subr.mxu0 0.0
    %1351 = vmatpush1.msra.mxu0 0.0
    %1352 = vmatprep.subr.mxu0 0.0
    %1353 = vmatpush1.msra.mxu0 0.0
    %1354 = vmatprep.subr.mxu0 0.0
    %1355 = vmatpush1.msra.mxu0 0.0
    %1356 = vmatprep.subr.mxu0 0.0
    %1357 = vmatpush1.msra.mxu0 0.0
    %1358 = vmatprep.subr.mxu0 0.0
    %1359 = vmatpush1.msra.mxu0 0.0
    %1360 = vmatprep.subr.mxu0 0.0
    %1361 = vmatpush1.msra.mxu0 0.0
    %1362 = vmatprep.subr.mxu0 0.0
    %1363 = vmatpush1.msra.mxu0 0.0
    %1364 = vmatprep.mubr.f32.mxu0 0.0
    %1365 = vmatmul.mubr.f32.gmra.mrb[0].mxu0 %v370
    %v1366 = vpop.f32.mrb[0].mxu0
    %v1367 = vadd.f32 %v1253, %v1366
    %v1368 = vpop.f32.mrb[0].mxu0
    %1369 = vmatprep.mubr.f32.mxu0 0.0
    %1370 = vmatmul.mubr.f32.gmra.mrb[0].mxu0 %v373
    %v1371 = vpop.f32.mrb[0].mxu0
    %v1372 = vadd.f32 %v1255, %v1371
    %v1373 = vpop.f32.mrb[0].mxu0
    %1374 = vmatprep.mubr.f32.mxu0 0.0
    %1375 = vmatmul.mubr.f32.gmra.mrb[0].mxu0 %v376
    %v1376 = vpop.f32.mrb[0].mxu0
    %v1377 = vadd.f32 %v1257, %v1376
    %v1378 = vpop.f32.mrb[0].mxu0
    %1379 = vmatprep.mubr.f32.mxu0 0.0
    %1380 = vmatmul.mubr.f32.gmra.mrb[0].mxu0 %v379
    %v1381 = vpop.f32.mrb[0].mxu0
    %v1382 = vadd.f32 %v1259, %v1381
    %v1383 = vpop.f32.mrb[0].mxu0
    %1384 = vmatprep.mubr.f32.mxu0 0.0
    %1385 = vmatmul.mubr.f32.gmra.mrb[0].mxu0 %v382
    %v1386 = vpop.f32.mrb[0].mxu0
    %v1387 = vadd.f32 %v1261, %v1386
    %v1388 = vpop.f32.mrb[0].mxu0
    %1389 = vmatprep.mubr.f32.mxu0 0.0
    %1390 = vmatmul.mubr.f32.gmra.mrb[0].mxu0 %v385
    %v1391 = vpop.f32.mrb[0].mxu0
    %v1392 = vadd.f32 %v1263, %v1391
    %v1393 = vpop.f32.mrb[0].mxu0
    %1394 = vmatprep.mubr.f32.mxu0 0.0
    %1395 = vmatmul.mubr.f32.gmra.mrb[0].mxu0 %v388
    %v1396 = vpop.f32.mrb[0].mxu0
    %v1397 = vadd.f32 %v1265, %v1396
    %v1398 = vpop.f32.mrb[0].mxu0
    %1399 = vmatprep.mubr.f32.mxu0 0.0
    %1400 = vmatmul.mubr.f32.gmra.mrb[0].mxu0 %v391
    %v1401 = vpop.f32.mrb[0].mxu0
    %v1402 = vadd.f32 %v1267, %v1401
    %v1403 = vpop.f32.mrb[0].mxu0
    %1404 = vmatprep.mubr.f32.mxu0 0.0
    %1405 = vmatmul.mubr.f32.gmra.mrb[0].mxu0 %v394
    %v1406 = vpop.f32.mrb[0].mxu0
    %v1407 = vadd.f32 %v1269, %v1406
    %v1408 = vpop.f32.mrb[0].mxu0
    %1409 = vmatprep.mubr.f32.mxu0 0.0
    %1410 = vmatmul.mubr.f32.gmra.mrb[0].mxu0 %v397
    %v1411 = vpop.f32.mrb[0].mxu0
    %v1412 = vadd.f32 %v1271, %v1411
    %v1413 = vpop.f32.mrb[0].mxu0
    %1414 = vmatprep.mubr.f32.mxu0 0.0
    %1415 = vmatmul.mubr.f32.gmra.mrb[0].mxu0 %v400
    %v1416 = vpop.f32.mrb[0].mxu0
    %v1417 = vadd.f32 %v1273, %v1416
    %v1418 = vpop.f32.mrb[0].mxu0
    %1419 = vmatprep.mubr.f32.mxu0 0.0
    %1420 = vmatmul.mubr.f32.gmra.mrb[0].mxu0 %v403
    %v1421 = vpop.f32.mrb[0].mxu0
    %v1422 = vadd.f32 %v1275, %v1421
    %v1423 = vpop.f32.mrb[0].mxu0
    %1424 = vmatprep.mubr.f32.mxu0 0.0
    %1425 = vmatmul.mubr.f32.gmra.mrb[0].mxu0 %v406
    %v1426 = vpop.f32.mrb[0].mxu0
    %v1427 = vadd.f32 %v1277, %v1426
    %v1428 = vpop.f32.mrb[0].mxu0
    %1429 = vmatprep.mubr.f32.mxu0 0.0
    %1430 = vmatmul.mubr.f32.gmra.mrb[0].mxu0 %v409
    %v1431 = vpop.f32.mrb[0].mxu0
    %v1432 = vadd.f32 %v1279, %v1431
    %v1433 = vpop.f32.mrb[0].mxu0
    %1434 = vmatprep.mubr.f32.mxu0 0.0
    %1435 = vmatmul.mubr.f32.gmra.mrb[0].mxu0 %v412
    %v1436 = vpop.f32.mrb[0].mxu0
    %v1437 = vadd.f32 %v1281, %v1436
    %v1438 = vpop.f32.mrb[0].mxu0
    %1439 = vmatprep.mubr.f32.mxu0 0.0
    %1440 = vmatmul.mubr.f32.gmra.mrb[0].mxu0 %v415
    %v1441 = vpop.f32.mrb[0].mxu0
    %v1442 = vadd.f32 %v1283, %v1441
    %v1443 = vpop.f32.mrb[0].mxu0
    %1444 = vdwg.mxu0
    %v1445 = vxor.u32 %v1367, 2147483648
    %v1446 = vxor.u32 %v1372, 2147483648
    %v1447 = vxor.u32 %v1377, 2147483648
    %v1448 = vxor.u32 %v1382, 2147483648
    %v1449 = vmul.f32 %v1445, 1.442695
    %v1450 = vpow.pop %v1449
    %v1451 = vmul.f32 %v1446, 1.442695
    %v1452 = vpow.pop %v1451
    %v1453 = vmul.f32 %v1447, 1.442695
    %v1454 = vpow.pop %v1453
    %v1455 = vmul.f32 %v1448, 1.442695
    %v1456 = vpow.pop %v1455
    %v1457 = vadd.f32 %v1450, 1.0
    %v1458 = vadd.f32 %v1452, 1.0
    %v1459 = vadd.f32 %v1454, 1.0
    %v1460 = vadd.f32 %v1456, 1.0
    %v1461 = vrcp.pop %v1457
    %v1462 = vmul.f32 1.0, %v1461
    %v1463 = vrcp.pop %v1458
    %v1464 = vmul.f32 1.0, %v1463
    %v1465 = vrcp.pop %v1459
    %v1466 = vmul.f32 1.0, %v1465
    %v1467 = vrcp.pop %v1460
    %v1468 = vmul.f32 1.0, %v1467
    %v1469 = vxor.u32 %v1387, 2147483648
    %v1470 = vxor.u32 %v1392, 2147483648
    %v1471 = vxor.u32 %v1397, 2147483648
    %v1472 = vxor.u32 %v1402, 2147483648
    %v1473 = vmul.f32 %v1469, 1.442695
    %v1474 = vpow.pop %v1473
    %v1475 = vmul.f32 %v1470, 1.442695
    %v1476 = vpow.pop %v1475
    %v1477 = vmul.f32 %v1471, 1.442695
    %v1478 = vpow.pop %v1477
    %v1479 = vmul.f32 %v1472, 1.442695
    %v1480 = vpow.pop %v1479
    %v1481 = vadd.f32 %v1474, 1.0
    %v1482 = vadd.f32 %v1476, 1.0
    %v1483 = vadd.f32 %v1478, 1.0
    %v1484 = vadd.f32 %v1480, 1.0
    %v1485 = vrcp.pop %v1481
    %v1486 = vmul.f32 1.0, %v1485
    %v1487 = vrcp.pop %v1482
    %v1488 = vmul.f32 1.0, %v1487
    %v1489 = vrcp.pop %v1483
    %v1490 = vmul.f32 1.0, %v1489
    %v1491 = vrcp.pop %v1484
    %v1492 = vmul.f32 1.0, %v1491
    %v1493 = vtanh.pop %v1407
    %v1494 = vtanh.pop %v1412
    %v1495 = vtanh.pop %v1417
    %v1496 = vtanh.pop %v1422
    %v1497 = vxor.u32 %v1427, 2147483648
    %v1498 = vxor.u32 %v1432, 2147483648
    %v1499 = vxor.u32 %v1437, 2147483648
    %v1500 = vxor.u32 %v1442, 2147483648
    %v1501 = vmul.f32 %v1497, 1.442695
    %v1502 = vpow.pop %v1501
    %v1503 = vmul.f32 %v1498, 1.442695
    %v1504 = vpow.pop %v1503
    %v1505 = vmul.f32 %v1499, 1.442695
    %v1506 = vpow.pop %v1505
    %v1507 = vmul.f32 %v1500, 1.442695
    %v1508 = vpow.pop %v1507
    %v1509 = vadd.f32 %v1502, 1.0
    %v1510 = vadd.f32 %v1504, 1.0
    %v1511 = vadd.f32 %v1506, 1.0
    %v1512 = vadd.f32 %v1508, 1.0
    %v1513 = vrcp.pop %v1509
    %v1514 = vmul.f32 1.0, %v1513
    %v1515 = vrcp.pop %v1510
    %v1516 = vmul.f32 1.0, %v1515
    %v1517 = vrcp.pop %v1511
    %v1518 = vmul.f32 1.0, %v1517
    %v1519 = vrcp.pop %v1512
    %v1520 = vmul.f32 1.0, %v1519
    %v1521 = vmul.f32 %v1486, %v1240
    %v1522 = vmul.f32 %v1488, %v1241
    %v1523 = vmul.f32 %v1490, %v1242
    %v1524 = vmul.f32 %v1492, %v1243
    %v1525 = vmul.f32 %v1462, %v1493
    %v1526 = vmul.f32 %v1464, %v1494
    %v1527 = vmul.f32 %v1466, %v1495
    %v1528 = vmul.f32 %v1468, %v1496
    %v1529 = vadd.f32 %v1521, %v1525
    %v1530 = vadd.f32 %v1522, %v1526
    %v1531 = vadd.f32 %v1523, %v1527
    %v1532 = vadd.f32 %v1524, %v1528
    %v1533 = vtanh.pop %v1529
    %v1534 = vtanh.pop %v1530
    %v1535 = vtanh.pop %v1531
    %v1536 = vtanh.pop %v1532
    %v1537 = vmul.f32 %v1514, %v1533
    %v1538 = vmul.f32 %v1516, %v1534
    %v1539 = vmul.f32 %v1518, %v1535
    %v1540 = vmul.f32 %v1520, %v1536
    %1541 = vrot.lane.b32.xlu0 %v274, 96
    %v1542 = vpop.permute.xlu0 %1541
    %1543 = vrot.lane.b32.xlu0 %v279, 96
    %v1544 = vpop.permute.xlu0 %1543
    %1545 = vrot.lane.b32.xlu0 %v284, 96
    %v1546 = vpop.permute.xlu0 %1545
    %1547 = vrot.lane.b32.xlu0 %v289, 96
    %v1548 = vpop.permute.xlu0 %1547
    %1549 = vrot.lane.b32.xlu0 %v294, 96
    %v1550 = vpop.permute.xlu0 %1549
    %1551 = vrot.lane.b32.xlu0 %v299, 96
    %v1552 = vpop.permute.xlu0 %1551
    %1553 = vrot.lane.b32.xlu0 %v304, 96
    %v1554 = vpop.permute.xlu0 %1553
    %1555 = vrot.lane.b32.xlu0 %v309, 96
    %v1556 = vpop.permute.xlu0 %1555
    %1557 = vrot.lane.b32.xlu0 %v314, 96
    %v1558 = vpop.permute.xlu0 %1557
    %1559 = vrot.lane.b32.xlu0 %v319, 96
    %v1560 = vpop.permute.xlu0 %1559
    %1561 = vrot.lane.b32.xlu0 %v324, 96
    %v1562 = vpop.permute.xlu0 %1561
    %1563 = vrot.lane.b32.xlu0 %v329, 96
    %v1564 = vpop.permute.xlu0 %1563
    %1565 = vrot.lane.b32.xlu0 %v334, 96
    %v1566 = vpop.permute.xlu0 %1565
    %1567 = vrot.lane.b32.xlu0 %v339, 96
    %v1568 = vpop.permute.xlu0 %1567
    %1569 = vrot.lane.b32.xlu0 %v344, 96
    %v1570 = vpop.permute.xlu0 %1569
    %1571 = vrot.lane.b32.xlu0 %v349, 96
    %v1572 = vpop.permute.xlu0 %1571
    %1589 = vmatprep.subr.mxu0 0.0
    %1590 = vmatpush1.msra.mxu0 %v1537
    %1591 = vmatprep.subr.mxu0 0.0
    %1592 = vmatpush1.msra.mxu0 %v1538
    %1593 = vmatprep.subr.mxu0 0.0
    %1594 = vmatpush1.msra.mxu0 %v1539
    %1595 = vmatprep.subr.mxu0 0.0
    %1596 = vmatpush1.msra.mxu0 %v1540
    %1597 = vmatprep.subr.mxu0 0.0
    %1598 = vmatpush1.msra.mxu0 0.0
    %1599 = vmatprep.subr.mxu0 0.0
    %1600 = vmatpush1.msra.mxu0 0.0
    %1601 = vmatprep.subr.mxu0 0.0
    %1602 = vmatpush1.msra.mxu0 0.0
    %1603 = vmatprep.subr.mxu0 0.0
    %1604 = vmatpush1.msra.mxu0 0.0
    %1605 = vmatprep.subr.mxu0 0.0
    %1606 = vmatpush1.msra.mxu0 0.0
    %1607 = vmatprep.subr.mxu0 0.0
    %1608 = vmatpush1.msra.mxu0 0.0
    %1609 = vmatprep.subr.mxu0 0.0
    %1610 = vmatpush1.msra.mxu0 0.0
    %1611 = vmatprep.subr.mxu0 0.0
    %1612 = vmatpush1.msra.mxu0 0.0
    %1613 = vmatprep.subr.mxu0 0.0
    %1614 = vmatpush1.msra.mxu0 0.0
    %1615 = vmatprep.subr.mxu0 0.0
    %1616 = vmatpush1.msra.mxu0 0.0
    %1617 = vmatprep.subr.mxu0 0.0
    %1618 = vmatpush1.msra.mxu0 0.0
    %1619 = vmatprep.subr.mxu0 0.0
    %1620 = vmatpush1.msra.mxu0 0.0
    %1621 = vmatprep.subr.mxu0 0.0
    %1622 = vmatpush1.msra.mxu0 0.0
    %1623 = vmatprep.subr.mxu0 0.0
    %1624 = vmatpush1.msra.mxu0 0.0
    %1625 = vmatprep.subr.mxu0 0.0
    %1626 = vmatpush1.msra.mxu0 0.0
    %1627 = vmatprep.subr.mxu0 0.0
    %1628 = vmatpush1.msra.mxu0 0.0
    %1629 = vmatprep.subr.mxu0 0.0
    %1630 = vmatpush1.msra.mxu0 0.0
    %1631 = vmatprep.subr.mxu0 0.0
    %1632 = vmatpush1.msra.mxu0 0.0
    %1633 = vmatprep.subr.mxu0 0.0
    %1634 = vmatpush1.msra.mxu0 0.0
    %1635 = vmatprep.subr.mxu0 0.0
    %1636 = vmatpush1.msra.mxu0 0.0
    %1637 = vmatprep.subr.mxu0 0.0
    %1638 = vmatpush1.msra.mxu0 0.0
    %1639 = vmatprep.subr.mxu0 0.0
    %1640 = vmatpush1.msra.mxu0 0.0
    %1641 = vmatprep.subr.mxu0 0.0
    %1642 = vmatpush1.msra.mxu0 0.0
    %1643 = vmatprep.subr.mxu0 0.0
    %1644 = vmatpush1.msra.mxu0 0.0
    %1645 = vmatprep.subr.mxu0 0.0
    %1646 = vmatpush1.msra.mxu0 0.0
    %1647 = vmatprep.subr.mxu0 0.0
    %1648 = vmatpush1.msra.mxu0 0.0
    %1649 = vmatprep.subr.mxu0 0.0
    %1650 = vmatpush1.msra.mxu0 0.0
    %1651 = vmatprep.subr.mxu0 0.0
    %1652 = vmatpush1.msra.mxu0 0.0
    %1653 = vmatprep.mubr.f32.mxu0 0.0
    %1654 = vmatmul.mubr.f32.gmra.mrb[0].mxu0 %v370
    %v1655 = vpop.f32.mrb[0].mxu0
    %v1656 = vadd.f32 %v1542, %v1655
    %v1657 = vpop.f32.mrb[0].mxu0
    %1658 = vmatprep.mubr.f32.mxu0 0.0
    %1659 = vmatmul.mubr.f32.gmra.mrb[0].mxu0 %v373
    %v1660 = vpop.f32.mrb[0].mxu0
    %v1661 = vadd.f32 %v1544, %v1660
    %v1662 = vpop.f32.mrb[0].mxu0
    %1663 = vmatprep.mubr.f32.mxu0 0.0
    %1664 = vmatmul.mubr.f32.gmra.mrb[0].mxu0 %v376
    %v1665 = vpop.f32.mrb[0].mxu0
    %v1666 = vadd.f32 %v1546, %v1665
    %v1667 = vpop.f32.mrb[0].mxu0
    %1668 = vmatprep.mubr.f32.mxu0 0.0
    %1669 = vmatmul.mubr.f32.gmra.mrb[0].mxu0 %v379
    %v1670 = vpop.f32.mrb[0].mxu0
    %v1671 = vadd.f32 %v1548, %v1670
    %v1672 = vpop.f32.mrb[0].mxu0
    %1673 = vmatprep.mubr.f32.mxu0 0.0
    %1674 = vmatmul.mubr.f32.gmra.mrb[0].mxu0 %v382
    %v1675 = vpop.f32.mrb[0].mxu0
    %v1676 = vadd.f32 %v1550, %v1675
    %v1677 = vpop.f32.mrb[0].mxu0
    %1678 = vmatprep.mubr.f32.mxu0 0.0
    %1679 = vmatmul.mubr.f32.gmra.mrb[0].mxu0 %v385
    %v1680 = vpop.f32.mrb[0].mxu0
    %v1681 = vadd.f32 %v1552, %v1680
    %v1682 = vpop.f32.mrb[0].mxu0
    %1683 = vmatprep.mubr.f32.mxu0 0.0
    %1684 = vmatmul.mubr.f32.gmra.mrb[0].mxu0 %v388
    %v1685 = vpop.f32.mrb[0].mxu0
    %v1686 = vadd.f32 %v1554, %v1685
    %v1687 = vpop.f32.mrb[0].mxu0
    %1688 = vmatprep.mubr.f32.mxu0 0.0
    %1689 = vmatmul.mubr.f32.gmra.mrb[0].mxu0 %v391
    %v1690 = vpop.f32.mrb[0].mxu0
    %v1691 = vadd.f32 %v1556, %v1690
    %v1692 = vpop.f32.mrb[0].mxu0
    %1693 = vmatprep.mubr.f32.mxu0 0.0
    %1694 = vmatmul.mubr.f32.gmra.mrb[0].mxu0 %v394
    %v1695 = vpop.f32.mrb[0].mxu0
    %v1696 = vadd.f32 %v1558, %v1695
    %v1697 = vpop.f32.mrb[0].mxu0
    %1698 = vmatprep.mubr.f32.mxu0 0.0
    %1699 = vmatmul.mubr.f32.gmra.mrb[0].mxu0 %v397
    %v1700 = vpop.f32.mrb[0].mxu0
    %v1701 = vadd.f32 %v1560, %v1700
    %v1702 = vpop.f32.mrb[0].mxu0
    %1703 = vmatprep.mubr.f32.mxu0 0.0
    %1704 = vmatmul.mubr.f32.gmra.mrb[0].mxu0 %v400
    %v1705 = vpop.f32.mrb[0].mxu0
    %v1706 = vadd.f32 %v1562, %v1705
    %v1707 = vpop.f32.mrb[0].mxu0
    %1708 = vmatprep.mubr.f32.mxu0 0.0
    %1709 = vmatmul.mubr.f32.gmra.mrb[0].mxu0 %v403
    %v1710 = vpop.f32.mrb[0].mxu0
    %v1711 = vadd.f32 %v1564, %v1710
    %v1712 = vpop.f32.mrb[0].mxu0
    %1713 = vmatprep.mubr.f32.mxu0 0.0
    %1714 = vmatmul.mubr.f32.gmra.mrb[0].mxu0 %v406
    %v1715 = vpop.f32.mrb[0].mxu0
    %v1716 = vadd.f32 %v1566, %v1715
    %v1717 = vpop.f32.mrb[0].mxu0
    %1718 = vmatprep.mubr.f32.mxu0 0.0
    %1719 = vmatmul.mubr.f32.gmra.mrb[0].mxu0 %v409
    %v1720 = vpop.f32.mrb[0].mxu0
    %v1721 = vadd.f32 %v1568, %v1720
    %v1722 = vpop.f32.mrb[0].mxu0
    %1723 = vmatprep.mubr.f32.mxu0 0.0
    %1724 = vmatmul.mubr.f32.gmra.mrb[0].mxu0 %v412
    %v1725 = vpop.f32.mrb[0].mxu0
    %v1726 = vadd.f32 %v1570, %v1725
    %v1727 = vpop.f32.mrb[0].mxu0
    %1728 = vmatprep.mubr.f32.mxu0 0.0
    %1729 = vmatmul.mubr.f32.gmra.mrb[0].mxu0 %v415
    %v1730 = vpop.f32.mrb[0].mxu0
    %v1731 = vadd.f32 %v1572, %v1730
    %v1732 = vpop.f32.mrb[0].mxu0
    %1733 = vdwg.mxu0
    %v1734 = vxor.u32 %v1656, 2147483648
    %v1735 = vxor.u32 %v1661, 2147483648
    %v1736 = vxor.u32 %v1666, 2147483648
    %v1737 = vxor.u32 %v1671, 2147483648
    %v1738 = vmul.f32 %v1734, 1.442695
    %v1739 = vpow.pop %v1738
    %v1740 = vmul.f32 %v1735, 1.442695
    %v1741 = vpow.pop %v1740
    %v1742 = vmul.f32 %v1736, 1.442695
    %v1743 = vpow.pop %v1742
    %v1744 = vmul.f32 %v1737, 1.442695
    %v1745 = vpow.pop %v1744
    %v1746 = vadd.f32 %v1739, 1.0
    %v1747 = vadd.f32 %v1741, 1.0
    %v1748 = vadd.f32 %v1743, 1.0
    %v1749 = vadd.f32 %v1745, 1.0
    %v1750 = vrcp.pop %v1746
    %v1751 = vmul.f32 1.0, %v1750
    %v1752 = vrcp.pop %v1747
    %v1753 = vmul.f32 1.0, %v1752
    %v1754 = vrcp.pop %v1748
    %v1755 = vmul.f32 1.0, %v1754
    %v1756 = vrcp.pop %v1749
    %v1757 = vmul.f32 1.0, %v1756
    %v1758 = vxor.u32 %v1676, 2147483648
    %v1759 = vxor.u32 %v1681, 2147483648
    %v1760 = vxor.u32 %v1686, 2147483648
    %v1761 = vxor.u32 %v1691, 2147483648
    %v1762 = vmul.f32 %v1758, 1.442695
    %v1763 = vpow.pop %v1762
    %v1764 = vmul.f32 %v1759, 1.442695
    %v1765 = vpow.pop %v1764
    %v1766 = vmul.f32 %v1760, 1.442695
    %v1767 = vpow.pop %v1766
    %v1768 = vmul.f32 %v1761, 1.442695
    %v1769 = vpow.pop %v1768
    %v1770 = vadd.f32 %v1763, 1.0
    %v1771 = vadd.f32 %v1765, 1.0
    %v1772 = vadd.f32 %v1767, 1.0
    %v1773 = vadd.f32 %v1769, 1.0
    %v1774 = vrcp.pop %v1770
    %v1775 = vmul.f32 1.0, %v1774
    %v1776 = vrcp.pop %v1771
    %v1777 = vmul.f32 1.0, %v1776
    %v1778 = vrcp.pop %v1772
    %v1779 = vmul.f32 1.0, %v1778
    %v1780 = vrcp.pop %v1773
    %v1781 = vmul.f32 1.0, %v1780
    %v1782 = vtanh.pop %v1696
    %v1783 = vtanh.pop %v1701
    %v1784 = vtanh.pop %v1706
    %v1785 = vtanh.pop %v1711
    %v1786 = vxor.u32 %v1716, 2147483648
    %v1787 = vxor.u32 %v1721, 2147483648
    %v1788 = vxor.u32 %v1726, 2147483648
    %v1789 = vxor.u32 %v1731, 2147483648
    %v1790 = vmul.f32 %v1786, 1.442695
    %v1791 = vpow.pop %v1790
    %v1792 = vmul.f32 %v1787, 1.442695
    %v1793 = vpow.pop %v1792
    %v1794 = vmul.f32 %v1788, 1.442695
    %v1795 = vpow.pop %v1794
    %v1796 = vmul.f32 %v1789, 1.442695
    %v1797 = vpow.pop %v1796
    %v1798 = vadd.f32 %v1791, 1.0
    %v1799 = vadd.f32 %v1793, 1.0
    %v1800 = vadd.f32 %v1795, 1.0
    %v1801 = vadd.f32 %v1797, 1.0
    %v1802 = vrcp.pop %v1798
    %v1803 = vmul.f32 1.0, %v1802
    %v1804 = vrcp.pop %v1799
    %v1805 = vmul.f32 1.0, %v1804
    %v1806 = vrcp.pop %v1800
    %v1807 = vmul.f32 1.0, %v1806
    %v1808 = vrcp.pop %v1801
    %v1809 = vmul.f32 1.0, %v1808
    %v1810 = vmul.f32 %v1775, %v1529
    %v1811 = vmul.f32 %v1777, %v1530
    %v1812 = vmul.f32 %v1779, %v1531
    %v1813 = vmul.f32 %v1781, %v1532
    %v1814 = vmul.f32 %v1751, %v1782
    %v1815 = vmul.f32 %v1753, %v1783
    %v1816 = vmul.f32 %v1755, %v1784
    %v1817 = vmul.f32 %v1757, %v1785
    %v1818 = vadd.f32 %v1810, %v1814
    %v1819 = vadd.f32 %v1811, %v1815
    %v1820 = vadd.f32 %v1812, %v1816
    %v1821 = vadd.f32 %v1813, %v1817
    %v1822 = vtanh.pop %v1818
    %v1823 = vtanh.pop %v1819
    %v1824 = vtanh.pop %v1820
    %v1825 = vtanh.pop %v1821
    %v1826 = vmul.f32 %v1803, %v1822
    %v1827 = vmul.f32 %v1805, %v1823
    %v1828 = vmul.f32 %v1807, %v1824
    %v1829 = vmul.f32 %v1809, %v1825
    %1830 = vrot.lane.b32.xlu0 %v274, 88
    %v1831 = vpop.permute.xlu0 %1830
    %1832 = vrot.lane.b32.xlu0 %v279, 88
    %v1833 = vpop.permute.xlu0 %1832
    %1834 = vrot.lane.b32.xlu0 %v284, 88
    %v1835 = vpop.permute.xlu0 %1834
    %1836 = vrot.lane.b32.xlu0 %v289, 88
    %v1837 = vpop.permute.xlu0 %1836
    %1838 = vrot.lane.b32.xlu0 %v294, 88
    %v1839 = vpop.permute.xlu0 %1838
    %1840 = vrot.lane.b32.xlu0 %v299, 88
    %v1841 = vpop.permute.xlu0 %1840
    %1842 = vrot.lane.b32.xlu0 %v304, 88
    %v1843 = vpop.permute.xlu0 %1842
    %1844 = vrot.lane.b32.xlu0 %v309, 88
    %v1845 = vpop.permute.xlu0 %1844
    %1846 = vrot.lane.b32.xlu0 %v314, 88
    %v1847 = vpop.permute.xlu0 %1846
    %1848 = vrot.lane.b32.xlu0 %v319, 88
    %v1849 = vpop.permute.xlu0 %1848
    %1850 = vrot.lane.b32.xlu0 %v324, 88
    %v1851 = vpop.permute.xlu0 %1850
    %1852 = vrot.lane.b32.xlu0 %v329, 88
    %v1853 = vpop.permute.xlu0 %1852
    %1854 = vrot.lane.b32.xlu0 %v334, 88
    %v1855 = vpop.permute.xlu0 %1854
    %1856 = vrot.lane.b32.xlu0 %v339, 88
    %v1857 = vpop.permute.xlu0 %1856
    %1858 = vrot.lane.b32.xlu0 %v344, 88
    %v1859 = vpop.permute.xlu0 %1858
    %1860 = vrot.lane.b32.xlu0 %v349, 88
    %v1861 = vpop.permute.xlu0 %1860
    %1878 = vmatprep.subr.mxu0 0.0
    %1879 = vmatpush1.msra.mxu0 %v1826
    %1880 = vmatprep.subr.mxu0 0.0
    %1881 = vmatpush1.msra.mxu0 %v1827
    %1882 = vmatprep.subr.mxu0 0.0
    %1883 = vmatpush1.msra.mxu0 %v1828
    %1884 = vmatprep.subr.mxu0 0.0
    %1885 = vmatpush1.msra.mxu0 %v1829
    %1886 = vmatprep.subr.mxu0 0.0
    %1887 = vmatpush1.msra.mxu0 0.0
    %1888 = vmatprep.subr.mxu0 0.0
    %1889 = vmatpush1.msra.mxu0 0.0
    %1890 = vmatprep.subr.mxu0 0.0
    %1891 = vmatpush1.msra.mxu0 0.0
    %1892 = vmatprep.subr.mxu0 0.0
    %1893 = vmatpush1.msra.mxu0 0.0
    %1894 = vmatprep.subr.mxu0 0.0
    %1895 = vmatpush1.msra.mxu0 0.0
    %1896 = vmatprep.subr.mxu0 0.0
    %1897 = vmatpush1.msra.mxu0 0.0
    %1898 = vmatprep.subr.mxu0 0.0
    %1899 = vmatpush1.msra.mxu0 0.0
    %1900 = vmatprep.subr.mxu0 0.0
    %1901 = vmatpush1.msra.mxu0 0.0
    %1902 = vmatprep.subr.mxu0 0.0
    %1903 = vmatpush1.msra.mxu0 0.0
    %1904 = vmatprep.subr.mxu0 0.0
    %1905 = vmatpush1.msra.mxu0 0.0
    %1906 = vmatprep.subr.mxu0 0.0
    %1907 = vmatpush1.msra.mxu0 0.0
    %1908 = vmatprep.subr.mxu0 0.0
    %1909 = vmatpush1.msra.mxu0 0.0
    %1910 = vmatprep.subr.mxu0 0.0
    %1911 = vmatpush1.msra.mxu0 0.0
    %1912 = vmatprep.subr.mxu0 0.0
    %1913 = vmatpush1.msra.mxu0 0.0
    %1914 = vmatprep.subr.mxu0 0.0
    %1915 = vmatpush1.msra.mxu0 0.0
    %1916 = vmatprep.subr.mxu0 0.0
    %1917 = vmatpush1.msra.mxu0 0.0
    %1918 = vmatprep.subr.mxu0 0.0
    %1919 = vmatpush1.msra.mxu0 0.0
    %1920 = vmatprep.subr.mxu0 0.0
    %1921 = vmatpush1.msra.mxu0 0.0
    %1922 = vmatprep.subr.mxu0 0.0
    %1923 = vmatpush1.msra.mxu0 0.0
    %1924 = vmatprep.subr.mxu0 0.0
    %1925 = vmatpush1.msra.mxu0 0.0
    %1926 = vmatprep.subr.mxu0 0.0
    %1927 = vmatpush1.msra.mxu0 0.0
    %1928 = vmatprep.subr.mxu0 0.0
    %1929 = vmatpush1.msra.mxu0 0.0
    %1930 = vmatprep.subr.mxu0 0.0
    %1931 = vmatpush1.msra.mxu0 0.0
    %1932 = vmatprep.subr.mxu0 0.0
    %1933 = vmatpush1.msra.mxu0 0.0
    %1934 = vmatprep.subr.mxu0 0.0
    %1935 = vmatpush1.msra.mxu0 0.0
    %1936 = vmatprep.subr.mxu0 0.0
    %1937 = vmatpush1.msra.mxu0 0.0
    %1938 = vmatprep.subr.mxu0 0.0
    %1939 = vmatpush1.msra.mxu0 0.0
    %1940 = vmatprep.subr.mxu0 0.0
    %1941 = vmatpush1.msra.mxu0 0.0
    %1942 = vmatprep.mubr.f32.mxu0 0.0
    %1943 = vmatmul.mubr.f32.gmra.mrb[0].mxu0 %v370
    %v1944 = vpop.f32.mrb[0].mxu0
    %v1945 = vadd.f32 %v1831, %v1944
    %v1946 = vpop.f32.mrb[0].mxu0
    %1947 = vmatprep.mubr.f32.mxu0 0.0
    %1948 = vmatmul.mubr.f32.gmra.mrb[0].mxu0 %v373
    %v1949 = vpop.f32.mrb[0].mxu0
    %v1950 = vadd.f32 %v1833, %v1949
    %v1951 = vpop.f32.mrb[0].mxu0
    %1952 = vmatprep.mubr.f32.mxu0 0.0
    %1953 = vmatmul.mubr.f32.gmra.mrb[0].mxu0 %v376
    %v1954 = vpop.f32.mrb[0].mxu0
    %v1955 = vadd.f32 %v1835, %v1954
    %v1956 = vpop.f32.mrb[0].mxu0
    %1957 = vmatprep.mubr.f32.mxu0 0.0
    %1958 = vmatmul.mubr.f32.gmra.mrb[0].mxu0 %v379
    %v1959 = vpop.f32.mrb[0].mxu0
    %v1960 = vadd.f32 %v1837, %v1959
    %v1961 = vpop.f32.mrb[0].mxu0
    %1962 = vmatprep.mubr.f32.mxu0 0.0
    %1963 = vmatmul.mubr.f32.gmra.mrb[0].mxu0 %v382
    %v1964 = vpop.f32.mrb[0].mxu0
    %v1965 = vadd.f32 %v1839, %v1964
    %v1966 = vpop.f32.mrb[0].mxu0
    %1967 = vmatprep.mubr.f32.mxu0 0.0
    %1968 = vmatmul.mubr.f32.gmra.mrb[0].mxu0 %v385
    %v1969 = vpop.f32.mrb[0].mxu0
    %v1970 = vadd.f32 %v1841, %v1969
    %v1971 = vpop.f32.mrb[0].mxu0
    %1972 = vmatprep.mubr.f32.mxu0 0.0
    %1973 = vmatmul.mubr.f32.gmra.mrb[0].mxu0 %v388
    %v1974 = vpop.f32.mrb[0].mxu0
    %v1975 = vadd.f32 %v1843, %v1974
    %v1976 = vpop.f32.mrb[0].mxu0
    %1977 = vmatprep.mubr.f32.mxu0 0.0
    %1978 = vmatmul.mubr.f32.gmra.mrb[0].mxu0 %v391
    %v1979 = vpop.f32.mrb[0].mxu0
    %v1980 = vadd.f32 %v1845, %v1979
    %v1981 = vpop.f32.mrb[0].mxu0
    %1982 = vmatprep.mubr.f32.mxu0 0.0
    %1983 = vmatmul.mubr.f32.gmra.mrb[0].mxu0 %v394
    %v1984 = vpop.f32.mrb[0].mxu0
    %v1985 = vadd.f32 %v1847, %v1984
    %v1986 = vpop.f32.mrb[0].mxu0
    %1987 = vmatprep.mubr.f32.mxu0 0.0
    %1988 = vmatmul.mubr.f32.gmra.mrb[0].mxu0 %v397
    %v1989 = vpop.f32.mrb[0].mxu0
    %v1990 = vadd.f32 %v1849, %v1989
    %v1991 = vpop.f32.mrb[0].mxu0
    %1992 = vmatprep.mubr.f32.mxu0 0.0
    %1993 = vmatmul.mubr.f32.gmra.mrb[0].mxu0 %v400
    %v1994 = vpop.f32.mrb[0].mxu0
    %v1995 = vadd.f32 %v1851, %v1994
    %v1996 = vpop.f32.mrb[0].mxu0
    %1997 = vmatprep.mubr.f32.mxu0 0.0
    %1998 = vmatmul.mubr.f32.gmra.mrb[0].mxu0 %v403
    %v1999 = vpop.f32.mrb[0].mxu0
    %v2000 = vadd.f32 %v1853, %v1999
    %v2001 = vpop.f32.mrb[0].mxu0
    %2002 = vmatprep.mubr.f32.mxu0 0.0
    %2003 = vmatmul.mubr.f32.gmra.mrb[0].mxu0 %v406
    %v2004 = vpop.f32.mrb[0].mxu0
    %v2005 = vadd.f32 %v1855, %v2004
    %v2006 = vpop.f32.mrb[0].mxu0
    %2007 = vmatprep.mubr.f32.mxu0 0.0
    %2008 = vmatmul.mubr.f32.gmra.mrb[0].mxu0 %v409
    %v2009 = vpop.f32.mrb[0].mxu0
    %v2010 = vadd.f32 %v1857, %v2009
    %v2011 = vpop.f32.mrb[0].mxu0
    %2012 = vmatprep.mubr.f32.mxu0 0.0
    %2013 = vmatmul.mubr.f32.gmra.mrb[0].mxu0 %v412
    %v2014 = vpop.f32.mrb[0].mxu0
    %v2015 = vadd.f32 %v1859, %v2014
    %v2016 = vpop.f32.mrb[0].mxu0
    %2017 = vmatprep.mubr.f32.mxu0 0.0
    %2018 = vmatmul.mubr.f32.gmra.mrb[0].mxu0 %v415
    %v2019 = vpop.f32.mrb[0].mxu0
    %v2020 = vadd.f32 %v1861, %v2019
    %v2021 = vpop.f32.mrb[0].mxu0
    %2022 = vdwg.mxu0
    %v2023 = vxor.u32 %v1945, 2147483648
    %v2024 = vxor.u32 %v1950, 2147483648
    %v2025 = vxor.u32 %v1955, 2147483648
    %v2026 = vxor.u32 %v1960, 2147483648
    %v2027 = vmul.f32 %v2023, 1.442695
    %v2028 = vpow.pop %v2027
    %v2029 = vmul.f32 %v2024, 1.442695
    %v2030 = vpow.pop %v2029
    %v2031 = vmul.f32 %v2025, 1.442695
    %v2032 = vpow.pop %v2031
    %v2033 = vmul.f32 %v2026, 1.442695
    %v2034 = vpow.pop %v2033
    %v2035 = vadd.f32 %v2028, 1.0
    %v2036 = vadd.f32 %v2030, 1.0
    %v2037 = vadd.f32 %v2032, 1.0
    %v2038 = vadd.f32 %v2034, 1.0
    %v2039 = vrcp.pop %v2035
    %v2040 = vmul.f32 1.0, %v2039
    %v2041 = vrcp.pop %v2036
    %v2042 = vmul.f32 1.0, %v2041
    %v2043 = vrcp.pop %v2037
    %v2044 = vmul.f32 1.0, %v2043
    %v2045 = vrcp.pop %v2038
    %v2046 = vmul.f32 1.0, %v2045
    %v2047 = vxor.u32 %v1965, 2147483648
    %v2048 = vxor.u32 %v1970, 2147483648
    %v2049 = vxor.u32 %v1975, 2147483648
    %v2050 = vxor.u32 %v1980, 2147483648
    %v2051 = vmul.f32 %v2047, 1.442695
    %v2052 = vpow.pop %v2051
    %v2053 = vmul.f32 %v2048, 1.442695
    %v2054 = vpow.pop %v2053
    %v2055 = vmul.f32 %v2049, 1.442695
    %v2056 = vpow.pop %v2055
    %v2057 = vmul.f32 %v2050, 1.442695
    %v2058 = vpow.pop %v2057
    %v2059 = vadd.f32 %v2052, 1.0
    %v2060 = vadd.f32 %v2054, 1.0
    %v2061 = vadd.f32 %v2056, 1.0
    %v2062 = vadd.f32 %v2058, 1.0
    %v2063 = vrcp.pop %v2059
    %v2064 = vmul.f32 1.0, %v2063
    %v2065 = vrcp.pop %v2060
    %v2066 = vmul.f32 1.0, %v2065
    %v2067 = vrcp.pop %v2061
    %v2068 = vmul.f32 1.0, %v2067
    %v2069 = vrcp.pop %v2062
    %v2070 = vmul.f32 1.0, %v2069
    %v2071 = vtanh.pop %v1985
    %v2072 = vtanh.pop %v1990
    %v2073 = vtanh.pop %v1995
    %v2074 = vtanh.pop %v2000
    %v2075 = vxor.u32 %v2005, 2147483648
    %v2076 = vxor.u32 %v2010, 2147483648
    %v2077 = vxor.u32 %v2015, 2147483648
    %v2078 = vxor.u32 %v2020, 2147483648
    %v2079 = vmul.f32 %v2075, 1.442695
    %v2080 = vpow.pop %v2079
    %v2081 = vmul.f32 %v2076, 1.442695
    %v2082 = vpow.pop %v2081
    %v2083 = vmul.f32 %v2077, 1.442695
    %v2084 = vpow.pop %v2083
    %v2085 = vmul.f32 %v2078, 1.442695
    %v2086 = vpow.pop %v2085
    %v2087 = vadd.f32 %v2080, 1.0
    %v2088 = vadd.f32 %v2082, 1.0
    %v2089 = vadd.f32 %v2084, 1.0
    %v2090 = vadd.f32 %v2086, 1.0
    %v2091 = vrcp.pop %v2087
    %v2092 = vmul.f32 1.0, %v2091
    %v2093 = vrcp.pop %v2088
    %v2094 = vmul.f32 1.0, %v2093
    %v2095 = vrcp.pop %v2089
    %v2096 = vmul.f32 1.0, %v2095
    %v2097 = vrcp.pop %v2090
    %v2098 = vmul.f32 1.0, %v2097
    %v2099 = vmul.f32 %v2064, %v1818
    %v2100 = vmul.f32 %v2066, %v1819
    %v2101 = vmul.f32 %v2068, %v1820
    %v2102 = vmul.f32 %v2070, %v1821
    %v2103 = vmul.f32 %v2040, %v2071
    %v2104 = vmul.f32 %v2042, %v2072
    %v2105 = vmul.f32 %v2044, %v2073
    %v2106 = vmul.f32 %v2046, %v2074
    %v2107 = vadd.f32 %v2099, %v2103
    %v2108 = vadd.f32 %v2100, %v2104
    %v2109 = vadd.f32 %v2101, %v2105
    %v2110 = vadd.f32 %v2102, %v2106
    %v2111 = vtanh.pop %v2107
    %v2112 = vtanh.pop %v2108
    %v2113 = vtanh.pop %v2109
    %v2114 = vtanh.pop %v2110
    %v2115 = vmul.f32 %v2092, %v2111
    %v2116 = vmul.f32 %v2094, %v2112
    %v2117 = vmul.f32 %v2096, %v2113
    %v2118 = vmul.f32 %v2098, %v2114
    %2119 = vrot.lane.b32.xlu0 %v274, 80
    %v2120 = vpop.permute.xlu0 %2119
    %2121 = vrot.lane.b32.xlu0 %v279, 80
    %v2122 = vpop.permute.xlu0 %2121
    %2123 = vrot.lane.b32.xlu0 %v284, 80
    %v2124 = vpop.permute.xlu0 %2123
    %2125 = vrot.lane.b32.xlu0 %v289, 80
    %v2126 = vpop.permute.xlu0 %2125
    %2127 = vrot.lane.b32.xlu0 %v294, 80
    %v2128 = vpop.permute.xlu0 %2127
    %2129 = vrot.lane.b32.xlu0 %v299, 80
    %v2130 = vpop.permute.xlu0 %2129
    %2131 = vrot.lane.b32.xlu0 %v304, 80
    %v2132 = vpop.permute.xlu0 %2131
    %2133 = vrot.lane.b32.xlu0 %v309, 80
    %v2134 = vpop.permute.xlu0 %2133
    %2135 = vrot.lane.b32.xlu0 %v314, 80
    %v2136 = vpop.permute.xlu0 %2135
    %2137 = vrot.lane.b32.xlu0 %v319, 80
    %v2138 = vpop.permute.xlu0 %2137
    %2139 = vrot.lane.b32.xlu0 %v324, 80
    %v2140 = vpop.permute.xlu0 %2139
    %2141 = vrot.lane.b32.xlu0 %v329, 80
    %v2142 = vpop.permute.xlu0 %2141
    %2143 = vrot.lane.b32.xlu0 %v334, 80
    %v2144 = vpop.permute.xlu0 %2143
    %2145 = vrot.lane.b32.xlu0 %v339, 80
    %v2146 = vpop.permute.xlu0 %2145
    %2147 = vrot.lane.b32.xlu0 %v344, 80
    %v2148 = vpop.permute.xlu0 %2147
    %2149 = vrot.lane.b32.xlu0 %v349, 80
    %v2150 = vpop.permute.xlu0 %2149
    %2167 = vmatprep.subr.mxu0 0.0
    %2168 = vmatpush1.msra.mxu0 %v2115
    %2169 = vmatprep.subr.mxu0 0.0
    %2170 = vmatpush1.msra.mxu0 %v2116
    %2171 = vmatprep.subr.mxu0 0.0
    %2172 = vmatpush1.msra.mxu0 %v2117
    %2173 = vmatprep.subr.mxu0 0.0
    %2174 = vmatpush1.msra.mxu0 %v2118
    %2175 = vmatprep.subr.mxu0 0.0
    %2176 = vmatpush1.msra.mxu0 0.0
    %2177 = vmatprep.subr.mxu0 0.0
    %2178 = vmatpush1.msra.mxu0 0.0
    %2179 = vmatprep.subr.mxu0 0.0
    %2180 = vmatpush1.msra.mxu0 0.0
    %2181 = vmatprep.subr.mxu0 0.0
    %2182 = vmatpush1.msra.mxu0 0.0
    %2183 = vmatprep.subr.mxu0 0.0
    %2184 = vmatpush1.msra.mxu0 0.0
    %2185 = vmatprep.subr.mxu0 0.0
    %2186 = vmatpush1.msra.mxu0 0.0
    %2187 = vmatprep.subr.mxu0 0.0
    %2188 = vmatpush1.msra.mxu0 0.0
    %2189 = vmatprep.subr.mxu0 0.0
    %2190 = vmatpush1.msra.mxu0 0.0
    %2191 = vmatprep.subr.mxu0 0.0
    %2192 = vmatpush1.msra.mxu0 0.0
    %2193 = vmatprep.subr.mxu0 0.0
    %2194 = vmatpush1.msra.mxu0 0.0
    %2195 = vmatprep.subr.mxu0 0.0
    %2196 = vmatpush1.msra.mxu0 0.0
    %2197 = vmatprep.subr.mxu0 0.0
    %2198 = vmatpush1.msra.mxu0 0.0
    %2199 = vmatprep.subr.mxu0 0.0
    %2200 = vmatpush1.msra.mxu0 0.0
    %2201 = vmatprep.subr.mxu0 0.0
    %2202 = vmatpush1.msra.mxu0 0.0
    %2203 = vmatprep.subr.mxu0 0.0
    %2204 = vmatpush1.msra.mxu0 0.0
    %2205 = vmatprep.subr.mxu0 0.0
    %2206 = vmatpush1.msra.mxu0 0.0
    %2207 = vmatprep.subr.mxu0 0.0
    %2208 = vmatpush1.msra.mxu0 0.0
    %2209 = vmatprep.subr.mxu0 0.0
    %2210 = vmatpush1.msra.mxu0 0.0
    %2211 = vmatprep.subr.mxu0 0.0
    %2212 = vmatpush1.msra.mxu0 0.0
    %2213 = vmatprep.subr.mxu0 0.0
    %2214 = vmatpush1.msra.mxu0 0.0
    %2215 = vmatprep.subr.mxu0 0.0
    %2216 = vmatpush1.msra.mxu0 0.0
    %2217 = vmatprep.subr.mxu0 0.0
    %2218 = vmatpush1.msra.mxu0 0.0
    %2219 = vmatprep.subr.mxu0 0.0
    %2220 = vmatpush1.msra.mxu0 0.0
    %2221 = vmatprep.subr.mxu0 0.0
    %2222 = vmatpush1.msra.mxu0 0.0
    %2223 = vmatprep.subr.mxu0 0.0
    %2224 = vmatpush1.msra.mxu0 0.0
    %2225 = vmatprep.subr.mxu0 0.0
    %2226 = vmatpush1.msra.mxu0 0.0
    %2227 = vmatprep.subr.mxu0 0.0
    %2228 = vmatpush1.msra.mxu0 0.0
    %2229 = vmatprep.subr.mxu0 0.0
    %2230 = vmatpush1.msra.mxu0 0.0
    %2231 = vmatprep.mubr.f32.mxu0 0.0
    %2232 = vmatmul.mubr.f32.gmra.mrb[0].mxu0 %v370
    %v2233 = vpop.f32.mrb[0].mxu0
    %v2234 = vadd.f32 %v2120, %v2233
    %v2235 = vpop.f32.mrb[0].mxu0
    %2236 = vmatprep.mubr.f32.mxu0 0.0
    %2237 = vmatmul.mubr.f32.gmra.mrb[0].mxu0 %v373
    %v2238 = vpop.f32.mrb[0].mxu0
    %v2239 = vadd.f32 %v2122, %v2238
    %v2240 = vpop.f32.mrb[0].mxu0
    %2241 = vmatprep.mubr.f32.mxu0 0.0
    %2242 = vmatmul.mubr.f32.gmra.mrb[0].mxu0 %v376
    %v2243 = vpop.f32.mrb[0].mxu0
    %v2244 = vadd.f32 %v2124, %v2243
    %v2245 = vpop.f32.mrb[0].mxu0
    %2246 = vmatprep.mubr.f32.mxu0 0.0
    %2247 = vmatmul.mubr.f32.gmra.mrb[0].mxu0 %v379
    %v2248 = vpop.f32.mrb[0].mxu0
    %v2249 = vadd.f32 %v2126, %v2248
    %v2250 = vpop.f32.mrb[0].mxu0
    %2251 = vmatprep.mubr.f32.mxu0 0.0
    %2252 = vmatmul.mubr.f32.gmra.mrb[0].mxu0 %v382
    %v2253 = vpop.f32.mrb[0].mxu0
    %v2254 = vadd.f32 %v2128, %v2253
    %v2255 = vpop.f32.mrb[0].mxu0
    %2256 = vmatprep.mubr.f32.mxu0 0.0
    %2257 = vmatmul.mubr.f32.gmra.mrb[0].mxu0 %v385
    %v2258 = vpop.f32.mrb[0].mxu0
    %v2259 = vadd.f32 %v2130, %v2258
    %v2260 = vpop.f32.mrb[0].mxu0
    %2261 = vmatprep.mubr.f32.mxu0 0.0
    %2262 = vmatmul.mubr.f32.gmra.mrb[0].mxu0 %v388
    %v2263 = vpop.f32.mrb[0].mxu0
    %v2264 = vadd.f32 %v2132, %v2263
    %v2265 = vpop.f32.mrb[0].mxu0
    %2266 = vmatprep.mubr.f32.mxu0 0.0
    %2267 = vmatmul.mubr.f32.gmra.mrb[0].mxu0 %v391
    %v2268 = vpop.f32.mrb[0].mxu0
    %v2269 = vadd.f32 %v2134, %v2268
    %v2270 = vpop.f32.mrb[0].mxu0
    %2271 = vmatprep.mubr.f32.mxu0 0.0
    %2272 = vmatmul.mubr.f32.gmra.mrb[0].mxu0 %v394
    %v2273 = vpop.f32.mrb[0].mxu0
    %v2274 = vadd.f32 %v2136, %v2273
    %v2275 = vpop.f32.mrb[0].mxu0
    %2276 = vmatprep.mubr.f32.mxu0 0.0
    %2277 = vmatmul.mubr.f32.gmra.mrb[0].mxu0 %v397
    %v2278 = vpop.f32.mrb[0].mxu0
    %v2279 = vadd.f32 %v2138, %v2278
    %v2280 = vpop.f32.mrb[0].mxu0
    %2281 = vmatprep.mubr.f32.mxu0 0.0
    %2282 = vmatmul.mubr.f32.gmra.mrb[0].mxu0 %v400
    %v2283 = vpop.f32.mrb[0].mxu0
    %v2284 = vadd.f32 %v2140, %v2283
    %v2285 = vpop.f32.mrb[0].mxu0
    %2286 = vmatprep.mubr.f32.mxu0 0.0
    %2287 = vmatmul.mubr.f32.gmra.mrb[0].mxu0 %v403
    %v2288 = vpop.f32.mrb[0].mxu0
    %v2289 = vadd.f32 %v2142, %v2288
    %v2290 = vpop.f32.mrb[0].mxu0
    %2291 = vmatprep.mubr.f32.mxu0 0.0
    %2292 = vmatmul.mubr.f32.gmra.mrb[0].mxu0 %v406
    %v2293 = vpop.f32.mrb[0].mxu0
    %v2294 = vadd.f32 %v2144, %v2293
    %v2295 = vpop.f32.mrb[0].mxu0
    %2296 = vmatprep.mubr.f32.mxu0 0.0
    %2297 = vmatmul.mubr.f32.gmra.mrb[0].mxu0 %v409
    %v2298 = vpop.f32.mrb[0].mxu0
    %v2299 = vadd.f32 %v2146, %v2298
    %v2300 = vpop.f32.mrb[0].mxu0
    %2301 = vmatprep.mubr.f32.mxu0 0.0
    %2302 = vmatmul.mubr.f32.gmra.mrb[0].mxu0 %v412
    %v2303 = vpop.f32.mrb[0].mxu0
    %v2304 = vadd.f32 %v2148, %v2303
    %v2305 = vpop.f32.mrb[0].mxu0
    %2306 = vmatprep.mubr.f32.mxu0 0.0
    %2307 = vmatmul.mubr.f32.gmra.mrb[0].mxu0 %v415
    %v2308 = vpop.f32.mrb[0].mxu0
    %v2309 = vadd.f32 %v2150, %v2308
    %v2310 = vpop.f32.mrb[0].mxu0
    %2311 = vdwg.mxu0
    %v2312 = vxor.u32 %v2234, 2147483648
    %v2313 = vxor.u32 %v2239, 2147483648
    %v2314 = vxor.u32 %v2244, 2147483648
    %v2315 = vxor.u32 %v2249, 2147483648
    %v2316 = vmul.f32 %v2312, 1.442695
    %v2317 = vpow.pop %v2316
    %v2318 = vmul.f32 %v2313, 1.442695
    %v2319 = vpow.pop %v2318
    %v2320 = vmul.f32 %v2314, 1.442695
    %v2321 = vpow.pop %v2320
    %v2322 = vmul.f32 %v2315, 1.442695
    %v2323 = vpow.pop %v2322
    %v2324 = vadd.f32 %v2317, 1.0
    %v2325 = vadd.f32 %v2319, 1.0
    %v2326 = vadd.f32 %v2321, 1.0
    %v2327 = vadd.f32 %v2323, 1.0
    %v2328 = vrcp.pop %v2324
    %v2329 = vmul.f32 1.0, %v2328
    %v2330 = vrcp.pop %v2325
    %v2331 = vmul.f32 1.0, %v2330
    %v2332 = vrcp.pop %v2326
    %v2333 = vmul.f32 1.0, %v2332
    %v2334 = vrcp.pop %v2327
    %v2335 = vmul.f32 1.0, %v2334
    %v2336 = vxor.u32 %v2254, 2147483648
    %v2337 = vxor.u32 %v2259, 2147483648
    %v2338 = vxor.u32 %v2264, 2147483648
    %v2339 = vxor.u32 %v2269, 2147483648
    %v2340 = vmul.f32 %v2336, 1.442695
    %v2341 = vpow.pop %v2340
    %v2342 = vmul.f32 %v2337, 1.442695
    %v2343 = vpow.pop %v2342
    %v2344 = vmul.f32 %v2338, 1.442695
    %v2345 = vpow.pop %v2344
    %v2346 = vmul.f32 %v2339, 1.442695
    %v2347 = vpow.pop %v2346
    %v2348 = vadd.f32 %v2341, 1.0
    %v2349 = vadd.f32 %v2343, 1.0
    %v2350 = vadd.f32 %v2345, 1.0
    %v2351 = vadd.f32 %v2347, 1.0
    %v2352 = vrcp.pop %v2348
    %v2353 = vmul.f32 1.0, %v2352
    %v2354 = vrcp.pop %v2349
    %v2355 = vmul.f32 1.0, %v2354
    %v2356 = vrcp.pop %v2350
    %v2357 = vmul.f32 1.0, %v2356
    %v2358 = vrcp.pop %v2351
    %v2359 = vmul.f32 1.0, %v2358
    %v2360 = vtanh.pop %v2274
    %v2361 = vtanh.pop %v2279
    %v2362 = vtanh.pop %v2284
    %v2363 = vtanh.pop %v2289
    %v2364 = vxor.u32 %v2294, 2147483648
    %v2365 = vxor.u32 %v2299, 2147483648
    %v2366 = vxor.u32 %v2304, 2147483648
    %v2367 = vxor.u32 %v2309, 2147483648
    %v2368 = vmul.f32 %v2364, 1.442695
    %v2369 = vpow.pop %v2368
    %v2370 = vmul.f32 %v2365, 1.442695
    %v2371 = vpow.pop %v2370
    %v2372 = vmul.f32 %v2366, 1.442695
    %v2373 = vpow.pop %v2372
    %v2374 = vmul.f32 %v2367, 1.442695
    %v2375 = vpow.pop %v2374
    %v2376 = vadd.f32 %v2369, 1.0
    %v2377 = vadd.f32 %v2371, 1.0
    %v2378 = vadd.f32 %v2373, 1.0
    %v2379 = vadd.f32 %v2375, 1.0
    %v2380 = vrcp.pop %v2376
    %v2381 = vmul.f32 1.0, %v2380
    %v2382 = vrcp.pop %v2377
    %v2383 = vmul.f32 1.0, %v2382
    %v2384 = vrcp.pop %v2378
    %v2385 = vmul.f32 1.0, %v2384
    %v2386 = vrcp.pop %v2379
    %v2387 = vmul.f32 1.0, %v2386
    %v2388 = vmul.f32 %v2353, %v2107
    %v2389 = vmul.f32 %v2355, %v2108
    %v2390 = vmul.f32 %v2357, %v2109
    %v2391 = vmul.f32 %v2359, %v2110
    %v2392 = vmul.f32 %v2329, %v2360
    %v2393 = vmul.f32 %v2331, %v2361
    %v2394 = vmul.f32 %v2333, %v2362
    %v2395 = vmul.f32 %v2335, %v2363
    %v2396 = vadd.f32 %v2388, %v2392
    %v2397 = vadd.f32 %v2389, %v2393
    %v2398 = vadd.f32 %v2390, %v2394
    %v2399 = vadd.f32 %v2391, %v2395
    %v2400 = vtanh.pop %v2396
    %v2401 = vtanh.pop %v2397
    %v2402 = vtanh.pop %v2398
    %v2403 = vtanh.pop %v2399
    %v2404 = vmul.f32 %v2381, %v2400
    %v2405 = vmul.f32 %v2383, %v2401
    %v2406 = vmul.f32 %v2385, %v2402
    %v2407 = vmul.f32 %v2387, %v2403
    %2408 = vrot.lane.b32.xlu0 %v274, 72
    %v2409 = vpop.permute.xlu0 %2408
    %2410 = vrot.lane.b32.xlu0 %v279, 72
    %v2411 = vpop.permute.xlu0 %2410
    %2412 = vrot.lane.b32.xlu0 %v284, 72
    %v2413 = vpop.permute.xlu0 %2412
    %2414 = vrot.lane.b32.xlu0 %v289, 72
    %v2415 = vpop.permute.xlu0 %2414
    %2416 = vrot.lane.b32.xlu0 %v294, 72
    %v2417 = vpop.permute.xlu0 %2416
    %2418 = vrot.lane.b32.xlu0 %v299, 72
    %v2419 = vpop.permute.xlu0 %2418
    %2420 = vrot.lane.b32.xlu0 %v304, 72
    %v2421 = vpop.permute.xlu0 %2420
    %2422 = vrot.lane.b32.xlu0 %v309, 72
    %v2423 = vpop.permute.xlu0 %2422
    %2424 = vrot.lane.b32.xlu0 %v314, 72
    %v2425 = vpop.permute.xlu0 %2424
    %2426 = vrot.lane.b32.xlu0 %v319, 72
    %v2427 = vpop.permute.xlu0 %2426
    %2428 = vrot.lane.b32.xlu0 %v324, 72
    %v2429 = vpop.permute.xlu0 %2428
    %2430 = vrot.lane.b32.xlu0 %v329, 72
    %v2431 = vpop.permute.xlu0 %2430
    %2432 = vrot.lane.b32.xlu0 %v334, 72
    %v2433 = vpop.permute.xlu0 %2432
    %2434 = vrot.lane.b32.xlu0 %v339, 72
    %v2435 = vpop.permute.xlu0 %2434
    %2436 = vrot.lane.b32.xlu0 %v344, 72
    %v2437 = vpop.permute.xlu0 %2436
    %2438 = vrot.lane.b32.xlu0 %v349, 72
    %v2439 = vpop.permute.xlu0 %2438
    %2456 = vmatprep.subr.mxu0 0.0
    %2457 = vmatpush1.msra.mxu0 %v2404
    %2458 = vmatprep.subr.mxu0 0.0
    %2459 = vmatpush1.msra.mxu0 %v2405
    %2460 = vmatprep.subr.mxu0 0.0
    %2461 = vmatpush1.msra.mxu0 %v2406
    %2462 = vmatprep.subr.mxu0 0.0
    %2463 = vmatpush1.msra.mxu0 %v2407
    %2464 = vmatprep.subr.mxu0 0.0
    %2465 = vmatpush1.msra.mxu0 0.0
    %2466 = vmatprep.subr.mxu0 0.0
    %2467 = vmatpush1.msra.mxu0 0.0
    %2468 = vmatprep.subr.mxu0 0.0
    %2469 = vmatpush1.msra.mxu0 0.0
    %2470 = vmatprep.subr.mxu0 0.0
    %2471 = vmatpush1.msra.mxu0 0.0
    %2472 = vmatprep.subr.mxu0 0.0
    %2473 = vmatpush1.msra.mxu0 0.0
    %2474 = vmatprep.subr.mxu0 0.0
    %2475 = vmatpush1.msra.mxu0 0.0
    %2476 = vmatprep.subr.mxu0 0.0
    %2477 = vmatpush1.msra.mxu0 0.0
    %2478 = vmatprep.subr.mxu0 0.0
    %2479 = vmatpush1.msra.mxu0 0.0
    %2480 = vmatprep.subr.mxu0 0.0
    %2481 = vmatpush1.msra.mxu0 0.0
    %2482 = vmatprep.subr.mxu0 0.0
    %2483 = vmatpush1.msra.mxu0 0.0
    %2484 = vmatprep.subr.mxu0 0.0
    %2485 = vmatpush1.msra.mxu0 0.0
    %2486 = vmatprep.subr.mxu0 0.0
    %2487 = vmatpush1.msra.mxu0 0.0
    %2488 = vmatprep.subr.mxu0 0.0
    %2489 = vmatpush1.msra.mxu0 0.0
    %2490 = vmatprep.subr.mxu0 0.0
    %2491 = vmatpush1.msra.mxu0 0.0
    %2492 = vmatprep.subr.mxu0 0.0
    %2493 = vmatpush1.msra.mxu0 0.0
    %2494 = vmatprep.subr.mxu0 0.0
    %2495 = vmatpush1.msra.mxu0 0.0
    %2496 = vmatprep.subr.mxu0 0.0
    %2497 = vmatpush1.msra.mxu0 0.0
    %2498 = vmatprep.subr.mxu0 0.0
    %2499 = vmatpush1.msra.mxu0 0.0
    %2500 = vmatprep.subr.mxu0 0.0
    %2501 = vmatpush1.msra.mxu0 0.0
    %2502 = vmatprep.subr.mxu0 0.0
    %2503 = vmatpush1.msra.mxu0 0.0
    %2504 = vmatprep.subr.mxu0 0.0
    %2505 = vmatpush1.msra.mxu0 0.0
    %2506 = vmatprep.subr.mxu0 0.0
    %2507 = vmatpush1.msra.mxu0 0.0
    %2508 = vmatprep.subr.mxu0 0.0
    %2509 = vmatpush1.msra.mxu0 0.0
    %2510 = vmatprep.subr.mxu0 0.0
    %2511 = vmatpush1.msra.mxu0 0.0
    %2512 = vmatprep.subr.mxu0 0.0
    %2513 = vmatpush1.msra.mxu0 0.0
    %2514 = vmatprep.subr.mxu0 0.0
    %2515 = vmatpush1.msra.mxu0 0.0
    %2516 = vmatprep.subr.mxu0 0.0
    %2517 = vmatpush1.msra.mxu0 0.0
    %2518 = vmatprep.subr.mxu0 0.0
    %2519 = vmatpush1.msra.mxu0 0.0
    %2520 = vmatprep.mubr.f32.mxu0 0.0
    %2521 = vmatmul.mubr.f32.gmra.mrb[0].mxu0 %v370
    %v2522 = vpop.f32.mrb[0].mxu0
    %v2523 = vadd.f32 %v2409, %v2522
    %v2524 = vpop.f32.mrb[0].mxu0
    %2525 = vmatprep.mubr.f32.mxu0 0.0
    %2526 = vmatmul.mubr.f32.gmra.mrb[0].mxu0 %v373
    %v2527 = vpop.f32.mrb[0].mxu0
    %v2528 = vadd.f32 %v2411, %v2527
    %v2529 = vpop.f32.mrb[0].mxu0
    %2530 = vmatprep.mubr.f32.mxu0 0.0
    %2531 = vmatmul.mubr.f32.gmra.mrb[0].mxu0 %v376
    %v2532 = vpop.f32.mrb[0].mxu0
    %v2533 = vadd.f32 %v2413, %v2532
    %v2534 = vpop.f32.mrb[0].mxu0
    %2535 = vmatprep.mubr.f32.mxu0 0.0
    %2536 = vmatmul.mubr.f32.gmra.mrb[0].mxu0 %v379
    %v2537 = vpop.f32.mrb[0].mxu0
    %v2538 = vadd.f32 %v2415, %v2537
    %v2539 = vpop.f32.mrb[0].mxu0
    %2540 = vmatprep.mubr.f32.mxu0 0.0
    %2541 = vmatmul.mubr.f32.gmra.mrb[0].mxu0 %v382
    %v2542 = vpop.f32.mrb[0].mxu0
    %v2543 = vadd.f32 %v2417, %v2542
    %v2544 = vpop.f32.mrb[0].mxu0
    %2545 = vmatprep.mubr.f32.mxu0 0.0
    %2546 = vmatmul.mubr.f32.gmra.mrb[0].mxu0 %v385
    %v2547 = vpop.f32.mrb[0].mxu0
    %v2548 = vadd.f32 %v2419, %v2547
    %v2549 = vpop.f32.mrb[0].mxu0
    %2550 = vmatprep.mubr.f32.mxu0 0.0
    %2551 = vmatmul.mubr.f32.gmra.mrb[0].mxu0 %v388
    %v2552 = vpop.f32.mrb[0].mxu0
    %v2553 = vadd.f32 %v2421, %v2552
    %v2554 = vpop.f32.mrb[0].mxu0
    %2555 = vmatprep.mubr.f32.mxu0 0.0
    %2556 = vmatmul.mubr.f32.gmra.mrb[0].mxu0 %v391
    %v2557 = vpop.f32.mrb[0].mxu0
    %v2558 = vadd.f32 %v2423, %v2557
    %v2559 = vpop.f32.mrb[0].mxu0
    %2560 = vmatprep.mubr.f32.mxu0 0.0
    %2561 = vmatmul.mubr.f32.gmra.mrb[0].mxu0 %v394
    %v2562 = vpop.f32.mrb[0].mxu0
    %v2563 = vadd.f32 %v2425, %v2562
    %v2564 = vpop.f32.mrb[0].mxu0
    %2565 = vmatprep.mubr.f32.mxu0 0.0
    %2566 = vmatmul.mubr.f32.gmra.mrb[0].mxu0 %v397
    %v2567 = vpop.f32.mrb[0].mxu0
    %v2568 = vadd.f32 %v2427, %v2567
    %v2569 = vpop.f32.mrb[0].mxu0
    %2570 = vmatprep.mubr.f32.mxu0 0.0
    %2571 = vmatmul.mubr.f32.gmra.mrb[0].mxu0 %v400
    %v2572 = vpop.f32.mrb[0].mxu0
    %v2573 = vadd.f32 %v2429, %v2572
    %v2574 = vpop.f32.mrb[0].mxu0
    %2575 = vmatprep.mubr.f32.mxu0 0.0
    %2576 = vmatmul.mubr.f32.gmra.mrb[0].mxu0 %v403
    %v2577 = vpop.f32.mrb[0].mxu0
    %v2578 = vadd.f32 %v2431, %v2577
    %v2579 = vpop.f32.mrb[0].mxu0
    %2580 = vmatprep.mubr.f32.mxu0 0.0
    %2581 = vmatmul.mubr.f32.gmra.mrb[0].mxu0 %v406
    %v2582 = vpop.f32.mrb[0].mxu0
    %v2583 = vadd.f32 %v2433, %v2582
    %v2584 = vpop.f32.mrb[0].mxu0
    %2585 = vmatprep.mubr.f32.mxu0 0.0
    %2586 = vmatmul.mubr.f32.gmra.mrb[0].mxu0 %v409
    %v2587 = vpop.f32.mrb[0].mxu0
    %v2588 = vadd.f32 %v2435, %v2587
    %v2589 = vpop.f32.mrb[0].mxu0
    %2590 = vmatprep.mubr.f32.mxu0 0.0
    %2591 = vmatmul.mubr.f32.gmra.mrb[0].mxu0 %v412
    %v2592 = vpop.f32.mrb[0].mxu0
    %v2593 = vadd.f32 %v2437, %v2592
    %v2594 = vpop.f32.mrb[0].mxu0
    %2595 = vmatprep.mubr.f32.mxu0 0.0
    %2596 = vmatmul.mubr.f32.gmra.mrb[0].mxu0 %v415
    %v2597 = vpop.f32.mrb[0].mxu0
    %v2598 = vadd.f32 %v2439, %v2597
    %v2599 = vpop.f32.mrb[0].mxu0
    %2600 = vdwg.mxu0
    %v2601 = vxor.u32 %v2523, 2147483648
    %v2602 = vxor.u32 %v2528, 2147483648
    %v2603 = vxor.u32 %v2533, 2147483648
    %v2604 = vxor.u32 %v2538, 2147483648
    %v2605 = vmul.f32 %v2601, 1.442695
    %v2606 = vpow.pop %v2605
    %v2607 = vmul.f32 %v2602, 1.442695
    %v2608 = vpow.pop %v2607
    %v2609 = vmul.f32 %v2603, 1.442695
    %v2610 = vpow.pop %v2609
    %v2611 = vmul.f32 %v2604, 1.442695
    %v2612 = vpow.pop %v2611
    %v2613 = vadd.f32 %v2606, 1.0
    %v2614 = vadd.f32 %v2608, 1.0
    %v2615 = vadd.f32 %v2610, 1.0
    %v2616 = vadd.f32 %v2612, 1.0
    %v2617 = vrcp.pop %v2613
    %v2618 = vmul.f32 1.0, %v2617
    %v2619 = vrcp.pop %v2614
    %v2620 = vmul.f32 1.0, %v2619
    %v2621 = vrcp.pop %v2615
    %v2622 = vmul.f32 1.0, %v2621
    %v2623 = vrcp.pop %v2616
    %v2624 = vmul.f32 1.0, %v2623
    %v2625 = vxor.u32 %v2543, 2147483648
    %v2626 = vxor.u32 %v2548, 2147483648
    %v2627 = vxor.u32 %v2553, 2147483648
    %v2628 = vxor.u32 %v2558, 2147483648
    %v2629 = vmul.f32 %v2625, 1.442695
    %v2630 = vpow.pop %v2629
    %v2631 = vmul.f32 %v2626, 1.442695
    %v2632 = vpow.pop %v2631
    %v2633 = vmul.f32 %v2627, 1.442695
    %v2634 = vpow.pop %v2633
    %v2635 = vmul.f32 %v2628, 1.442695
    %v2636 = vpow.pop %v2635
    %v2637 = vadd.f32 %v2630, 1.0
    %v2638 = vadd.f32 %v2632, 1.0
    %v2639 = vadd.f32 %v2634, 1.0
    %v2640 = vadd.f32 %v2636, 1.0
    %v2641 = vrcp.pop %v2637
    %v2642 = vmul.f32 1.0, %v2641
    %v2643 = vrcp.pop %v2638
    %v2644 = vmul.f32 1.0, %v2643
    %v2645 = vrcp.pop %v2639
    %v2646 = vmul.f32 1.0, %v2645
    %v2647 = vrcp.pop %v2640
    %v2648 = vmul.f32 1.0, %v2647
    %v2649 = vtanh.pop %v2563
    %v2650 = vtanh.pop %v2568
    %v2651 = vtanh.pop %v2573
    %v2652 = vtanh.pop %v2578
    %v2653 = vxor.u32 %v2583, 2147483648
    %v2654 = vxor.u32 %v2588, 2147483648
    %v2655 = vxor.u32 %v2593, 2147483648
    %v2656 = vxor.u32 %v2598, 2147483648
    %v2657 = vmul.f32 %v2653, 1.442695
    %v2658 = vpow.pop %v2657
    %v2659 = vmul.f32 %v2654, 1.442695
    %v2660 = vpow.pop %v2659
    %v2661 = vmul.f32 %v2655, 1.442695
    %v2662 = vpow.pop %v2661
    %v2663 = vmul.f32 %v2656, 1.442695
    %v2664 = vpow.pop %v2663
    %v2665 = vadd.f32 %v2658, 1.0
    %v2666 = vadd.f32 %v2660, 1.0
    %v2667 = vadd.f32 %v2662, 1.0
    %v2668 = vadd.f32 %v2664, 1.0
    %v2669 = vrcp.pop %v2665
    %v2670 = vmul.f32 1.0, %v2669
    %v2671 = vrcp.pop %v2666
    %v2672 = vmul.f32 1.0, %v2671
    %v2673 = vrcp.pop %v2667
    %v2674 = vmul.f32 1.0, %v2673
    %v2675 = vrcp.pop %v2668
    %v2676 = vmul.f32 1.0, %v2675
    %v2677 = vmul.f32 %v2642, %v2396
    %v2678 = vmul.f32 %v2644, %v2397
    %v2679 = vmul.f32 %v2646, %v2398
    %v2680 = vmul.f32 %v2648, %v2399
    %v2681 = vmul.f32 %v2618, %v2649
    %v2682 = vmul.f32 %v2620, %v2650
    %v2683 = vmul.f32 %v2622, %v2651
    %v2684 = vmul.f32 %v2624, %v2652
    %v2685 = vadd.f32 %v2677, %v2681
    %v2686 = vadd.f32 %v2678, %v2682
    %v2687 = vadd.f32 %v2679, %v2683
    %v2688 = vadd.f32 %v2680, %v2684
    %v2689 = vtanh.pop %v2685
    %v2690 = vtanh.pop %v2686
    %v2691 = vtanh.pop %v2687
    %v2692 = vtanh.pop %v2688
    %v2693 = vmul.f32 %v2670, %v2689
    %v2694 = vmul.f32 %v2672, %v2690
    %v2695 = vmul.f32 %v2674, %v2691
    %v2696 = vmul.f32 %v2676, %v2692
    %v2697 = vld [vmem:[%s5] sm:$0xff]
    %v2698 = vld [vmem:[%s5 + $0x8] sm:$0xff]
    %v2699 = vld [vmem:[%s5 + $0x10] sm:$0xff]
    %v2700 = vld [vmem:[%s5 + $0x18] sm:$0xff]
    %v2701 = vld [vmem:[%s5 + $0x20] sm:$0xff]
    %v2702 = vld [vmem:[%s5 + $0x28] sm:$0xff]
    %v2703 = vld [vmem:[%s5 + $0x30] sm:$0xff]
    %v2704 = vld [vmem:[%s5 + $0x38] sm:$0xff]
    %v2705 = vld [vmem:[%s4] sm:$0xff]
    %v2706 = vld [vmem:[%s4 + $0x8] sm:$0xff]
    %v2707 = vld [vmem:[%s4 + $0x10] sm:$0xff]
    %v2708 = vld [vmem:[%s4 + $0x18] sm:$0xff]
    %v2709 = vld [vmem:[%s4 + $0x20] sm:$0xff]
    %v2710 = vld [vmem:[%s4 + $0x28] sm:$0xff]
    %v2711 = vld [vmem:[%s4 + $0x30] sm:$0xff]
    %v2712 = vld [vmem:[%s4 + $0x38] sm:$0xff]
    %2714 = vset.pattern.permute.xlu0 3
    %2715 = vperm.xlu0 %2714, %v2697
    %v2716 = vpop.permute.xlu0 %2715
    %2719 = vset.pattern.permute.xlu0 3
    %2720 = vperm.xlu0 %2719, %v2698
    %v2721 = vpop.permute.xlu0 %2720
    %2724 = vset.pattern.permute.xlu0 3
    %2725 = vperm.xlu0 %2724, %v2699
    %v2726 = vpop.permute.xlu0 %2725
    %2729 = vset.pattern.permute.xlu0 3
    %2730 = vperm.xlu0 %2729, %v2700
    %v2731 = vpop.permute.xlu0 %2730
    %2734 = vset.pattern.permute.xlu0 3
    %2735 = vperm.xlu0 %2734, %v2701
    %v2736 = vpop.permute.xlu0 %2735
    %2739 = vset.pattern.permute.xlu0 3
    %2740 = vperm.xlu0 %2739, %v2702
    %v2741 = vpop.permute.xlu0 %2740
    %2744 = vset.pattern.permute.xlu0 3
    %2745 = vperm.xlu0 %2744, %v2703
    %v2746 = vpop.permute.xlu0 %2745
    %2749 = vset.pattern.permute.xlu0 3
    %2750 = vperm.xlu0 %2749, %v2704
    %v2751 = vpop.permute.xlu0 %2750
    %v2754 = vsel %vm368, %v2705, 0
    %v2757 = vsel %vm368, %v2706, 0
    %v2760 = vsel %vm368, %v2707, 0
    %v2763 = vsel %vm368, %v2708, 0
    %v2766 = vsel %vm368, %v2709, 0
    %v2769 = vsel %vm368, %v2710, 0
    %v2772 = vsel %vm368, %v2711, 0
    %v2775 = vsel %vm368, %v2712, 0
    %2777 = vmatprep.subr.mxu0 0.0
    %2778 = vmatpush1.msra.mxu0 %v2693
    %2779 = vmatprep.subr.mxu0 0.0
    %2780 = vmatpush1.msra.mxu0 %v2694
    %2781 = vmatprep.subr.mxu0 0.0
    %2782 = vmatpush1.msra.mxu0 %v2695
    %2783 = vmatprep.subr.mxu0 0.0
    %2784 = vmatpush1.msra.mxu0 %v2696
    %2785 = vmatprep.subr.mxu0 0.0
    %2786 = vmatpush1.msra.mxu0 0.0
    %2787 = vmatprep.subr.mxu0 0.0
    %2788 = vmatpush1.msra.mxu0 0.0
    %2789 = vmatprep.subr.mxu0 0.0
    %2790 = vmatpush1.msra.mxu0 0.0
    %2791 = vmatprep.subr.mxu0 0.0
    %2792 = vmatpush1.msra.mxu0 0.0
    %2793 = vmatprep.subr.mxu0 0.0
    %2794 = vmatpush1.msra.mxu0 0.0
    %2795 = vmatprep.subr.mxu0 0.0
    %2796 = vmatpush1.msra.mxu0 0.0
    %2797 = vmatprep.subr.mxu0 0.0
    %2798 = vmatpush1.msra.mxu0 0.0
    %2799 = vmatprep.subr.mxu0 0.0
    %2800 = vmatpush1.msra.mxu0 0.0
    %2801 = vmatprep.subr.mxu0 0.0
    %2802 = vmatpush1.msra.mxu0 0.0
    %2803 = vmatprep.subr.mxu0 0.0
    %2804 = vmatpush1.msra.mxu0 0.0
    %2805 = vmatprep.subr.mxu0 0.0
    %2806 = vmatpush1.msra.mxu0 0.0
    %2807 = vmatprep.subr.mxu0 0.0
    %2808 = vmatpush1.msra.mxu0 0.0
    %2809 = vmatprep.subr.mxu0 0.0
    %2810 = vmatpush1.msra.mxu0 0.0
    %2811 = vmatprep.subr.mxu0 0.0
    %2812 = vmatpush1.msra.mxu0 0.0
    %2813 = vmatprep.subr.mxu0 0.0
    %2814 = vmatpush1.msra.mxu0 0.0
    %2815 = vmatprep.subr.mxu0 0.0
    %2816 = vmatpush1.msra.mxu0 0.0
    %2817 = vmatprep.subr.mxu0 0.0
    %2818 = vmatpush1.msra.mxu0 0.0
    %2819 = vmatprep.subr.mxu0 0.0
    %2820 = vmatpush1.msra.mxu0 0.0
    %2821 = vmatprep.subr.mxu0 0.0
    %2822 = vmatpush1.msra.mxu0 0.0
    %2823 = vmatprep.subr.mxu0 0.0
    %2824 = vmatpush1.msra.mxu0 0.0
    %2825 = vmatprep.subr.mxu0 0.0
    %2826 = vmatpush1.msra.mxu0 0.0
    %2827 = vmatprep.subr.mxu0 0.0
    %2828 = vmatpush1.msra.mxu0 0.0
    %2829 = vmatprep.subr.mxu0 0.0
    %2830 = vmatpush1.msra.mxu0 0.0
    %2831 = vmatprep.subr.mxu0 0.0
    %2832 = vmatpush1.msra.mxu0 0.0
    %2833 = vmatprep.subr.mxu0 0.0
    %2834 = vmatpush1.msra.mxu0 0.0
    %2835 = vmatprep.subr.mxu0 0.0
    %2836 = vmatpush1.msra.mxu0 0.0
    %2837 = vmatprep.subr.mxu0 0.0
    %2838 = vmatpush1.msra.mxu0 0.0
    %2839 = vmatprep.subr.mxu0 0.0
    %2840 = vmatpush1.msra.mxu0 0.0
    %2841 = vmatprep.mubr.f32.mxu0 0.0
    %2842 = vmatmul.mubr.f32.gmra.mrb[0].mxu0 %v2754
    %v2843 = vpop.f32.mrb[0].mxu0
    %v2844 = vadd.f32 %v2716, %v2843
    %v2845 = vpop.f32.mrb[0].mxu0
    %2846 = vmatprep.mubr.f32.mxu0 0.0
    %2847 = vmatmul.mubr.f32.gmra.mrb[0].mxu0 %v2757
    %v2848 = vpop.f32.mrb[0].mxu0
    %v2849 = vadd.f32 %v2721, %v2848
    %v2850 = vpop.f32.mrb[0].mxu0
    %2851 = vmatprep.mubr.f32.mxu0 0.0
    %2852 = vmatmul.mubr.f32.gmra.mrb[0].mxu0 %v2760
    %v2853 = vpop.f32.mrb[0].mxu0
    %v2854 = vadd.f32 %v2726, %v2853
    %v2855 = vpop.f32.mrb[0].mxu0
    %2856 = vmatprep.mubr.f32.mxu0 0.0
    %2857 = vmatmul.mubr.f32.gmra.mrb[0].mxu0 %v2763
    %v2858 = vpop.f32.mrb[0].mxu0
    %v2859 = vadd.f32 %v2731, %v2858
    %v2860 = vpop.f32.mrb[0].mxu0
    %2861 = vmatprep.mubr.f32.mxu0 0.0
    %2862 = vmatmul.mubr.f32.gmra.mrb[0].mxu0 %v2766
    %v2863 = vpop.f32.mrb[0].mxu0
    %v2864 = vadd.f32 %v2736, %v2863
    %v2865 = vpop.f32.mrb[0].mxu0
    %2866 = vmatprep.mubr.f32.mxu0 0.0
    %2867 = vmatmul.mubr.f32.gmra.mrb[0].mxu0 %v2769
    %v2868 = vpop.f32.mrb[0].mxu0
    %v2869 = vadd.f32 %v2741, %v2868
    %v2870 = vpop.f32.mrb[0].mxu0
    %2871 = vmatprep.mubr.f32.mxu0 0.0
    %2872 = vmatmul.mubr.f32.gmra.mrb[0].mxu0 %v2772
    %v2873 = vpop.f32.mrb[0].mxu0
    %v2874 = vadd.f32 %v2746, %v2873
    %v2875 = vpop.f32.mrb[0].mxu0
    %2876 = vmatprep.mubr.f32.mxu0 0.0
    %2877 = vmatmul.mubr.f32.gmra.mrb[0].mxu0 %v2775
    %v2878 = vpop.f32.mrb[0].mxu0
    %v2879 = vadd.f32 %v2751, %v2878
    %v2880 = vpop.f32.mrb[0].mxu0
    %2881 = vdwg.mxu0
    %vm2882 = vcmask 64512
    %v2883 = vsel %vm2882, %v2844, 0.0
    %2884 = vadd.xlane.f32.xlu0 %v2883
    %v2885 = vpop.xlane.xlu0 %2884
    %v2886 = vsel %vm2882, %v2849, 0.0
    %2887 = vadd.xlane.f32.xlu0 %v2886
    %v2888 = vpop.xlane.xlu0 %2887
    %v2889 = vsel %vm2882, %v2854, 0.0
    %2890 = vadd.xlane.f32.xlu0 %v2889
    %v2891 = vpop.xlane.xlu0 %2890
    %v2892 = vsel %vm2882, %v2859, 0.0
    %2893 = vadd.xlane.f32.xlu0 %v2892
    %v2894 = vpop.xlane.xlu0 %2893
    %v2895 = vsel %vm2882, %v2864, 0.0
    %2896 = vadd.xlane.f32.xlu0 %v2895
    %v2897 = vpop.xlane.xlu0 %2896
    %v2898 = vsel %vm2882, %v2869, 0.0
    %2899 = vadd.xlane.f32.xlu0 %v2898
    %v2900 = vpop.xlane.xlu0 %2899
    %v2901 = vsel %vm2882, %v2874, 0.0
    %2902 = vadd.xlane.f32.xlu0 %v2901
    %v2903 = vpop.xlane.xlu0 %2902
    %v2904 = vsel %vm2882, %v2879, 0.0
    %2905 = vadd.xlane.f32.xlu0 %v2904
    %v2906 = vpop.xlane.xlu0 %2905
    %v2907 = vrcp.pop 8.0
    %v2908 = vmul.f32 %v2885, %v2907
    %v2909 = vmul.f32 %v2888, %v2907
    %v2910 = vmul.f32 %v2891, %v2907
    %v2911 = vmul.f32 %v2894, %v2907
    %v2912 = vmul.f32 %v2897, %v2907
    %v2913 = vmul.f32 %v2900, %v2907
    %v2914 = vmul.f32 %v2903, %v2907
    %v2915 = vmul.f32 %v2906, %v2907
    %v2916 = vsub.f32 %v2844, %v2908
    %v2917 = vsub.f32 %v2849, %v2909
    %v2918 = vsub.f32 %v2854, %v2910
    %v2919 = vsub.f32 %v2859, %v2911
    %v2920 = vsub.f32 %v2864, %v2912
    %v2921 = vsub.f32 %v2869, %v2913
    %v2922 = vsub.f32 %v2874, %v2914
    %v2923 = vsub.f32 %v2879, %v2915
    %v2924 = vmul.f32 %v2916, %v2916
    %v2925 = vmul.f32 %v2917, %v2917
    %v2926 = vmul.f32 %v2918, %v2918
    %v2927 = vmul.f32 %v2919, %v2919
    %v2928 = vmul.f32 %v2920, %v2920
    %v2929 = vmul.f32 %v2921, %v2921
    %v2930 = vmul.f32 %v2922, %v2922
    %v2931 = vmul.f32 %v2923, %v2923
    %v2932 = vsel %vm2882, %v2924, 0.0
    %2933 = vadd.xlane.f32.xlu0 %v2932
    %v2934 = vpop.xlane.xlu0 %2933
    %v2935 = vsel %vm2882, %v2925, 0.0
    %2936 = vadd.xlane.f32.xlu0 %v2935
    %v2937 = vpop.xlane.xlu0 %2936
    %v2938 = vsel %vm2882, %v2926, 0.0
    %2939 = vadd.xlane.f32.xlu0 %v2938
    %v2940 = vpop.xlane.xlu0 %2939
    %v2941 = vsel %vm2882, %v2927, 0.0
    %2942 = vadd.xlane.f32.xlu0 %v2941
    %v2943 = vpop.xlane.xlu0 %2942
    %v2944 = vsel %vm2882, %v2928, 0.0
    %2945 = vadd.xlane.f32.xlu0 %v2944
    %v2946 = vpop.xlane.xlu0 %2945
    %v2947 = vsel %vm2882, %v2929, 0.0
    %2948 = vadd.xlane.f32.xlu0 %v2947
    %v2949 = vpop.xlane.xlu0 %2948
    %v2950 = vsel %vm2882, %v2930, 0.0
    %2951 = vadd.xlane.f32.xlu0 %v2950
    %v2952 = vpop.xlane.xlu0 %2951
    %v2953 = vsel %vm2882, %v2931, 0.0
    %2954 = vadd.xlane.f32.xlu0 %v2953
    %v2955 = vpop.xlane.xlu0 %2954
    %v2956 = vmul.f32 %v2934, %v2907
    %v2957 = vmul.f32 %v2937, %v2907
    %v2958 = vmul.f32 %v2940, %v2907
    %v2959 = vmul.f32 %v2943, %v2907
    %v2960 = vmul.f32 %v2946, %v2907
    %v2961 = vmul.f32 %v2949, %v2907
    %v2962 = vmul.f32 %v2952, %v2907
    %v2963 = vmul.f32 %v2955, %v2907
    %v2964 = vadd.f32 %v2956, 1e-05
    %v2965 = vadd.f32 %v2957, 1e-05
    %v2966 = vadd.f32 %v2958, 1e-05
    %v2967 = vadd.f32 %v2959, 1e-05
    %v2968 = vadd.f32 %v2960, 1e-05
    %v2969 = vadd.f32 %v2961, 1e-05
    %v2970 = vadd.f32 %v2962, 1e-05
    %v2971 = vadd.f32 %v2963, 1e-05
    %v2972 = vrsqrt.pop %v2964
    %v2973 = vmul.f32 %v2964, %v2972
    %vm2974 = vcmp.eq.f32.partialorder %v2964, inf
    %v2975 = vsel %vm2974, %v2964, %v2973
    %vm2976 = vcmp.eq.f32.partialorder %v2964, 0.0
    %v2977 = vand.u32 %v2964, 2147483648
    %v2978 = vsel %vm2976, %v2977, %v2975
    %v2979 = vrsqrt.pop %v2965
    %v2980 = vmul.f32 %v2965, %v2979
    %vm2981 = vcmp.eq.f32.partialorder %v2965, inf
    %v2982 = vsel %vm2981, %v2965, %v2980
    %vm2983 = vcmp.eq.f32.partialorder %v2965, 0.0
    %v2984 = vand.u32 %v2965, 2147483648
    %v2985 = vsel %vm2983, %v2984, %v2982
    %v2986 = vrsqrt.pop %v2966
    %v2987 = vmul.f32 %v2966, %v2986
    %vm2988 = vcmp.eq.f32.partialorder %v2966, inf
    %v2989 = vsel %vm2988, %v2966, %v2987
    %vm2990 = vcmp.eq.f32.partialorder %v2966, 0.0
    %v2991 = vand.u32 %v2966, 2147483648
    %v2992 = vsel %vm2990, %v2991, %v2989
    %v2993 = vrsqrt.pop %v2967
    %v2994 = vmul.f32 %v2967, %v2993
    %vm2995 = vcmp.eq.f32.partialorder %v2967, inf
    %v2996 = vsel %vm2995, %v2967, %v2994
    %vm2997 = vcmp.eq.f32.partialorder %v2967, 0.0
    %v2998 = vand.u32 %v2967, 2147483648
    %v2999 = vsel %vm2997, %v2998, %v2996
    %v3000 = vrsqrt.pop %v2968
    %v3001 = vmul.f32 %v2968, %v3000
    %vm3002 = vcmp.eq.f32.partialorder %v2968, inf
    %v3003 = vsel %vm3002, %v2968, %v3001
    %vm3004 = vcmp.eq.f32.partialorder %v2968, 0.0
    %v3005 = vand.u32 %v2968, 2147483648
    %v3006 = vsel %vm3004, %v3005, %v3003
    %v3007 = vrsqrt.pop %v2969
    %v3008 = vmul.f32 %v2969, %v3007
    %vm3009 = vcmp.eq.f32.partialorder %v2969, inf
    %v3010 = vsel %vm3009, %v2969, %v3008
    %vm3011 = vcmp.eq.f32.partialorder %v2969, 0.0
    %v3012 = vand.u32 %v2969, 2147483648
    %v3013 = vsel %vm3011, %v3012, %v3010
    %v3014 = vrsqrt.pop %v2970
    %v3015 = vmul.f32 %v2970, %v3014
    %vm3016 = vcmp.eq.f32.partialorder %v2970, inf
    %v3017 = vsel %vm3016, %v2970, %v3015
    %vm3018 = vcmp.eq.f32.partialorder %v2970, 0.0
    %v3019 = vand.u32 %v2970, 2147483648
    %v3020 = vsel %vm3018, %v3019, %v3017
    %v3021 = vrsqrt.pop %v2971
    %v3022 = vmul.f32 %v2971, %v3021
    %vm3023 = vcmp.eq.f32.partialorder %v2971, inf
    %v3024 = vsel %vm3023, %v2971, %v3022
    %vm3025 = vcmp.eq.f32.partialorder %v2971, 0.0
    %v3026 = vand.u32 %v2971, 2147483648
    %v3027 = vsel %vm3025, %v3026, %v3024
    %v3028 = vrcp.pop %v2978
    %v3029 = vmul.f32 %v2916, %v3028
    %v3030 = vrcp.pop %v2985
    %v3031 = vmul.f32 %v2917, %v3030
    %v3032 = vrcp.pop %v2992
    %v3033 = vmul.f32 %v2918, %v3032
    %v3034 = vrcp.pop %v2999
    %v3035 = vmul.f32 %v2919, %v3034
    %v3036 = vrcp.pop %v3006
    %v3037 = vmul.f32 %v2920, %v3036
    %v3038 = vrcp.pop %v3013
    %v3039 = vmul.f32 %v2921, %v3038
    %v3040 = vrcp.pop %v3020
    %v3041 = vmul.f32 %v2922, %v3040
    %v3042 = vrcp.pop %v3027
    %v3043 = vmul.f32 %v2923, %v3042
    %3044 = vset.pattern.permute.xlu0 0
    %3045 = vperm.xlu0 %3044, %v2697
    %v3046 = vpop.permute.xlu0 %3045
    %3048 = vset.pattern.permute.xlu0 0
    %3049 = vperm.xlu0 %3048, %v2698
    %v3050 = vpop.permute.xlu0 %3049
    %3052 = vset.pattern.permute.xlu0 0
    %3053 = vperm.xlu0 %3052, %v2699
    %v3054 = vpop.permute.xlu0 %3053
    %3056 = vset.pattern.permute.xlu0 0
    %3057 = vperm.xlu0 %3056, %v2700
    %v3058 = vpop.permute.xlu0 %3057
    %3060 = vset.pattern.permute.xlu0 0
    %3061 = vperm.xlu0 %3060, %v2701
    %v3062 = vpop.permute.xlu0 %3061
    %3064 = vset.pattern.permute.xlu0 0
    %3065 = vperm.xlu0 %3064, %v2702
    %v3066 = vpop.permute.xlu0 %3065
    %3068 = vset.pattern.permute.xlu0 0
    %3069 = vperm.xlu0 %3068, %v2703
    %v3070 = vpop.permute.xlu0 %3069
    %3072 = vset.pattern.permute.xlu0 0
    %3073 = vperm.xlu0 %3072, %v2704
    %v3074 = vpop.permute.xlu0 %3073
    %v3076 = vmul.f32 %v3029, %v3046
    %v3077 = vmul.f32 %v3031, %v3050
    %v3078 = vmul.f32 %v3033, %v3054
    %v3079 = vmul.f32 %v3035, %v3058
    %v3080 = vmul.f32 %v3037, %v3062
    %v3081 = vmul.f32 %v3039, %v3066
    %v3082 = vmul.f32 %v3041, %v3070
    %v3083 = vmul.f32 %v3043, %v3074
    %3084 = vset.pattern.permute.xlu0 1
    %3085 = vperm.xlu0 %3084, %v2697
    %v3086 = vpop.permute.xlu0 %3085
    %3088 = vset.pattern.permute.xlu0 1
    %3089 = vperm.xlu0 %3088, %v2698
    %v3090 = vpop.permute.xlu0 %3089
    %3092 = vset.pattern.permute.xlu0 1
    %3093 = vperm.xlu0 %3092, %v2699
    %v3094 = vpop.permute.xlu0 %3093
    %3096 = vset.pattern.permute.xlu0 1
    %3097 = vperm.xlu0 %3096, %v2700
    %v3098 = vpop.permute.xlu0 %3097
    %3100 = vset.pattern.permute.xlu0 1
    %3101 = vperm.xlu0 %3100, %v2701
    %v3102 = vpop.permute.xlu0 %3101
    %3104 = vset.pattern.permute.xlu0 1
    %3105 = vperm.xlu0 %3104, %v2702
    %v3106 = vpop.permute.xlu0 %3105
    %3108 = vset.pattern.permute.xlu0 1
    %3109 = vperm.xlu0 %3108, %v2703
    %v3110 = vpop.permute.xlu0 %3109
    %3112 = vset.pattern.permute.xlu0 1
    %3113 = vperm.xlu0 %3112, %v2704
    %v3114 = vpop.permute.xlu0 %3113
    %v3116 = vadd.f32 %v3076, %v3086
    %v3117 = vadd.f32 %v3077, %v3090
    %v3118 = vadd.f32 %v3078, %v3094
    %v3119 = vadd.f32 %v3079, %v3098
    %v3120 = vadd.f32 %v3080, %v3102
    %v3121 = vadd.f32 %v3081, %v3106
    %v3122 = vadd.f32 %v3082, %v3110
    %v3123 = vadd.f32 %v3083, %v3114
    %v3124 = vmax.f32 %v3116, 0.0
    %v3125 = vmax.f32 %v3117, 0.0
    %v3126 = vmax.f32 %v3118, 0.0
    %v3127 = vmax.f32 %v3119, 0.0
    %v3128 = vmax.f32 %v3120, 0.0
    %v3129 = vmax.f32 %v3121, 0.0
    %v3130 = vmax.f32 %v3122, 0.0
    %v3131 = vmax.f32 %v3123, 0.0
    %3132 = vset.pattern.permute.xlu0 2
    %3133 = vperm.xlu0 %3132, %v2697
    %v3134 = vpop.permute.xlu0 %3133
    %3136 = vset.pattern.permute.xlu0 2
    %3137 = vperm.xlu0 %3136, %v2698
    %v3138 = vpop.permute.xlu0 %3137
    %3140 = vset.pattern.permute.xlu0 2
    %3141 = vperm.xlu0 %3140, %v2699
    %v3142 = vpop.permute.xlu0 %3141
    %3144 = vset.pattern.permute.xlu0 2
    %3145 = vperm.xlu0 %3144, %v2700
    %v3146 = vpop.permute.xlu0 %3145
    %3148 = vset.pattern.permute.xlu0 2
    %3149 = vperm.xlu0 %3148, %v2701
    %v3150 = vpop.permute.xlu0 %3149
    %3152 = vset.pattern.permute.xlu0 2
    %3153 = vperm.xlu0 %3152, %v2702
    %v3154 = vpop.permute.xlu0 %3153
    %3156 = vset.pattern.permute.xlu0 2
    %3157 = vperm.xlu0 %3156, %v2703
    %v3158 = vpop.permute.xlu0 %3157
    %3160 = vset.pattern.permute.xlu0 2
    %3161 = vperm.xlu0 %3160, %v2704
    %v3162 = vpop.permute.xlu0 %3161
    %v3164 = vmul.f32 %v3124, %v3134
    %v3165 = vmul.f32 %v3125, %v3138
    %v3166 = vmul.f32 %v3126, %v3142
    %v3167 = vmul.f32 %v3127, %v3146
    %v3168 = vmul.f32 %v3128, %v3150
    %v3169 = vmul.f32 %v3129, %v3154
    %v3170 = vmul.f32 %v3130, %v3158
    %v3171 = vmul.f32 %v3131, %v3162
    %v3172 = vsel %vm2882, %v3164, 0.0
    %v3173 = vsel %vm2882, %v3165, 0.0
    %v3174 = vadd.f32 %v3172, %v3173
    %v3175 = vsel %vm2882, %v3166, 0.0
    %v3176 = vadd.f32 %v3174, %v3175
    %v3177 = vsel %vm2882, %v3167, 0.0
    %v3178 = vadd.f32 %v3176, %v3177
    %v3179 = vsel %vm2882, %v3168, 0.0
    %v3180 = vadd.f32 %v3178, %v3179
    %v3181 = vsel %vm2882, %v3169, 0.0
    %v3182 = vadd.f32 %v3180, %v3181
    %v3183 = vsel %vm2882, %v3170, 0.0
    %v3184 = vadd.f32 %v3182, %v3183
    %v3185 = vsel %vm2882, %v3171, 0.0
    %v3186 = vadd.f32 %v3184, %v3185
    %v3187 = vrot.slane %v3186, 4
    %v3188 = vadd.f32 %v3186, %v3187
    %v3189 = vrot.slane %v3188, 2
    %v3190 = vadd.f32 %v3188, %v3189
    %v3191 = vrot.slane %v3190, 1
    %v3192 = vadd.f32 %v3190, %v3191
    %s3193 = sld [smem:[#allocation2]]
    %v3194 = vstv %s3193
    %v3195 = vadd.f32 %v3192, %v3194
    %v3196 = vsel %vm2882, %v3195, 0.0
    %3197 = vadd.xlane.f32.xlu0 %v3196
    %v3198 = vpop.xlane.xlu0 %3197
    %v3199 = vmul.f32 %v3198, %v2907
    %v3200 = vsub.f32 %v3195, %v3199
    %v3201 = vmul.f32 %v3200, %v3200
    %v3202 = vsel %vm2882, %v3201, 0.0
    %3203 = vadd.xlane.f32.xlu0 %v3202
    %v3204 = vpop.xlane.xlu0 %3203
    %v3205 = vmul.f32 %v3204, %v2907
    %v3206 = vadd.f32 %v3205, 1e-05
    %v3207 = vrsqrt.pop %v3206
    %v3208 = vmul.f32 %v3206, %v3207
    %vm3209 = vcmp.eq.f32.partialorder %v3206, inf
    %v3210 = vsel %vm3209, %v3206, %v3208
    %vm3211 = vcmp.eq.f32.partialorder %v3206, 0.0
    %v3212 = vand.u32 %v3206, 2147483648
    %v3213 = vsel %vm3211, %v3212, %v3210
    %v3214 = vrcp.pop %v3213
    %v3215 = vmul.f32 %v3200, %v3214
    %s3216 = sld [smem:[#allocation2 + $0x1]]
    %v3217 = vstv %s3216
    %v3218 = vmul.f32 %v3215, %v3217
    %s3219 = sld [smem:[#allocation2 + $0x2]]
    %v3220 = vstv %s3219
    %v3221 = vadd.f32 %v3218, %v3220
    %v3222 = vmax.f32 %v3221, 0.0
    %vm3223 = vcmask 57344
    %3224 = vst.msk [vmem:[#allocation5] sm:$0x1] %vm3223, %v3222
    // Predicated region
    $region34: #{tpu_custom_call.1} parent=1 // pred_check
      _
    $region35: #{tpu_custom_call.1} parent=1 // pred_check_branch
      %3226 = sbr.rel (0) target = $region37
    $region36: #{tpu_custom_call.1} parent=1 // pred_region
      %s3228 = ssub.s32 16, 16
      %3229 = vsyncadd [#allocation3], %s3228
      %s3231 = sshll.u32 [#allocation5], 4
      %s3232 = int_to_ptr.vmem [resolvable:$true] %s3231
      %3234 = dma.vmem_to_hbm [thread:$0]  %s3232, 16, %s7, [#allocation3]
    $region37: #{tpu_custom_call.1} parent=1 // pred_fallthru
      _
    // Predicated region
    $region38: #{tpu_custom_call.1} parent=1 // pred_check
      _
    $region39: #{tpu_custom_call.1} parent=1 // pred_check_branch
      %3236 = sbr.rel (0) target = $region41
    $region40: #{tpu_custom_call.1} parent=1 // pred_region
      %3237 = dma.done [#allocation3], 16
    $region41: #{tpu_custom_call.1} parent=1 // pred_fallthru
      _
    %3238 = vsyncpa [#allocation3], 1
    %3239 = vsyncpa [#allocation4], 1

</llo_original>
